<compile_context>
chip_gen: v6e
topology: v6e:2x2x1
jax: 0.10.0
libtpu: 0.0.40
codegen_flags: <defaults>
</compile_context>

<pallas_src>
import functools
import math

import jax
import jax.numpy as jnp
from jax import lax
from jax.experimental import pallas as pl
from jax.experimental.pallas import tpu as pltpu

# ---- model dims (norm_shape = [32] => num_hiddens = 32) ----
B = 2         # batch
S = 8         # decoder sequence length (num_steps)
SE = 8        # encoder sequence length
H = 32        # num_hiddens / key_size / query_size / value_size / ffn_num_inputs
NH = 4        # num_heads
HD = H // NH  # head dim
FFN = 64      # ffn_num_hiddens
NEG = -1e6    # masked_softmax fill value (matches reference: value=-1000000.0)
EPS = 1e-5    # nn.LayerNorm default eps
LANES = 128   # lane width of the weight slab / output slab

# ---- packed weight-slab row offsets (all multiples of 8 sublanes) ----
R_QKV1 = 0               # (H, 3H)  fused self-attn Wq|Wk|Wv
R_WO1 = R_QKV1 + H       # (H, H)   self-attn Wo
R_WQ2 = R_WO1 + H        # (H, H)   cross-attn Wq
R_WKV2 = R_WQ2 + H       # (H, 2H)  fused cross-attn Wk|Wv
R_WO2 = R_WKV2 + H       # (H, H)   cross-attn Wo
R_W1 = R_WO2 + H         # (H, FFN) FFN dense1
R_W2 = R_W1 + H          # (FFN, H) FFN dense2
R_VEC = R_W2 + FFN       # (8, FFN) g1,b1,g2,b2,bf1,bf2,g3,b3
R_PAD = R_VEC + 8        # (H, 128) identity lane-widening matrix
SLAB_ROWS = R_PAD + H    # 296


def _layernorm(v, gamma, beta):
    mu = jnp.mean(v, axis=-1, keepdims=True)
    var = jnp.mean((v - mu) ** 2, axis=-1, keepdims=True)
    return (v - mu) * lax.rsqrt(var + EPS) * gamma + beta


def _softmax(x):
    # Exact softmax (the approx EUP reciprocal was removed per the review;
    # at 8-term sums its saving is unmeasurable and it cost 20x in tolerance).
    m = jnp.max(x, axis=-1, keepdims=True)
    e = jnp.exp(x - m)
    return e / jnp.sum(e, axis=-1, keepdims=True)


def decoder_block_kernel(vlen_ref,               # scalar-prefetch: enc_valid_lens (B,) int32
                         x_ref, enc_ref, w_ref,  # activations + packed weight slab
                         out_ref, *, nb):
    nbs = nb * S

    # ---- weight views: static slices of the packed slab (8-sublane / lane-0 aligned) ----
    wqkv1 = w_ref[R_QKV1:R_QKV1 + H, 0:3 * H]     # (H, 3H)
    wo1 = w_ref[R_WO1:R_WO1 + H, 0:H]
    wq2 = w_ref[R_WQ2:R_WQ2 + H, 0:H]
    wkv2 = w_ref[R_WKV2:R_WKV2 + H, 0:2 * H]
    wo2 = w_ref[R_WO2:R_WO2 + H, 0:H]
    w1 = w_ref[R_W1:R_W1 + H, 0:FFN]
    w2 = w_ref[R_W2:R_W2 + FFN, 0:H]
    vec = w_ref[R_VEC:R_VEC + 8, 0:FFN]           # (8, FFN) packed small vectors
    padw = w_ref[R_PAD:R_PAD + H, :]              # (H, 128) eye: lane-widening matrix

    g1, b1 = vec[0:1, :H], vec[1:2, :H]
    g2, b2 = vec[2:3, :H], vec[3:4, :H]
    bf1 = vec[4:5, :]                             # (1, FFN)
    bf2 = vec[5:6, :H]
    g3, b3 = vec[6:7, :H], vec[7:8, :H]

    scale = jnp.float32(1.0 / math.sqrt(HD))
    dnums = (((1,), (1,)), ((), ()))              # contract last dims: q @ k^T, no transpose op

    # ---- hoisted masks (additive -1e6 bias), built once per kernel body ----
    qi = lax.broadcasted_iota(jnp.int32, (S, S), 0)
    kj = lax.broadcasted_iota(jnp.int32, (S, S), 1)
    causal_bias = jnp.where(kj <= qi, jnp.float32(0.0), jnp.float32(NEG))
    kje = lax.broadcasted_iota(jnp.int32, (S, SE), 1)

    def attend(q, k, v, wo, bias):
        # Per-head scores -> exact softmax -> value matmul -> accumulate the W_o
        # row-slice (sublane-aligned).  Lane slices of width HD=8 kept as-is; any
        # restructure (heads->sublanes / batched dot_general) costs an equivalent
        # relayout at this size (review item 5, conditional).
        acc = None
        for h in range(NH):                       # static head loop
            sl = slice(h * HD, (h + 1) * HD)
            sc = lax.dot_general(q[:, sl], k[:, sl], dnums,
                                 preferred_element_type=jnp.float32) * scale + bias
            p = _softmax(sc)
            oh = jnp.dot(p, v[:, sl], preferred_element_type=jnp.float32)
            contrib = jnp.dot(oh, wo[sl, :], preferred_element_type=jnp.float32)
            acc = contrib if acc is None else acc + contrib
        return acc

    # ---- batched dense projections over all nb batches of this grid step ----
    x_all = x_ref[...].reshape(nbs, H)            # collapse leading dims: layout-preserving
    enc_all = enc_ref[...].reshape(nb * SE, H)

    # masked self-attention: one fused QKV matmul over all rows
    qkv = jnp.dot(x_all, wqkv1, preferred_element_type=jnp.float32)      # (nbs, 3H)
    x2 = jnp.concatenate(
        [attend(qkv[bi * S:(bi + 1) * S, 0:H],
                qkv[bi * S:(bi + 1) * S, H:2 * H],
                qkv[bi * S:(bi + 1) * S, 2 * H:3 * H],
                wo1, causal_bias)
         for bi in range(nb)], axis=0)                                    # (nbs, H)
    y = _layernorm(x_all + x2, g1, b1)

    # cross attention: batched q and kv projections
    qy = jnp.dot(y, wq2, preferred_element_type=jnp.float32)             # (nbs, H)
    kv = jnp.dot(enc_all, wkv2, preferred_element_type=jnp.float32)      # (nb*SE, 2H)
    y2_parts = []
    for bi in range(nb):
        b = pl.program_id(0) * nb + bi            # global batch index
        enc_bias = jnp.where(kje < vlen_ref[b], jnp.float32(0.0), jnp.float32(NEG))
        y2_parts.append(attend(qy[bi * S:(bi + 1) * S, :],
                               kv[bi * SE:(bi + 1) * SE, 0:H],
                               kv[bi * SE:(bi + 1) * SE, H:2 * H],
                               wo2, enc_bias))
    y2 = jnp.concatenate(y2_parts, axis=0)
    z = _layernorm(y + y2, g2, b2)

    # position-wise FFN, batched over all rows
    h1 = jnp.maximum(jnp.dot(z, w1, preferred_element_type=jnp.float32) + bf1, 0.0)
    ffn = jnp.dot(h1, w2, preferred_element_type=jnp.float32) + bf2
    final = _layernorm(z + ffn, g3, b3)                                   # (nbs, H)

    # Lane-dense store: widen H=32 -> 128 lanes with one identity-matmul push
    # (exact values in lanes 0:H, zeros elsewhere) so the write is an unmasked
    # full-width vst instead of masked 32-lane partial stores.
    out_ref[...] = jnp.dot(final, padw, preferred_element_type=jnp.float32)


def _pack_weight_slab(params):
    """One-time wrapper-side packing of every weight/vector into a (296,128) slab."""
    (wq1, wk1, wv1, wo1, g1, b1,
     wq2, wk2, wv2, wo2, g2, b2,
     w1, bf1, w2, bf2, g3, b3) = params

    def lane_pad(a):
        return jnp.pad(a, ((0, 0), (0, LANES - a.shape[1])))

    def ffn_pad(v):  # pad (1, H) rows to (1, FFN)
        return jnp.pad(v, ((0, 0), (0, FFN - v.shape[1])))

    wqkv1 = jnp.concatenate([wq1, wk1, wv1], axis=1)   # (H, 3H)
    wkv2 = jnp.concatenate([wk2, wv2], axis=1)         # (H, 2H)
    vec = jnp.concatenate([ffn_pad(g1), ffn_pad(b1), ffn_pad(g2), ffn_pad(b2),
                           bf1, ffn_pad(bf2), ffn_pad(g3), ffn_pad(b3)], axis=0)  # (8, FFN)
    pad_mat = jnp.eye(H, LANES, dtype=jnp.float32)     # lane-widening identity

    slab = jnp.concatenate([
        lane_pad(wqkv1), lane_pad(wo1), lane_pad(wq2), lane_pad(wkv2),
        lane_pad(wo2), lane_pad(w1), lane_pad(w2), lane_pad(vec), pad_mat], axis=0)
    assert slab.shape == (SLAB_ROWS, LANES)
    return slab


def decoder_block(X, enc_outputs, enc_valid_lens, params, nb=B):
    """nb = batches per grid step.  Default nb=B collapses to grid=(1,) on every
    generation (single-step overhead-bound regime); pass nb=1 to benchmark the
    grid=(B,) 'parallel' split on multi-core chips (v4/v5p/v7x) instead of
    assuming it beats the duplicated weight DMA + extra pipeline step."""
    assert B % nb == 0
    slab = _pack_weight_slab(params)
    grid = (B // nb,)

    grid_spec = pltpu.PrefetchScalarGridSpec(
        num_scalar_prefetch=1,
        grid=grid,
        in_specs=[
            pl.BlockSpec((nb, S, H), lambda g, vl: (g, 0, 0)),        # X
            pl.BlockSpec((nb, SE, H), lambda g, vl: (g, 0, 0)),       # enc_outputs
            pl.BlockSpec((SLAB_ROWS, LANES), lambda g, vl: (0, 0)),   # packed weight slab
        ],
        out_specs=pl.BlockSpec((nb * S, LANES), lambda g, vl: (g, 0)),
    )

    out_wide = pl.pallas_call(
        functools.partial(decoder_block_kernel, nb=nb),
        out_shape=jax.ShapeDtypeStruct((B * S, LANES), jnp.float32),
        grid_spec=grid_spec,
        compiler_params=pltpu.CompilerParams(
            dimension_semantics=("parallel",) if grid[0] > 1 else ("arbitrary",)),
    )(enc_valid_lens.astype(jnp.int32), X, enc_outputs, slab)

    out = out_wide[:, :H].reshape(B, S, H)   # free layout plumbing outside the kernel
    new_key_values = X                       # state[2][i] was None, so key_values == X
    return out, new_key_values


# ---------------- pure-JAX reference (for correctness check) ----------------
HI = jax.lax.Precision.HIGHEST  # true-f32 matmuls so the check can be tight


def ref_decoder_block(X, enc, enc_valid_lens, params):
    (wq1, wk1, wv1, wo1, g1, b1,
     wq2, wk2, wv2, wo2, g2, b2,
     w1, bf1, w2, bf2, g3, b3) = params

    def mha(q_in, kv_in, wq, wk, wv, wo, mask):
        q = jnp.dot(q_in, wq, precision=HI)
        k = jnp.dot(kv_in, wk, precision=HI)
        v = jnp.dot(kv_in, wv, precision=HI)

        def split(t):
            bsz, L, _ = t.shape
            return t.reshape(bsz, L, NH, HD).transpose(0, 2, 1, 3)    # (B, NH, L, HD)

        qh, kh, vh = split(q), split(k), split(v)
        sc = jnp.einsum("bhqd,bhkd->bhqk", qh, kh, precision=HI) / math.sqrt(HD)
        sc = jnp.where(mask, sc, NEG)
        p = jax.nn.softmax(sc, axis=-1)
        o = jnp.einsum("bhqk,bhkd->bhqd", p, vh, precision=HI)
        o = o.transpose(0, 2, 1, 3).reshape(q_in.shape[0], q_in.shape[1], H)
        return jnp.dot(o, wo, precision=HI)

    causal = (jnp.arange(S)[None, :] <= jnp.arange(S)[:, None])[None, None]       # (1,1,S,S)
    encm = (jnp.arange(SE)[None, :] < enc_valid_lens[:, None])[:, None, None, :]  # (B,1,1,SE)

    ln = lambda v, g, bb: _layernorm(v, g[0], bb[0])
    x2 = mha(X, X, wq1, wk1, wv1, wo1, causal)
    y = ln(X + x2, g1, b1)
    y2 = mha(y, enc, wq2, wk2, wv2, wo2, encm)
    z = ln(y + y2, g2, b2)
    h1 = jnp.maximum(jnp.dot(z, w1, precision=HI) + bf1[0], 0.0)
    ffn = jnp.dot(h1, w2, precision=HI) + bf2[0]
    return ln(z + ffn, g3, b3)


if __name__ == "__main__":
    key = jax.random.PRNGKey(0)
    keys = jax.random.split(key, 16)

    def rnd(k, shape, s=0.1):
        return jax.random.normal(k, shape, jnp.float32) * s

    X = rnd(keys[0], (B, S, H), 1.0)
    enc_outputs = rnd(keys[1], (B, SE, H), 1.0)
    enc_valid_lens = jnp.array([6, 8], dtype=jnp.int32)

    params = (
        rnd(keys[2], (H, H)), rnd(keys[3], (H, H)), rnd(keys[4], (H, H)), rnd(keys[5], (H, H)),
        jnp.ones((1, H), jnp.float32), jnp.zeros((1, H), jnp.float32),
        rnd(keys[6], (H, H)), rnd(keys[7], (H, H)), rnd(keys[8], (H, H)), rnd(keys[9], (H, H)),
        jnp.ones((1, H), jnp.float32), jnp.zeros((1, H), jnp.float32),
        rnd(keys[10], (H, FFN)), rnd(keys[11], (1, FFN)),
        rnd(keys[12], (FFN, H)), rnd(keys[13], (1, H)),
        jnp.ones((1, H), jnp.float32), jnp.zeros((1, H), jnp.float32),
    )

    out, new_kv = decoder_block(X, enc_outputs, enc_valid_lens, params)
    out = jax.block_until_ready(out)

    ref = ref_decoder_block(X, enc_outputs, enc_valid_lens, params)

    # Exact softmax restored (approx reciprocal removed) and the reference runs at
    # Precision.HIGHEST; the remaining tolerance only covers Mosaic EUP (exp/rsqrt)
    # and MXU f32-emulation rounding differences vs XLA.
    assert out.shape == (B, S, H)
    assert jnp.allclose(out, ref, atol=1e-3, rtol=1e-3), "Pallas output mismatch vs reference"
    assert new_kv.shape == (B, S, H)

    print("KERNEL_OK")
</pallas_src>

<mosaic_0001>
module attributes {stable_mosaic.version = 11 : i64} {
  func.func @decoder_block_kernel(%arg0: i32, %arg1: memref<2xi32, #tpu.memory_space<smem>>, %arg2: memref<2x8x32xf32, #tpu.memory_space<vmem>>, %arg3: memref<2x8x32xf32, #tpu.memory_space<vmem>>, %arg4: memref<296x128xf32, #tpu.memory_space<vmem>>, %arg5: memref<16x128xf32, #tpu.memory_space<vmem>>) attributes {dimension_semantics = [#tpu.dimension_semantics<arbitrary>], iteration_bounds = array<i64: 1>, scalar_prefetch = 1 : i64, scratch_operands = 0 : i64, tpu.core_type = #tpu.core_type<tc>, window_params = [{transform_indices = @transform_0, window_bounds = array<i64: 2, 8, 32>}, {transform_indices = @transform_1, window_bounds = array<i64: 2, 8, 32>}, {pipeline_mode = #tpu.pipeline_mode<synchronous>, transform_indices = @transform_2, window_bounds = array<i64: 296, 128>}, {transform_indices = @transform_3, window_bounds = array<i64: 16, 128>}]} {
    %c0 = arith.constant 0 : index
    %c0_0 = arith.constant 0 : index
    %0 = vector.load %arg4[%c0, %c0_0] : memref<296x128xf32, #tpu.memory_space<vmem>>, vector<32x96xf32>
    %c32 = arith.constant 32 : index
    %c0_1 = arith.constant 0 : index
    %1 = vector.load %arg4[%c32, %c0_1] : memref<296x128xf32, #tpu.memory_space<vmem>>, vector<32x32xf32>
    %c64 = arith.constant 64 : index
    %c0_2 = arith.constant 0 : index
    %2 = vector.load %arg4[%c64, %c0_2] : memref<296x128xf32, #tpu.memory_space<vmem>>, vector<32x32xf32>
    %c96 = arith.constant 96 : index
    %c0_3 = arith.constant 0 : index
    %3 = vector.load %arg4[%c96, %c0_3] : memref<296x128xf32, #tpu.memory_space<vmem>>, vector<32x64xf32>
    %c128 = arith.constant 128 : index
    %c0_4 = arith.constant 0 : index
    %4 = vector.load %arg4[%c128, %c0_4] : memref<296x128xf32, #tpu.memory_space<vmem>>, vector<32x32xf32>
    %c160 = arith.constant 160 : index
    %c0_5 = arith.constant 0 : index
    %5 = vector.load %arg4[%c160, %c0_5] : memref<296x128xf32, #tpu.memory_space<vmem>>, vector<32x64xf32>
    %c192 = arith.constant 192 : index
    %c0_6 = arith.constant 0 : index
    %6 = vector.load %arg4[%c192, %c0_6] : memref<296x128xf32, #tpu.memory_space<vmem>>, vector<64x32xf32>
    %c256 = arith.constant 256 : index
    %c0_7 = arith.constant 0 : index
    %7 = vector.load %arg4[%c256, %c0_7] : memref<296x128xf32, #tpu.memory_space<vmem>>, vector<8x64xf32>
    %c264 = arith.constant 264 : index
    %c0_8 = arith.constant 0 : index
    %8 = vector.load %arg4[%c264, %c0_8] : memref<296x128xf32, #tpu.memory_space<vmem>>, vector<32x128xf32>
    %9 = vector.extract_strided_slice %7 {offsets = [0, 0], sizes = [1, 32], strides = [1, 1]} : vector<8x64xf32> to vector<1x32xf32>
    %10 = vector.extract_strided_slice %7 {offsets = [1, 0], sizes = [1, 32], strides = [1, 1]} : vector<8x64xf32> to vector<1x32xf32>
    %11 = vector.extract_strided_slice %7 {offsets = [2, 0], sizes = [1, 32], strides = [1, 1]} : vector<8x64xf32> to vector<1x32xf32>
    %12 = vector.extract_strided_slice %7 {offsets = [3, 0], sizes = [1, 32], strides = [1, 1]} : vector<8x64xf32> to vector<1x32xf32>
    %13 = vector.extract_strided_slice %7 {offsets = [4, 0], sizes = [1, 64], strides = [1, 1]} : vector<8x64xf32> to vector<1x64xf32>
    %14 = vector.extract_strided_slice %7 {offsets = [5, 0], sizes = [1, 32], strides = [1, 1]} : vector<8x64xf32> to vector<1x32xf32>
    %15 = vector.extract_strided_slice %7 {offsets = [6, 0], sizes = [1, 32], strides = [1, 1]} : vector<8x64xf32> to vector<1x32xf32>
    %16 = vector.extract_strided_slice %7 {offsets = [7, 0], sizes = [1, 32], strides = [1, 1]} : vector<8x64xf32> to vector<1x32xf32>
    %17 = tpu.iota {dimensions = array<i32: 0>} : vector<8x8xi32>
    %18 = tpu.iota {dimensions = array<i32: 1>} : vector<8x8xi32>
    %19 = arith.cmpi sle, %18, %17 : vector<8x8xi32>
    %cst = arith.constant 0.000000e+00 : f32
    %cst_9 = arith.constant -1.000000e+06 : f32
    %20 = vector.broadcast %cst : f32 to vector<8x8xf32>
    %21 = vector.broadcast %cst_9 : f32 to vector<8x8xf32>
    %22 = arith.select %19, %20, %21 : vector<8x8xi1>, vector<8x8xf32>
    %23 = tpu.iota {dimensions = array<i32: 1>} : vector<8x8xi32>
    %c0_10 = arith.constant 0 : index
    %c0_11 = arith.constant 0 : index
    %c0_12 = arith.constant 0 : index
    %24 = vector.load %arg2[%c0_10, %c0_11, %c0_12] : memref<2x8x32xf32, #tpu.memory_space<vmem>>, vector<2x8x32xf32>
    %25 = vector.shape_cast %24 : vector<2x8x32xf32> to vector<16x32xf32>
    %c0_13 = arith.constant 0 : index
    %c0_14 = arith.constant 0 : index
    %c0_15 = arith.constant 0 : index
    %26 = vector.load %arg3[%c0_13, %c0_14, %c0_15] : memref<2x8x32xf32, #tpu.memory_space<vmem>>, vector<2x8x32xf32>
    %27 = vector.shape_cast %26 : vector<2x8x32xf32> to vector<16x32xf32>
    %cst_16 = arith.constant dense<0.000000e+00> : vector<16x96xf32>
    %28 = tpu.matmul %25, %0, %cst_16 {dimension_numbers = #tpu.dot_dimension_numbers<[1], [0], [0], [1], [0, 0, 1, 1], [], []>} : vector<16x32xf32>, vector<32x96xf32>, vector<16x96xf32> -> vector<16x96xf32>
    %29 = vector.extract_strided_slice %28 {offsets = [0, 0], sizes = [8, 32], strides = [1, 1]} : vector<16x96xf32> to vector<8x32xf32>
    %30 = vector.extract_strided_slice %28 {offsets = [0, 32], sizes = [8, 32], strides = [1, 1]} : vector<16x96xf32> to vector<8x32xf32>
    %31 = vector.extract_strided_slice %28 {offsets = [0, 64], sizes = [8, 32], strides = [1, 1]} : vector<16x96xf32> to vector<8x32xf32>
    %32 = vector.extract_strided_slice %29 {offsets = [0, 0], sizes = [8, 8], strides = [1, 1]} : vector<8x32xf32> to vector<8x8xf32>
    %33 = vector.extract_strided_slice %30 {offsets = [0, 0], sizes = [8, 8], strides = [1, 1]} : vector<8x32xf32> to vector<8x8xf32>
    %cst_17 = arith.constant dense<0.000000e+00> : vector<8x8xf32>
    %34 = tpu.matmul %32, %33, %cst_17 {dimension_numbers = #tpu.dot_dimension_numbers<[1], [1], [0], [0], [0, 0, 1, 0], [], []>} : vector<8x8xf32>, vector<8x8xf32>, vector<8x8xf32> -> vector<8x8xf32>
    %cst_18 = arith.constant 0.353553385 : f32
    %35 = vector.broadcast %cst_18 : f32 to vector<8x8xf32>
    %36 = arith.mulf %34, %35 : vector<8x8xf32>
    %37 = arith.addf %36, %22 : vector<8x8xf32>
    %cst_19 = arith.constant dense<0xFF800000> : vector<8xf32>
    %38 = vector.multi_reduction <maximumf>, %37, %cst_19 [1] : vector<8x8xf32> to vector<8xf32>
    %39 = vector.shape_cast %38 : vector<8xf32> to vector<8x1xf32>
    %40 = vector.broadcast %39 : vector<8x1xf32> to vector<8x8xf32>
    %41 = arith.subf %37, %40 : vector<8x8xf32>
    %42 = math.exp %41 : vector<8x8xf32>
    %cst_20 = arith.constant dense<0.000000e+00> : vector<8xf32>
    %43 = vector.multi_reduction <add>, %42, %cst_20 [1] : vector<8x8xf32> to vector<8xf32>
    %44 = vector.shape_cast %43 : vector<8xf32> to vector<8x1xf32>
    %45 = vector.broadcast %44 : vector<8x1xf32> to vector<8x8xf32>
    %46 = arith.divf %42, %45 : vector<8x8xf32>
    %47 = vector.extract_strided_slice %31 {offsets = [0, 0], sizes = [8, 8], strides = [1, 1]} : vector<8x32xf32> to vector<8x8xf32>
    %cst_21 = arith.constant dense<0.000000e+00> : vector<8x8xf32>
    %48 = tpu.matmul %46, %47, %cst_21 {dimension_numbers = #tpu.dot_dimension_numbers<[1], [0], [0], [1], [0, 0, 1, 1], [], []>} : vector<8x8xf32>, vector<8x8xf32>, vector<8x8xf32> -> vector<8x8xf32>
    %49 = vector.extract_strided_slice %1 {offsets = [0, 0], sizes = [8, 32], strides = [1, 1]} : vector<32x32xf32> to vector<8x32xf32>
    %cst_22 = arith.constant dense<0.000000e+00> : vector<8x32xf32>
    %50 = tpu.matmul %48, %49, %cst_22 {dimension_numbers = #tpu.dot_dimension_numbers<[1], [0], [0], [1], [0, 0, 1, 1], [], []>} : vector<8x8xf32>, vector<8x32xf32>, vector<8x32xf32> -> vector<8x32xf32>
    %51 = vector.extract_strided_slice %29 {offsets = [0, 8], sizes = [8, 8], strides = [1, 1]} : vector<8x32xf32> to vector<8x8xf32>
    %52 = vector.extract_strided_slice %30 {offsets = [0, 8], sizes = [8, 8], strides = [1, 1]} : vector<8x32xf32> to vector<8x8xf32>
    %cst_23 = arith.constant dense<0.000000e+00> : vector<8x8xf32>
    %53 = tpu.matmul %51, %52, %cst_23 {dimension_numbers = #tpu.dot_dimension_numbers<[1], [1], [0], [0], [0, 0, 1, 0], [], []>} : vector<8x8xf32>, vector<8x8xf32>, vector<8x8xf32> -> vector<8x8xf32>
    %cst_24 = arith.constant 0.353553385 : f32
    %54 = vector.broadcast %cst_24 : f32 to vector<8x8xf32>
    %55 = arith.mulf %53, %54 : vector<8x8xf32>
    %56 = arith.addf %55, %22 : vector<8x8xf32>
    %cst_25 = arith.constant dense<0xFF800000> : vector<8xf32>
    %57 = vector.multi_reduction <maximumf>, %56, %cst_25 [1] : vector<8x8xf32> to vector<8xf32>
    %58 = vector.shape_cast %57 : vector<8xf32> to vector<8x1xf32>
    %59 = vector.broadcast %58 : vector<8x1xf32> to vector<8x8xf32>
    %60 = arith.subf %56, %59 : vector<8x8xf32>
    %61 = math.exp %60 : vector<8x8xf32>
    %cst_26 = arith.constant dense<0.000000e+00> : vector<8xf32>
    %62 = vector.multi_reduction <add>, %61, %cst_26 [1] : vector<8x8xf32> to vector<8xf32>
    %63 = vector.shape_cast %62 : vector<8xf32> to vector<8x1xf32>
    %64 = vector.broadcast %63 : vector<8x1xf32> to vector<8x8xf32>
    %65 = arith.divf %61, %64 : vector<8x8xf32>
    %66 = vector.extract_strided_slice %31 {offsets = [0, 8], sizes = [8, 8], strides = [1, 1]} : vector<8x32xf32> to vector<8x8xf32>
    %cst_27 = arith.constant dense<0.000000e+00> : vector<8x8xf32>
    %67 = tpu.matmul %65, %66, %cst_27 {dimension_numbers = #tpu.dot_dimension_numbers<[1], [0], [0], [1], [0, 0, 1, 1], [], []>} : vector<8x8xf32>, vector<8x8xf32>, vector<8x8xf32> -> vector<8x8xf32>
    %68 = vector.extract_strided_slice %1 {offsets = [8, 0], sizes = [8, 32], strides = [1, 1]} : vector<32x32xf32> to vector<8x32xf32>
    %cst_28 = arith.constant dense<0.000000e+00> : vector<8x32xf32>
    %69 = tpu.matmul %67, %68, %cst_28 {dimension_numbers = #tpu.dot_dimension_numbers<[1], [0], [0], [1], [0, 0, 1, 1], [], []>} : vector<8x8xf32>, vector<8x32xf32>, vector<8x32xf32> -> vector<8x32xf32>
    %70 = arith.addf %50, %69 : vector<8x32xf32>
    %71 = vector.extract_strided_slice %29 {offsets = [0, 16], sizes = [8, 8], strides = [1, 1]} : vector<8x32xf32> to vector<8x8xf32>
    %72 = vector.extract_strided_slice %30 {offsets = [0, 16], sizes = [8, 8], strides = [1, 1]} : vector<8x32xf32> to vector<8x8xf32>
    %cst_29 = arith.constant dense<0.000000e+00> : vector<8x8xf32>
    %73 = tpu.matmul %71, %72, %cst_29 {dimension_numbers = #tpu.dot_dimension_numbers<[1], [1], [0], [0], [0, 0, 1, 0], [], []>} : vector<8x8xf32>, vector<8x8xf32>, vector<8x8xf32> -> vector<8x8xf32>
    %cst_30 = arith.constant 0.353553385 : f32
    %74 = vector.broadcast %cst_30 : f32 to vector<8x8xf32>
    %75 = arith.mulf %73, %74 : vector<8x8xf32>
    %76 = arith.addf %75, %22 : vector<8x8xf32>
    %cst_31 = arith.constant dense<0xFF800000> : vector<8xf32>
    %77 = vector.multi_reduction <maximumf>, %76, %cst_31 [1] : vector<8x8xf32> to vector<8xf32>
    %78 = vector.shape_cast %77 : vector<8xf32> to vector<8x1xf32>
    %79 = vector.broadcast %78 : vector<8x1xf32> to vector<8x8xf32>
    %80 = arith.subf %76, %79 : vector<8x8xf32>
    %81 = math.exp %80 : vector<8x8xf32>
    %cst_32 = arith.constant dense<0.000000e+00> : vector<8xf32>
    %82 = vector.multi_reduction <add>, %81, %cst_32 [1] : vector<8x8xf32> to vector<8xf32>
    %83 = vector.shape_cast %82 : vector<8xf32> to vector<8x1xf32>
    %84 = vector.broadcast %83 : vector<8x1xf32> to vector<8x8xf32>
    %85 = arith.divf %81, %84 : vector<8x8xf32>
    %86 = vector.extract_strided_slice %31 {offsets = [0, 16], sizes = [8, 8], strides = [1, 1]} : vector<8x32xf32> to vector<8x8xf32>
    %cst_33 = arith.constant dense<0.000000e+00> : vector<8x8xf32>
    %87 = tpu.matmul %85, %86, %cst_33 {dimension_numbers = #tpu.dot_dimension_numbers<[1], [0], [0], [1], [0, 0, 1, 1], [], []>} : vector<8x8xf32>, vector<8x8xf32>, vector<8x8xf32> -> vector<8x8xf32>
    %88 = vector.extract_strided_slice %1 {offsets = [16, 0], sizes = [8, 32], strides = [1, 1]} : vector<32x32xf32> to vector<8x32xf32>
    %cst_34 = arith.constant dense<0.000000e+00> : vector<8x32xf32>
    %89 = tpu.matmul %87, %88, %cst_34 {dimension_numbers = #tpu.dot_dimension_numbers<[1], [0], [0], [1], [0, 0, 1, 1], [], []>} : vector<8x8xf32>, vector<8x32xf32>, vector<8x32xf32> -> vector<8x32xf32>
    %90 = arith.addf %70, %89 : vector<8x32xf32>
    %91 = vector.extract_strided_slice %29 {offsets = [0, 24], sizes = [8, 8], strides = [1, 1]} : vector<8x32xf32> to vector<8x8xf32>
    %92 = vector.extract_strided_slice %30 {offsets = [0, 24], sizes = [8, 8], strides = [1, 1]} : vector<8x32xf32> to vector<8x8xf32>
    %cst_35 = arith.constant dense<0.000000e+00> : vector<8x8xf32>
    %93 = tpu.matmul %91, %92, %cst_35 {dimension_numbers = #tpu.dot_dimension_numbers<[1], [1], [0], [0], [0, 0, 1, 0], [], []>} : vector<8x8xf32>, vector<8x8xf32>, vector<8x8xf32> -> vector<8x8xf32>
    %cst_36 = arith.constant 0.353553385 : f32
    %94 = vector.broadcast %cst_36 : f32 to vector<8x8xf32>
    %95 = arith.mulf %93, %94 : vector<8x8xf32>
    %96 = arith.addf %95, %22 : vector<8x8xf32>
    %cst_37 = arith.constant dense<0xFF800000> : vector<8xf32>
    %97 = vector.multi_reduction <maximumf>, %96, %cst_37 [1] : vector<8x8xf32> to vector<8xf32>
    %98 = vector.shape_cast %97 : vector<8xf32> to vector<8x1xf32>
    %99 = vector.broadcast %98 : vector<8x1xf32> to vector<8x8xf32>
    %100 = arith.subf %96, %99 : vector<8x8xf32>
    %101 = math.exp %100 : vector<8x8xf32>
    %cst_38 = arith.constant dense<0.000000e+00> : vector<8xf32>
    %102 = vector.multi_reduction <add>, %101, %cst_38 [1] : vector<8x8xf32> to vector<8xf32>
    %103 = vector.shape_cast %102 : vector<8xf32> to vector<8x1xf32>
    %104 = vector.broadcast %103 : vector<8x1xf32> to vector<8x8xf32>
    %105 = arith.divf %101, %104 : vector<8x8xf32>
    %106 = vector.extract_strided_slice %31 {offsets = [0, 24], sizes = [8, 8], strides = [1, 1]} : vector<8x32xf32> to vector<8x8xf32>
    %cst_39 = arith.constant dense<0.000000e+00> : vector<8x8xf32>
    %107 = tpu.matmul %105, %106, %cst_39 {dimension_numbers = #tpu.dot_dimension_numbers<[1], [0], [0], [1], [0, 0, 1, 1], [], []>} : vector<8x8xf32>, vector<8x8xf32>, vector<8x8xf32> -> vector<8x8xf32>
    %108 = vector.extract_strided_slice %1 {offsets = [24, 0], sizes = [8, 32], strides = [1, 1]} : vector<32x32xf32> to vector<8x32xf32>
    %cst_40 = arith.constant dense<0.000000e+00> : vector<8x32xf32>
    %109 = tpu.matmul %107, %108, %cst_40 {dimension_numbers = #tpu.dot_dimension_numbers<[1], [0], [0], [1], [0, 0, 1, 1], [], []>} : vector<8x8xf32>, vector<8x32xf32>, vector<8x32xf32> -> vector<8x32xf32>
    %110 = arith.addf %90, %109 : vector<8x32xf32>
    %111 = vector.extract_strided_slice %28 {offsets = [8, 0], sizes = [8, 32], strides = [1, 1]} : vector<16x96xf32> to vector<8x32xf32>
    %112 = vector.extract_strided_slice %28 {offsets = [8, 32], sizes = [8, 32], strides = [1, 1]} : vector<16x96xf32> to vector<8x32xf32>
    %113 = vector.extract_strided_slice %28 {offsets = [8, 64], sizes = [8, 32], strides = [1, 1]} : vector<16x96xf32> to vector<8x32xf32>
    %114 = vector.extract_strided_slice %111 {offsets = [0, 0], sizes = [8, 8], strides = [1, 1]} : vector<8x32xf32> to vector<8x8xf32>
    %115 = vector.extract_strided_slice %112 {offsets = [0, 0], sizes = [8, 8], strides = [1, 1]} : vector<8x32xf32> to vector<8x8xf32>
    %cst_41 = arith.constant dense<0.000000e+00> : vector<8x8xf32>
    %116 = tpu.matmul %114, %115, %cst_41 {dimension_numbers = #tpu.dot_dimension_numbers<[1], [1], [0], [0], [0, 0, 1, 0], [], []>} : vector<8x8xf32>, vector<8x8xf32>, vector<8x8xf32> -> vector<8x8xf32>
    %cst_42 = arith.constant 0.353553385 : f32
    %117 = vector.broadcast %cst_42 : f32 to vector<8x8xf32>
    %118 = arith.mulf %116, %117 : vector<8x8xf32>
    %119 = arith.addf %118, %22 : vector<8x8xf32>
    %cst_43 = arith.constant dense<0xFF800000> : vector<8xf32>
    %120 = vector.multi_reduction <maximumf>, %119, %cst_43 [1] : vector<8x8xf32> to vector<8xf32>
    %121 = vector.shape_cast %120 : vector<8xf32> to vector<8x1xf32>
    %122 = vector.broadcast %121 : vector<8x1xf32> to vector<8x8xf32>
    %123 = arith.subf %119, %122 : vector<8x8xf32>
    %124 = math.exp %123 : vector<8x8xf32>
    %cst_44 = arith.constant dense<0.000000e+00> : vector<8xf32>
    %125 = vector.multi_reduction <add>, %124, %cst_44 [1] : vector<8x8xf32> to vector<8xf32>
    %126 = vector.shape_cast %125 : vector<8xf32> to vector<8x1xf32>
    %127 = vector.broadcast %126 : vector<8x1xf32> to vector<8x8xf32>
    %128 = arith.divf %124, %127 : vector<8x8xf32>
    %129 = vector.extract_strided_slice %113 {offsets = [0, 0], sizes = [8, 8], strides = [1, 1]} : vector<8x32xf32> to vector<8x8xf32>
    %cst_45 = arith.constant dense<0.000000e+00> : vector<8x8xf32>
    %130 = tpu.matmul %128, %129, %cst_45 {dimension_numbers = #tpu.dot_dimension_numbers<[1], [0], [0], [1], [0, 0, 1, 1], [], []>} : vector<8x8xf32>, vector<8x8xf32>, vector<8x8xf32> -> vector<8x8xf32>
    %131 = vector.extract_strided_slice %1 {offsets = [0, 0], sizes = [8, 32], strides = [1, 1]} : vector<32x32xf32> to vector<8x32xf32>
    %cst_46 = arith.constant dense<0.000000e+00> : vector<8x32xf32>
    %132 = tpu.matmul %130, %131, %cst_46 {dimension_numbers = #tpu.dot_dimension_numbers<[1], [0], [0], [1], [0, 0, 1, 1], [], []>} : vector<8x8xf32>, vector<8x32xf32>, vector<8x32xf32> -> vector<8x32xf32>
    %133 = vector.extract_strided_slice %111 {offsets = [0, 8], sizes = [8, 8], strides = [1, 1]} : vector<8x32xf32> to vector<8x8xf32>
    %134 = vector.extract_strided_slice %112 {offsets = [0, 8], sizes = [8, 8], strides = [1, 1]} : vector<8x32xf32> to vector<8x8xf32>
    %cst_47 = arith.constant dense<0.000000e+00> : vector<8x8xf32>
    %135 = tpu.matmul %133, %134, %cst_47 {dimension_numbers = #tpu.dot_dimension_numbers<[1], [1], [0], [0], [0, 0, 1, 0], [], []>} : vector<8x8xf32>, vector<8x8xf32>, vector<8x8xf32> -> vector<8x8xf32>
    %cst_48 = arith.constant 0.353553385 : f32
    %136 = vector.broadcast %cst_48 : f32 to vector<8x8xf32>
    %137 = arith.mulf %135, %136 : vector<8x8xf32>
    %138 = arith.addf %137, %22 : vector<8x8xf32>
    %cst_49 = arith.constant dense<0xFF800000> : vector<8xf32>
    %139 = vector.multi_reduction <maximumf>, %138, %cst_49 [1] : vector<8x8xf32> to vector<8xf32>
    %140 = vector.shape_cast %139 : vector<8xf32> to vector<8x1xf32>
    %141 = vector.broadcast %140 : vector<8x1xf32> to vector<8x8xf32>
    %142 = arith.subf %138, %141 : vector<8x8xf32>
    %143 = math.exp %142 : vector<8x8xf32>
    %cst_50 = arith.constant dense<0.000000e+00> : vector<8xf32>
    %144 = vector.multi_reduction <add>, %143, %cst_50 [1] : vector<8x8xf32> to vector<8xf32>
    %145 = vector.shape_cast %144 : vector<8xf32> to vector<8x1xf32>
    %146 = vector.broadcast %145 : vector<8x1xf32> to vector<8x8xf32>
    %147 = arith.divf %143, %146 : vector<8x8xf32>
    %148 = vector.extract_strided_slice %113 {offsets = [0, 8], sizes = [8, 8], strides = [1, 1]} : vector<8x32xf32> to vector<8x8xf32>
    %cst_51 = arith.constant dense<0.000000e+00> : vector<8x8xf32>
    %149 = tpu.matmul %147, %148, %cst_51 {dimension_numbers = #tpu.dot_dimension_numbers<[1], [0], [0], [1], [0, 0, 1, 1], [], []>} : vector<8x8xf32>, vector<8x8xf32>, vector<8x8xf32> -> vector<8x8xf32>
    %150 = vector.extract_strided_slice %1 {offsets = [8, 0], sizes = [8, 32], strides = [1, 1]} : vector<32x32xf32> to vector<8x32xf32>
    %cst_52 = arith.constant dense<0.000000e+00> : vector<8x32xf32>
    %151 = tpu.matmul %149, %150, %cst_52 {dimension_numbers = #tpu.dot_dimension_numbers<[1], [0], [0], [1], [0, 0, 1, 1], [], []>} : vector<8x8xf32>, vector<8x32xf32>, vector<8x32xf32> -> vector<8x32xf32>
    %152 = arith.addf %132, %151 : vector<8x32xf32>
    %153 = vector.extract_strided_slice %111 {offsets = [0, 16], sizes = [8, 8], strides = [1, 1]} : vector<8x32xf32> to vector<8x8xf32>
    %154 = vector.extract_strided_slice %112 {offsets = [0, 16], sizes = [8, 8], strides = [1, 1]} : vector<8x32xf32> to vector<8x8xf32>
    %cst_53 = arith.constant dense<0.000000e+00> : vector<8x8xf32>
    %155 = tpu.matmul %153, %154, %cst_53 {dimension_numbers = #tpu.dot_dimension_numbers<[1], [1], [0], [0], [0, 0, 1, 0], [], []>} : vector<8x8xf32>, vector<8x8xf32>, vector<8x8xf32> -> vector<8x8xf32>
    %cst_54 = arith.constant 0.353553385 : f32
    %156 = vector.broadcast %cst_54 : f32 to vector<8x8xf32>
    %157 = arith.mulf %155, %156 : vector<8x8xf32>
    %158 = arith.addf %157, %22 : vector<8x8xf32>
    %cst_55 = arith.constant dense<0xFF800000> : vector<8xf32>
    %159 = vector.multi_reduction <maximumf>, %158, %cst_55 [1] : vector<8x8xf32> to vector<8xf32>
    %160 = vector.shape_cast %159 : vector<8xf32> to vector<8x1xf32>
    %161 = vector.broadcast %160 : vector<8x1xf32> to vector<8x8xf32>
    %162 = arith.subf %158, %161 : vector<8x8xf32>
    %163 = math.exp %162 : vector<8x8xf32>
    %cst_56 = arith.constant dense<0.000000e+00> : vector<8xf32>
    %164 = vector.multi_reduction <add>, %163, %cst_56 [1] : vector<8x8xf32> to vector<8xf32>
    %165 = vector.shape_cast %164 : vector<8xf32> to vector<8x1xf32>
    %166 = vector.broadcast %165 : vector<8x1xf32> to vector<8x8xf32>
    %167 = arith.divf %163, %166 : vector<8x8xf32>
    %168 = vector.extract_strided_slice %113 {offsets = [0, 16], sizes = [8, 8], strides = [1, 1]} : vector<8x32xf32> to vector<8x8xf32>
    %cst_57 = arith.constant dense<0.000000e+00> : vector<8x8xf32>
    %169 = tpu.matmul %167, %168, %cst_57 {dimension_numbers = #tpu.dot_dimension_numbers<[1], [0], [0], [1], [0, 0, 1, 1], [], []>} : vector<8x8xf32>, vector<8x8xf32>, vector<8x8xf32> -> vector<8x8xf32>
    %170 = vector.extract_strided_slice %1 {offsets = [16, 0], sizes = [8, 32], strides = [1, 1]} : vector<32x32xf32> to vector<8x32xf32>
    %cst_58 = arith.constant dense<0.000000e+00> : vector<8x32xf32>
    %171 = tpu.matmul %169, %170, %cst_58 {dimension_numbers = #tpu.dot_dimension_numbers<[1], [0], [0], [1], [0, 0, 1, 1], [], []>} : vector<8x8xf32>, vector<8x32xf32>, vector<8x32xf32> -> vector<8x32xf32>
    %172 = arith.addf %152, %171 : vector<8x32xf32>
    %173 = vector.extract_strided_slice %111 {offsets = [0, 24], sizes = [8, 8], strides = [1, 1]} : vector<8x32xf32> to vector<8x8xf32>
    %174 = vector.extract_strided_slice %112 {offsets = [0, 24], sizes = [8, 8], strides = [1, 1]} : vector<8x32xf32> to vector<8x8xf32>
    %cst_59 = arith.constant dense<0.000000e+00> : vector<8x8xf32>
    %175 = tpu.matmul %173, %174, %cst_59 {dimension_numbers = #tpu.dot_dimension_numbers<[1], [1], [0], [0], [0, 0, 1, 0], [], []>} : vector<8x8xf32>, vector<8x8xf32>, vector<8x8xf32> -> vector<8x8xf32>
    %cst_60 = arith.constant 0.353553385 : f32
    %176 = vector.broadcast %cst_60 : f32 to vector<8x8xf32>
    %177 = arith.mulf %175, %176 : vector<8x8xf32>
    %178 = arith.addf %177, %22 : vector<8x8xf32>
    %cst_61 = arith.constant dense<0xFF800000> : vector<8xf32>
    %179 = vector.multi_reduction <maximumf>, %178, %cst_61 [1] : vector<8x8xf32> to vector<8xf32>
    %180 = vector.shape_cast %179 : vector<8xf32> to vector<8x1xf32>
    %181 = vector.broadcast %180 : vector<8x1xf32> to vector<8x8xf32>
    %182 = arith.subf %178, %181 : vector<8x8xf32>
    %183 = math.exp %182 : vector<8x8xf32>
    %cst_62 = arith.constant dense<0.000000e+00> : vector<8xf32>
    %184 = vector.multi_reduction <add>, %183, %cst_62 [1] : vector<8x8xf32> to vector<8xf32>
    %185 = vector.shape_cast %184 : vector<8xf32> to vector<8x1xf32>
    %186 = vector.broadcast %185 : vector<8x1xf32> to vector<8x8xf32>
    %187 = arith.divf %183, %186 : vector<8x8xf32>
    %188 = vector.extract_strided_slice %113 {offsets = [0, 24], sizes = [8, 8], strides = [1, 1]} : vector<8x32xf32> to vector<8x8xf32>
    %cst_63 = arith.constant dense<0.000000e+00> : vector<8x8xf32>
    %189 = tpu.matmul %187, %188, %cst_63 {dimension_numbers = #tpu.dot_dimension_numbers<[1], [0], [0], [1], [0, 0, 1, 1], [], []>} : vector<8x8xf32>, vector<8x8xf32>, vector<8x8xf32> -> vector<8x8xf32>
    %190 = vector.extract_strided_slice %1 {offsets = [24, 0], sizes = [8, 32], strides = [1, 1]} : vector<32x32xf32> to vector<8x32xf32>
    %cst_64 = arith.constant dense<0.000000e+00> : vector<8x32xf32>
    %191 = tpu.matmul %189, %190, %cst_64 {dimension_numbers = #tpu.dot_dimension_numbers<[1], [0], [0], [1], [0, 0, 1, 1], [], []>} : vector<8x8xf32>, vector<8x32xf32>, vector<8x32xf32> -> vector<8x32xf32>
    %192 = arith.addf %172, %191 : vector<8x32xf32>
    %193 = tpu.concatenate %110, %192 in 0 : vector<8x32xf32>, vector<8x32xf32> -> vector<16x32xf32>
    %194 = arith.addf %25, %193 : vector<16x32xf32>
    %cst_65 = arith.constant dense<0.000000e+00> : vector<16xf32>
    %195 = vector.multi_reduction <add>, %194, %cst_65 [1] : vector<16x32xf32> to vector<16xf32>
    %196 = vector.shape_cast %195 : vector<16xf32> to vector<16x1xf32>
    %cst_66 = arith.constant 3.200000e+01 : f32
    %197 = vector.broadcast %cst_66 : f32 to vector<16x1xf32>
    %198 = arith.divf %196, %197 : vector<16x1xf32>
    %199 = vector.broadcast %198 : vector<16x1xf32> to vector<16x32xf32>
    %200 = arith.subf %194, %199 : vector<16x32xf32>
    %201 = arith.mulf %200, %200 : vector<16x32xf32>
    %cst_67 = arith.constant dense<0.000000e+00> : vector<16xf32>
    %202 = vector.multi_reduction <add>, %201, %cst_67 [1] : vector<16x32xf32> to vector<16xf32>
    %203 = vector.shape_cast %202 : vector<16xf32> to vector<16x1xf32>
    %cst_68 = arith.constant 3.200000e+01 : f32
    %204 = vector.broadcast %cst_68 : f32 to vector<16x1xf32>
    %205 = arith.divf %203, %204 : vector<16x1xf32>
    %206 = vector.broadcast %198 : vector<16x1xf32> to vector<16x32xf32>
    %207 = arith.subf %194, %206 : vector<16x32xf32>
    %cst_69 = arith.constant 9.99999974E-6 : f32
    %208 = vector.broadcast %cst_69 : f32 to vector<16x1xf32>
    %209 = arith.addf %205, %208 : vector<16x1xf32>
    %210 = math.rsqrt %209 : vector<16x1xf32>
    %211 = vector.broadcast %210 : vector<16x1xf32> to vector<16x32xf32>
    %212 = arith.mulf %207, %211 : vector<16x32xf32>
    %213 = vector.broadcast %9 : vector<1x32xf32> to vector<16x32xf32>
    %214 = arith.mulf %212, %213 : vector<16x32xf32>
    %215 = vector.broadcast %10 : vector<1x32xf32> to vector<16x32xf32>
    %216 = arith.addf %214, %215 : vector<16x32xf32>
    %cst_70 = arith.constant dense<0.000000e+00> : vector<16x32xf32>
    %217 = tpu.matmul %216, %2, %cst_70 {dimension_numbers = #tpu.dot_dimension_numbers<[1], [0], [0], [1], [0, 0, 1, 1], [], []>} : vector<16x32xf32>, vector<32x32xf32>, vector<16x32xf32> -> vector<16x32xf32>
    %cst_71 = arith.constant dense<0.000000e+00> : vector<16x64xf32>
    %218 = tpu.matmul %27, %3, %cst_71 {dimension_numbers = #tpu.dot_dimension_numbers<[1], [0], [0], [1], [0, 0, 1, 1], [], []>} : vector<16x32xf32>, vector<32x64xf32>, vector<16x64xf32> -> vector<16x64xf32>
    %c2_i32 = arith.constant 2 : i32
    %219 = arith.muli %arg0, %c2_i32 : i32
    %c0_i32 = arith.constant 0 : i32
    %220 = arith.addi %219, %c0_i32 : i32
    %221 = arith.index_cast %220 : i32 to index
    %222 = memref.load %arg1[%221] : memref<2xi32, #tpu.memory_space<smem>>
    %223 = vector.broadcast %222 : i32 to vector<8x8xi32>
    %224 = arith.cmpi slt, %23, %223 : vector<8x8xi32>
    %cst_72 = arith.constant 0.000000e+00 : f32
    %cst_73 = arith.constant -1.000000e+06 : f32
    %225 = vector.broadcast %cst_72 : f32 to vector<8x8xf32>
    %226 = vector.broadcast %cst_73 : f32 to vector<8x8xf32>
    %227 = arith.select %224, %225, %226 : vector<8x8xi1>, vector<8x8xf32>
    %228 = vector.extract_strided_slice %217 {offsets = [0, 0], sizes = [8, 32], strides = [1, 1]} : vector<16x32xf32> to vector<8x32xf32>
    %229 = vector.extract_strided_slice %218 {offsets = [0, 0], sizes = [8, 32], strides = [1, 1]} : vector<16x64xf32> to vector<8x32xf32>
    %230 = vector.extract_strided_slice %218 {offsets = [0, 32], sizes = [8, 32], strides = [1, 1]} : vector<16x64xf32> to vector<8x32xf32>
    %231 = vector.extract_strided_slice %228 {offsets = [0, 0], sizes = [8, 8], strides = [1, 1]} : vector<8x32xf32> to vector<8x8xf32>
    %232 = vector.extract_strided_slice %229 {offsets = [0, 0], sizes = [8, 8], strides = [1, 1]} : vector<8x32xf32> to vector<8x8xf32>
    %cst_74 = arith.constant dense<0.000000e+00> : vector<8x8xf32>
    %233 = tpu.matmul %231, %232, %cst_74 {dimension_numbers = #tpu.dot_dimension_numbers<[1], [1], [0], [0], [0, 0, 1, 0], [], []>} : vector<8x8xf32>, vector<8x8xf32>, vector<8x8xf32> -> vector<8x8xf32>
    %cst_75 = arith.constant 0.353553385 : f32
    %234 = vector.broadcast %cst_75 : f32 to vector<8x8xf32>
    %235 = arith.mulf %233, %234 : vector<8x8xf32>
    %236 = arith.addf %235, %227 : vector<8x8xf32>
    %cst_76 = arith.constant dense<0xFF800000> : vector<8xf32>
    %237 = vector.multi_reduction <maximumf>, %236, %cst_76 [1] : vector<8x8xf32> to vector<8xf32>
    %238 = vector.shape_cast %237 : vector<8xf32> to vector<8x1xf32>
    %239 = vector.broadcast %238 : vector<8x1xf32> to vector<8x8xf32>
    %240 = arith.subf %236, %239 : vector<8x8xf32>
    %241 = math.exp %240 : vector<8x8xf32>
    %cst_77 = arith.constant dense<0.000000e+00> : vector<8xf32>
    %242 = vector.multi_reduction <add>, %241, %cst_77 [1] : vector<8x8xf32> to vector<8xf32>
    %243 = vector.shape_cast %242 : vector<8xf32> to vector<8x1xf32>
    %244 = vector.broadcast %243 : vector<8x1xf32> to vector<8x8xf32>
    %245 = arith.divf %241, %244 : vector<8x8xf32>
    %246 = vector.extract_strided_slice %230 {offsets = [0, 0], sizes = [8, 8], strides = [1, 1]} : vector<8x32xf32> to vector<8x8xf32>
    %cst_78 = arith.constant dense<0.000000e+00> : vector<8x8xf32>
    %247 = tpu.matmul %245, %246, %cst_78 {dimension_numbers = #tpu.dot_dimension_numbers<[1], [0], [0], [1], [0, 0, 1, 1], [], []>} : vector<8x8xf32>, vector<8x8xf32>, vector<8x8xf32> -> vector<8x8xf32>
    %248 = vector.extract_strided_slice %4 {offsets = [0, 0], sizes = [8, 32], strides = [1, 1]} : vector<32x32xf32> to vector<8x32xf32>
    %cst_79 = arith.constant dense<0.000000e+00> : vector<8x32xf32>
    %249 = tpu.matmul %247, %248, %cst_79 {dimension_numbers = #tpu.dot_dimension_numbers<[1], [0], [0], [1], [0, 0, 1, 1], [], []>} : vector<8x8xf32>, vector<8x32xf32>, vector<8x32xf32> -> vector<8x32xf32>
    %250 = vector.extract_strided_slice %228 {offsets = [0, 8], sizes = [8, 8], strides = [1, 1]} : vector<8x32xf32> to vector<8x8xf32>
    %251 = vector.extract_strided_slice %229 {offsets = [0, 8], sizes = [8, 8], strides = [1, 1]} : vector<8x32xf32> to vector<8x8xf32>
    %cst_80 = arith.constant dense<0.000000e+00> : vector<8x8xf32>
    %252 = tpu.matmul %250, %251, %cst_80 {dimension_numbers = #tpu.dot_dimension_numbers<[1], [1], [0], [0], [0, 0, 1, 0], [], []>} : vector<8x8xf32>, vector<8x8xf32>, vector<8x8xf32> -> vector<8x8xf32>
    %cst_81 = arith.constant 0.353553385 : f32
    %253 = vector.broadcast %cst_81 : f32 to vector<8x8xf32>
    %254 = arith.mulf %252, %253 : vector<8x8xf32>
    %255 = arith.addf %254, %227 : vector<8x8xf32>
    %cst_82 = arith.constant dense<0xFF800000> : vector<8xf32>
    %256 = vector.multi_reduction <maximumf>, %255, %cst_82 [1] : vector<8x8xf32> to vector<8xf32>
    %257 = vector.shape_cast %256 : vector<8xf32> to vector<8x1xf32>
    %258 = vector.broadcast %257 : vector<8x1xf32> to vector<8x8xf32>
    %259 = arith.subf %255, %258 : vector<8x8xf32>
    %260 = math.exp %259 : vector<8x8xf32>
    %cst_83 = arith.constant dense<0.000000e+00> : vector<8xf32>
    %261 = vector.multi_reduction <add>, %260, %cst_83 [1] : vector<8x8xf32> to vector<8xf32>
    %262 = vector.shape_cast %261 : vector<8xf32> to vector<8x1xf32>
    %263 = vector.broadcast %262 : vector<8x1xf32> to vector<8x8xf32>
    %264 = arith.divf %260, %263 : vector<8x8xf32>
    %265 = vector.extract_strided_slice %230 {offsets = [0, 8], sizes = [8, 8], strides = [1, 1]} : vector<8x32xf32> to vector<8x8xf32>
    %cst_84 = arith.constant dense<0.000000e+00> : vector<8x8xf32>
    %266 = tpu.matmul %264, %265, %cst_84 {dimension_numbers = #tpu.dot_dimension_numbers<[1], [0], [0], [1], [0, 0, 1, 1], [], []>} : vector<8x8xf32>, vector<8x8xf32>, vector<8x8xf32> -> vector<8x8xf32>
    %267 = vector.extract_strided_slice %4 {offsets = [8, 0], sizes = [8, 32], strides = [1, 1]} : vector<32x32xf32> to vector<8x32xf32>
    %cst_85 = arith.constant dense<0.000000e+00> : vector<8x32xf32>
    %268 = tpu.matmul %266, %267, %cst_85 {dimension_numbers = #tpu.dot_dimension_numbers<[1], [0], [0], [1], [0, 0, 1, 1], [], []>} : vector<8x8xf32>, vector<8x32xf32>, vector<8x32xf32> -> vector<8x32xf32>
    %269 = arith.addf %249, %268 : vector<8x32xf32>
    %270 = vector.extract_strided_slice %228 {offsets = [0, 16], sizes = [8, 8], strides = [1, 1]} : vector<8x32xf32> to vector<8x8xf32>
    %271 = vector.extract_strided_slice %229 {offsets = [0, 16], sizes = [8, 8], strides = [1, 1]} : vector<8x32xf32> to vector<8x8xf32>
    %cst_86 = arith.constant dense<0.000000e+00> : vector<8x8xf32>
    %272 = tpu.matmul %270, %271, %cst_86 {dimension_numbers = #tpu.dot_dimension_numbers<[1], [1], [0], [0], [0, 0, 1, 0], [], []>} : vector<8x8xf32>, vector<8x8xf32>, vector<8x8xf32> -> vector<8x8xf32>
    %cst_87 = arith.constant 0.353553385 : f32
    %273 = vector.broadcast %cst_87 : f32 to vector<8x8xf32>
    %274 = arith.mulf %272, %273 : vector<8x8xf32>
    %275 = arith.addf %274, %227 : vector<8x8xf32>
    %cst_88 = arith.constant dense<0xFF800000> : vector<8xf32>
    %276 = vector.multi_reduction <maximumf>, %275, %cst_88 [1] : vector<8x8xf32> to vector<8xf32>
    %277 = vector.shape_cast %276 : vector<8xf32> to vector<8x1xf32>
    %278 = vector.broadcast %277 : vector<8x1xf32> to vector<8x8xf32>
    %279 = arith.subf %275, %278 : vector<8x8xf32>
    %280 = math.exp %279 : vector<8x8xf32>
    %cst_89 = arith.constant dense<0.000000e+00> : vector<8xf32>
    %281 = vector.multi_reduction <add>, %280, %cst_89 [1] : vector<8x8xf32> to vector<8xf32>
    %282 = vector.shape_cast %281 : vector<8xf32> to vector<8x1xf32>
    %283 = vector.broadcast %282 : vector<8x1xf32> to vector<8x8xf32>
    %284 = arith.divf %280, %283 : vector<8x8xf32>
    %285 = vector.extract_strided_slice %230 {offsets = [0, 16], sizes = [8, 8], strides = [1, 1]} : vector<8x32xf32> to vector<8x8xf32>
    %cst_90 = arith.constant dense<0.000000e+00> : vector<8x8xf32>
    %286 = tpu.matmul %284, %285, %cst_90 {dimension_numbers = #tpu.dot_dimension_numbers<[1], [0], [0], [1], [0, 0, 1, 1], [], []>} : vector<8x8xf32>, vector<8x8xf32>, vector<8x8xf32> -> vector<8x8xf32>
    %287 = vector.extract_strided_slice %4 {offsets = [16, 0], sizes = [8, 32], strides = [1, 1]} : vector<32x32xf32> to vector<8x32xf32>
    %cst_91 = arith.constant dense<0.000000e+00> : vector<8x32xf32>
    %288 = tpu.matmul %286, %287, %cst_91 {dimension_numbers = #tpu.dot_dimension_numbers<[1], [0], [0], [1], [0, 0, 1, 1], [], []>} : vector<8x8xf32>, vector<8x32xf32>, vector<8x32xf32> -> vector<8x32xf32>
    %289 = arith.addf %269, %288 : vector<8x32xf32>
    %290 = vector.extract_strided_slice %228 {offsets = [0, 24], sizes = [8, 8], strides = [1, 1]} : vector<8x32xf32> to vector<8x8xf32>
    %291 = vector.extract_strided_slice %229 {offsets = [0, 24], sizes = [8, 8], strides = [1, 1]} : vector<8x32xf32> to vector<8x8xf32>
    %cst_92 = arith.constant dense<0.000000e+00> : vector<8x8xf32>
    %292 = tpu.matmul %290, %291, %cst_92 {dimension_numbers = #tpu.dot_dimension_numbers<[1], [1], [0], [0], [0, 0, 1, 0], [], []>} : vector<8x8xf32>, vector<8x8xf32>, vector<8x8xf32> -> vector<8x8xf32>
    %cst_93 = arith.constant 0.353553385 : f32
    %293 = vector.broadcast %cst_93 : f32 to vector<8x8xf32>
    %294 = arith.mulf %292, %293 : vector<8x8xf32>
    %295 = arith.addf %294, %227 : vector<8x8xf32>
    %cst_94 = arith.constant dense<0xFF800000> : vector<8xf32>
    %296 = vector.multi_reduction <maximumf>, %295, %cst_94 [1] : vector<8x8xf32> to vector<8xf32>
    %297 = vector.shape_cast %296 : vector<8xf32> to vector<8x1xf32>
    %298 = vector.broadcast %297 : vector<8x1xf32> to vector<8x8xf32>
    %299 = arith.subf %295, %298 : vector<8x8xf32>
    %300 = math.exp %299 : vector<8x8xf32>
    %cst_95 = arith.constant dense<0.000000e+00> : vector<8xf32>
    %301 = vector.multi_reduction <add>, %300, %cst_95 [1] : vector<8x8xf32> to vector<8xf32>
    %302 = vector.shape_cast %301 : vector<8xf32> to vector<8x1xf32>
    %303 = vector.broadcast %302 : vector<8x1xf32> to vector<8x8xf32>
    %304 = arith.divf %300, %303 : vector<8x8xf32>
    %305 = vector.extract_strided_slice %230 {offsets = [0, 24], sizes = [8, 8], strides = [1, 1]} : vector<8x32xf32> to vector<8x8xf32>
    %cst_96 = arith.constant dense<0.000000e+00> : vector<8x8xf32>
    %306 = tpu.matmul %304, %305, %cst_96 {dimension_numbers = #tpu.dot_dimension_numbers<[1], [0], [0], [1], [0, 0, 1, 1], [], []>} : vector<8x8xf32>, vector<8x8xf32>, vector<8x8xf32> -> vector<8x8xf32>
    %307 = vector.extract_strided_slice %4 {offsets = [24, 0], sizes = [8, 32], strides = [1, 1]} : vector<32x32xf32> to vector<8x32xf32>
    %cst_97 = arith.constant dense<0.000000e+00> : vector<8x32xf32>
    %308 = tpu.matmul %306, %307, %cst_97 {dimension_numbers = #tpu.dot_dimension_numbers<[1], [0], [0], [1], [0, 0, 1, 1], [], []>} : vector<8x8xf32>, vector<8x32xf32>, vector<8x32xf32> -> vector<8x32xf32>
    %309 = arith.addf %289, %308 : vector<8x32xf32>
    %c2_i32_98 = arith.constant 2 : i32
    %310 = arith.muli %arg0, %c2_i32_98 : i32
    %c1_i32 = arith.constant 1 : i32
    %311 = arith.addi %310, %c1_i32 : i32
    %312 = arith.index_cast %311 : i32 to index
    %313 = memref.load %arg1[%312] : memref<2xi32, #tpu.memory_space<smem>>
    %314 = vector.broadcast %313 : i32 to vector<8x8xi32>
    %315 = arith.cmpi slt, %23, %314 : vector<8x8xi32>
    %cst_99 = arith.constant 0.000000e+00 : f32
    %cst_100 = arith.constant -1.000000e+06 : f32
    %316 = vector.broadcast %cst_99 : f32 to vector<8x8xf32>
    %317 = vector.broadcast %cst_100 : f32 to vector<8x8xf32>
    %318 = arith.select %315, %316, %317 : vector<8x8xi1>, vector<8x8xf32>
    %319 = vector.extract_strided_slice %217 {offsets = [8, 0], sizes = [8, 32], strides = [1, 1]} : vector<16x32xf32> to vector<8x32xf32>
    %320 = vector.extract_strided_slice %218 {offsets = [8, 0], sizes = [8, 32], strides = [1, 1]} : vector<16x64xf32> to vector<8x32xf32>
    %321 = vector.extract_strided_slice %218 {offsets = [8, 32], sizes = [8, 32], strides = [1, 1]} : vector<16x64xf32> to vector<8x32xf32>
    %322 = vector.extract_strided_slice %319 {offsets = [0, 0], sizes = [8, 8], strides = [1, 1]} : vector<8x32xf32> to vector<8x8xf32>
    %323 = vector.extract_strided_slice %320 {offsets = [0, 0], sizes = [8, 8], strides = [1, 1]} : vector<8x32xf32> to vector<8x8xf32>
    %cst_101 = arith.constant dense<0.000000e+00> : vector<8x8xf32>
    %324 = tpu.matmul %322, %323, %cst_101 {dimension_numbers = #tpu.dot_dimension_numbers<[1], [1], [0], [0], [0, 0, 1, 0], [], []>} : vector<8x8xf32>, vector<8x8xf32>, vector<8x8xf32> -> vector<8x8xf32>
    %cst_102 = arith.constant 0.353553385 : f32
    %325 = vector.broadcast %cst_102 : f32 to vector<8x8xf32>
    %326 = arith.mulf %324, %325 : vector<8x8xf32>
    %327 = arith.addf %326, %318 : vector<8x8xf32>
    %cst_103 = arith.constant dense<0xFF800000> : vector<8xf32>
    %328 = vector.multi_reduction <maximumf>, %327, %cst_103 [1] : vector<8x8xf32> to vector<8xf32>
    %329 = vector.shape_cast %328 : vector<8xf32> to vector<8x1xf32>
    %330 = vector.broadcast %329 : vector<8x1xf32> to vector<8x8xf32>
    %331 = arith.subf %327, %330 : vector<8x8xf32>
    %332 = math.exp %331 : vector<8x8xf32>
    %cst_104 = arith.constant dense<0.000000e+00> : vector<8xf32>
    %333 = vector.multi_reduction <add>, %332, %cst_104 [1] : vector<8x8xf32> to vector<8xf32>
    %334 = vector.shape_cast %333 : vector<8xf32> to vector<8x1xf32>
    %335 = vector.broadcast %334 : vector<8x1xf32> to vector<8x8xf32>
    %336 = arith.divf %332, %335 : vector<8x8xf32>
    %337 = vector.extract_strided_slice %321 {offsets = [0, 0], sizes = [8, 8], strides = [1, 1]} : vector<8x32xf32> to vector<8x8xf32>
    %cst_105 = arith.constant dense<0.000000e+00> : vector<8x8xf32>
    %338 = tpu.matmul %336, %337, %cst_105 {dimension_numbers = #tpu.dot_dimension_numbers<[1], [0], [0], [1], [0, 0, 1, 1], [], []>} : vector<8x8xf32>, vector<8x8xf32>, vector<8x8xf32> -> vector<8x8xf32>
    %339 = vector.extract_strided_slice %4 {offsets = [0, 0], sizes = [8, 32], strides = [1, 1]} : vector<32x32xf32> to vector<8x32xf32>
    %cst_106 = arith.constant dense<0.000000e+00> : vector<8x32xf32>
    %340 = tpu.matmul %338, %339, %cst_106 {dimension_numbers = #tpu.dot_dimension_numbers<[1], [0], [0], [1], [0, 0, 1, 1], [], []>} : vector<8x8xf32>, vector<8x32xf32>, vector<8x32xf32> -> vector<8x32xf32>
    %341 = vector.extract_strided_slice %319 {offsets = [0, 8], sizes = [8, 8], strides = [1, 1]} : vector<8x32xf32> to vector<8x8xf32>
    %342 = vector.extract_strided_slice %320 {offsets = [0, 8], sizes = [8, 8], strides = [1, 1]} : vector<8x32xf32> to vector<8x8xf32>
    %cst_107 = arith.constant dense<0.000000e+00> : vector<8x8xf32>
    %343 = tpu.matmul %341, %342, %cst_107 {dimension_numbers = #tpu.dot_dimension_numbers<[1], [1], [0], [0], [0, 0, 1, 0], [], []>} : vector<8x8xf32>, vector<8x8xf32>, vector<8x8xf32> -> vector<8x8xf32>
    %cst_108 = arith.constant 0.353553385 : f32
    %344 = vector.broadcast %cst_108 : f32 to vector<8x8xf32>
    %345 = arith.mulf %343, %344 : vector<8x8xf32>
    %346 = arith.addf %345, %318 : vector<8x8xf32>
    %cst_109 = arith.constant dense<0xFF800000> : vector<8xf32>
    %347 = vector.multi_reduction <maximumf>, %346, %cst_109 [1] : vector<8x8xf32> to vector<8xf32>
    %348 = vector.shape_cast %347 : vector<8xf32> to vector<8x1xf32>
    %349 = vector.broadcast %348 : vector<8x1xf32> to vector<8x8xf32>
    %350 = arith.subf %346, %349 : vector<8x8xf32>
    %351 = math.exp %350 : vector<8x8xf32>
    %cst_110 = arith.constant dense<0.000000e+00> : vector<8xf32>
    %352 = vector.multi_reduction <add>, %351, %cst_110 [1] : vector<8x8xf32> to vector<8xf32>
    %353 = vector.shape_cast %352 : vector<8xf32> to vector<8x1xf32>
    %354 = vector.broadcast %353 : vector<8x1xf32> to vector<8x8xf32>
    %355 = arith.divf %351, %354 : vector<8x8xf32>
    %356 = vector.extract_strided_slice %321 {offsets = [0, 8], sizes = [8, 8], strides = [1, 1]} : vector<8x32xf32> to vector<8x8xf32>
    %cst_111 = arith.constant dense<0.000000e+00> : vector<8x8xf32>
    %357 = tpu.matmul %355, %356, %cst_111 {dimension_numbers = #tpu.dot_dimension_numbers<[1], [0], [0], [1], [0, 0, 1, 1], [], []>} : vector<8x8xf32>, vector<8x8xf32>, vector<8x8xf32> -> vector<8x8xf32>
    %358 = vector.extract_strided_slice %4 {offsets = [8, 0], sizes = [8, 32], strides = [1, 1]} : vector<32x32xf32> to vector<8x32xf32>
    %cst_112 = arith.constant dense<0.000000e+00> : vector<8x32xf32>
    %359 = tpu.matmul %357, %358, %cst_112 {dimension_numbers = #tpu.dot_dimension_numbers<[1], [0], [0], [1], [0, 0, 1, 1], [], []>} : vector<8x8xf32>, vector<8x32xf32>, vector<8x32xf32> -> vector<8x32xf32>
    %360 = arith.addf %340, %359 : vector<8x32xf32>
    %361 = vector.extract_strided_slice %319 {offsets = [0, 16], sizes = [8, 8], strides = [1, 1]} : vector<8x32xf32> to vector<8x8xf32>
    %362 = vector.extract_strided_slice %320 {offsets = [0, 16], sizes = [8, 8], strides = [1, 1]} : vector<8x32xf32> to vector<8x8xf32>
    %cst_113 = arith.constant dense<0.000000e+00> : vector<8x8xf32>
    %363 = tpu.matmul %361, %362, %cst_113 {dimension_numbers = #tpu.dot_dimension_numbers<[1], [1], [0], [0], [0, 0, 1, 0], [], []>} : vector<8x8xf32>, vector<8x8xf32>, vector<8x8xf32> -> vector<8x8xf32>
    %cst_114 = arith.constant 0.353553385 : f32
    %364 = vector.broadcast %cst_114 : f32 to vector<8x8xf32>
    %365 = arith.mulf %363, %364 : vector<8x8xf32>
    %366 = arith.addf %365, %318 : vector<8x8xf32>
    %cst_115 = arith.constant dense<0xFF800000> : vector<8xf32>
    %367 = vector.multi_reduction <maximumf>, %366, %cst_115 [1] : vector<8x8xf32> to vector<8xf32>
    %368 = vector.shape_cast %367 : vector<8xf32> to vector<8x1xf32>
    %369 = vector.broadcast %368 : vector<8x1xf32> to vector<8x8xf32>
    %370 = arith.subf %366, %369 : vector<8x8xf32>
    %371 = math.exp %370 : vector<8x8xf32>
    %cst_116 = arith.constant dense<0.000000e+00> : vector<8xf32>
    %372 = vector.multi_reduction <add>, %371, %cst_116 [1] : vector<8x8xf32> to vector<8xf32>
    %373 = vector.shape_cast %372 : vector<8xf32> to vector<8x1xf32>
    %374 = vector.broadcast %373 : vector<8x1xf32> to vector<8x8xf32>
    %375 = arith.divf %371, %374 : vector<8x8xf32>
    %376 = vector.extract_strided_slice %321 {offsets = [0, 16], sizes = [8, 8], strides = [1, 1]} : vector<8x32xf32> to vector<8x8xf32>
    %cst_117 = arith.constant dense<0.000000e+00> : vector<8x8xf32>
    %377 = tpu.matmul %375, %376, %cst_117 {dimension_numbers = #tpu.dot_dimension_numbers<[1], [0], [0], [1], [0, 0, 1, 1], [], []>} : vector<8x8xf32>, vector<8x8xf32>, vector<8x8xf32> -> vector<8x8xf32>
    %378 = vector.extract_strided_slice %4 {offsets = [16, 0], sizes = [8, 32], strides = [1, 1]} : vector<32x32xf32> to vector<8x32xf32>
    %cst_118 = arith.constant dense<0.000000e+00> : vector<8x32xf32>
    %379 = tpu.matmul %377, %378, %cst_118 {dimension_numbers = #tpu.dot_dimension_numbers<[1], [0], [0], [1], [0, 0, 1, 1], [], []>} : vector<8x8xf32>, vector<8x32xf32>, vector<8x32xf32> -> vector<8x32xf32>
    %380 = arith.addf %360, %379 : vector<8x32xf32>
    %381 = vector.extract_strided_slice %319 {offsets = [0, 24], sizes = [8, 8], strides = [1, 1]} : vector<8x32xf32> to vector<8x8xf32>
    %382 = vector.extract_strided_slice %320 {offsets = [0, 24], sizes = [8, 8], strides = [1, 1]} : vector<8x32xf32> to vector<8x8xf32>
    %cst_119 = arith.constant dense<0.000000e+00> : vector<8x8xf32>
    %383 = tpu.matmul %381, %382, %cst_119 {dimension_numbers = #tpu.dot_dimension_numbers<[1], [1], [0], [0], [0, 0, 1, 0], [], []>} : vector<8x8xf32>, vector<8x8xf32>, vector<8x8xf32> -> vector<8x8xf32>
    %cst_120 = arith.constant 0.353553385 : f32
    %384 = vector.broadcast %cst_120 : f32 to vector<8x8xf32>
    %385 = arith.mulf %383, %384 : vector<8x8xf32>
    %386 = arith.addf %385, %318 : vector<8x8xf32>
    %cst_121 = arith.constant dense<0xFF800000> : vector<8xf32>
    %387 = vector.multi_reduction <maximumf>, %386, %cst_121 [1] : vector<8x8xf32> to vector<8xf32>
    %388 = vector.shape_cast %387 : vector<8xf32> to vector<8x1xf32>
    %389 = vector.broadcast %388 : vector<8x1xf32> to vector<8x8xf32>
    %390 = arith.subf %386, %389 : vector<8x8xf32>
    %391 = math.exp %390 : vector<8x8xf32>
    %cst_122 = arith.constant dense<0.000000e+00> : vector<8xf32>
    %392 = vector.multi_reduction <add>, %391, %cst_122 [1] : vector<8x8xf32> to vector<8xf32>
    %393 = vector.shape_cast %392 : vector<8xf32> to vector<8x1xf32>
    %394 = vector.broadcast %393 : vector<8x1xf32> to vector<8x8xf32>
    %395 = arith.divf %391, %394 : vector<8x8xf32>
    %396 = vector.extract_strided_slice %321 {offsets = [0, 24], sizes = [8, 8], strides = [1, 1]} : vector<8x32xf32> to vector<8x8xf32>
    %cst_123 = arith.constant dense<0.000000e+00> : vector<8x8xf32>
    %397 = tpu.matmul %395, %396, %cst_123 {dimension_numbers = #tpu.dot_dimension_numbers<[1], [0], [0], [1], [0, 0, 1, 1], [], []>} : vector<8x8xf32>, vector<8x8xf32>, vector<8x8xf32> -> vector<8x8xf32>
    %398 = vector.extract_strided_slice %4 {offsets = [24, 0], sizes = [8, 32], strides = [1, 1]} : vector<32x32xf32> to vector<8x32xf32>
    %cst_124 = arith.constant dense<0.000000e+00> : vector<8x32xf32>
    %399 = tpu.matmul %397, %398, %cst_124 {dimension_numbers = #tpu.dot_dimension_numbers<[1], [0], [0], [1], [0, 0, 1, 1], [], []>} : vector<8x8xf32>, vector<8x32xf32>, vector<8x32xf32> -> vector<8x32xf32>
    %400 = arith.addf %380, %399 : vector<8x32xf32>
    %401 = tpu.concatenate %309, %400 in 0 : vector<8x32xf32>, vector<8x32xf32> -> vector<16x32xf32>
    %402 = arith.addf %216, %401 : vector<16x32xf32>
    %cst_125 = arith.constant dense<0.000000e+00> : vector<16xf32>
    %403 = vector.multi_reduction <add>, %402, %cst_125 [1] : vector<16x32xf32> to vector<16xf32>
    %404 = vector.shape_cast %403 : vector<16xf32> to vector<16x1xf32>
    %cst_126 = arith.constant 3.200000e+01 : f32
    %405 = vector.broadcast %cst_126 : f32 to vector<16x1xf32>
    %406 = arith.divf %404, %405 : vector<16x1xf32>
    %407 = vector.broadcast %406 : vector<16x1xf32> to vector<16x32xf32>
    %408 = arith.subf %402, %407 : vector<16x32xf32>
    %409 = arith.mulf %408, %408 : vector<16x32xf32>
    %cst_127 = arith.constant dense<0.000000e+00> : vector<16xf32>
    %410 = vector.multi_reduction <add>, %409, %cst_127 [1] : vector<16x32xf32> to vector<16xf32>
    %411 = vector.shape_cast %410 : vector<16xf32> to vector<16x1xf32>
    %cst_128 = arith.constant 3.200000e+01 : f32
    %412 = vector.broadcast %cst_128 : f32 to vector<16x1xf32>
    %413 = arith.divf %411, %412 : vector<16x1xf32>
    %414 = vector.broadcast %406 : vector<16x1xf32> to vector<16x32xf32>
    %415 = arith.subf %402, %414 : vector<16x32xf32>
    %cst_129 = arith.constant 9.99999974E-6 : f32
    %416 = vector.broadcast %cst_129 : f32 to vector<16x1xf32>
    %417 = arith.addf %413, %416 : vector<16x1xf32>
    %418 = math.rsqrt %417 : vector<16x1xf32>
    %419 = vector.broadcast %418 : vector<16x1xf32> to vector<16x32xf32>
    %420 = arith.mulf %415, %419 : vector<16x32xf32>
    %421 = vector.broadcast %11 : vector<1x32xf32> to vector<16x32xf32>
    %422 = arith.mulf %420, %421 : vector<16x32xf32>
    %423 = vector.broadcast %12 : vector<1x32xf32> to vector<16x32xf32>
    %424 = arith.addf %422, %423 : vector<16x32xf32>
    %cst_130 = arith.constant dense<0.000000e+00> : vector<16x64xf32>
    %425 = tpu.matmul %424, %5, %cst_130 {dimension_numbers = #tpu.dot_dimension_numbers<[1], [0], [0], [1], [0, 0, 1, 1], [], []>} : vector<16x32xf32>, vector<32x64xf32>, vector<16x64xf32> -> vector<16x64xf32>
    %426 = vector.broadcast %13 : vector<1x64xf32> to vector<16x64xf32>
    %427 = arith.addf %425, %426 : vector<16x64xf32>
    %cst_131 = arith.constant 0.000000e+00 : f32
    %428 = vector.broadcast %cst_131 : f32 to vector<16x64xf32>
    %429 = arith.maximumf %427, %428 : vector<16x64xf32>
    %cst_132 = arith.constant dense<0.000000e+00> : vector<16x32xf32>
    %430 = tpu.matmul %429, %6, %cst_132 {dimension_numbers = #tpu.dot_dimension_numbers<[1], [0], [0], [1], [0, 0, 1, 1], [], []>} : vector<16x64xf32>, vector<64x32xf32>, vector<16x32xf32> -> vector<16x32xf32>
    %431 = vector.broadcast %14 : vector<1x32xf32> to vector<16x32xf32>
    %432 = arith.addf %430, %431 : vector<16x32xf32>
    %433 = arith.addf %424, %432 : vector<16x32xf32>
    %cst_133 = arith.constant dense<0.000000e+00> : vector<16xf32>
    %434 = vector.multi_reduction <add>, %433, %cst_133 [1] : vector<16x32xf32> to vector<16xf32>
    %435 = vector.shape_cast %434 : vector<16xf32> to vector<16x1xf32>
    %cst_134 = arith.constant 3.200000e+01 : f32
    %436 = vector.broadcast %cst_134 : f32 to vector<16x1xf32>
    %437 = arith.divf %435, %436 : vector<16x1xf32>
    %438 = vector.broadcast %437 : vector<16x1xf32> to vector<16x32xf32>
    %439 = arith.subf %433, %438 : vector<16x32xf32>
    %440 = arith.mulf %439, %439 : vector<16x32xf32>
    %cst_135 = arith.constant dense<0.000000e+00> : vector<16xf32>
    %441 = vector.multi_reduction <add>, %440, %cst_135 [1] : vector<16x32xf32> to vector<16xf32>
    %442 = vector.shape_cast %441 : vector<16xf32> to vector<16x1xf32>
    %cst_136 = arith.constant 3.200000e+01 : f32
    %443 = vector.broadcast %cst_136 : f32 to vector<16x1xf32>
    %444 = arith.divf %442, %443 : vector<16x1xf32>
    %445 = vector.broadcast %437 : vector<16x1xf32> to vector<16x32xf32>
    %446 = arith.subf %433, %445 : vector<16x32xf32>
    %cst_137 = arith.constant 9.99999974E-6 : f32
    %447 = vector.broadcast %cst_137 : f32 to vector<16x1xf32>
    %448 = arith.addf %444, %447 : vector<16x1xf32>
    %449 = math.rsqrt %448 : vector<16x1xf32>
    %450 = vector.broadcast %449 : vector<16x1xf32> to vector<16x32xf32>
    %451 = arith.mulf %446, %450 : vector<16x32xf32>
    %452 = vector.broadcast %15 : vector<1x32xf32> to vector<16x32xf32>
    %453 = arith.mulf %451, %452 : vector<16x32xf32>
    %454 = vector.broadcast %16 : vector<1x32xf32> to vector<16x32xf32>
    %455 = arith.addf %453, %454 : vector<16x32xf32>
    %cst_138 = arith.constant dense<0.000000e+00> : vector<16x128xf32>
    %456 = tpu.matmul %455, %8, %cst_138 {dimension_numbers = #tpu.dot_dimension_numbers<[1], [0], [0], [1], [0, 0, 1, 1], [], []>} : vector<16x32xf32>, vector<32x128xf32>, vector<16x128xf32> -> vector<16x128xf32>
    %c0_139 = arith.constant 0 : index
    %c0_140 = arith.constant 0 : index
    %457 = vector.load %arg5[%c0_139, %c0_140] : memref<16x128xf32, #tpu.memory_space<vmem>>, vector<16x128xf32>
    tpu.vector_store %arg5[%c0_139, %c0_140], %456 {strides = array<i32>} : memref<16x128xf32, #tpu.memory_space<vmem>>, vector<16x128xf32>,
    return
  }
  func.func @transform_0(%arg0: i32, %arg1: memref<2xi32, #tpu.memory_space<smem>>) -> (i32, i32, i32) {
    %c0_i32 = arith.constant 0 : i32
    %c0_i32_0 = arith.constant 0 : i32
    %c0_i32_1 = arith.constant 0 : i32
    return %arg0, %c0_i32, %c0_i32_0 : i32, i32, i32
  }
  func.func @transform_1(%arg0: i32, %arg1: memref<2xi32, #tpu.memory_space<smem>>) -> (i32, i32, i32) {
    %c0_i32 = arith.constant 0 : i32
    %c0_i32_0 = arith.constant 0 : i32
    %c0_i32_1 = arith.constant 0 : i32
    return %arg0, %c0_i32, %c0_i32_0 : i32, i32, i32
  }
  func.func @transform_2(%arg0: i32, %arg1: memref<2xi32, #tpu.memory_space<smem>>) -> (i32, i32) {
    %c0_i32 = arith.constant 0 : i32
    %c0_i32_0 = arith.constant 0 : i32
    %c0_i32_1 = arith.constant 0 : i32
    return %c0_i32, %c0_i32_0 : i32, i32
  }
  func.func @transform_3(%arg0: i32, %arg1: memref<2xi32, #tpu.memory_space<smem>>) -> (i32, i32) {
    %c0_i32 = arith.constant 0 : i32
    %c0_i32_0 = arith.constant 0 : i32
    return %arg0, %c0_i32 : i32, i32
  }
}

</mosaic_0001>

<llo_original>
// kernel: tpu_custom_call.1
$region0: #{tpu_custom_call.1}
  #allocation0 [shape = 'u32[]', space=smem, size = 0x4, offset = 0x4, fixed_abs, tag = 'smem constant byte address 0x4 - core index']
  #allocation1 [shape = 'u32[144,128]{1,0:T(1,128)}', space=vmem, size = 0x12000, scoped, tag = 'internal scratch']
  #allocation2 [shape = 's32[1]{0}', space=sflag, size = 0x4, scoped, tag = 'scoped memory for tpu_custom_call.1']
  #allocation3 [shape = 'u8[512]{0}', space=smem, size = 0x200, scoped, tag = 'prefetched SMEM operand 0']
  %s0 = inlined_call_operand.hbm [shape: s32[2], index: 0, kind: input, shape index: {}]
  %s1 = inlined_call_operand.hbm [shape: f32[2,8,32], index: 1, kind: input, shape index: {}]
  %s2 = inlined_call_operand.hbm [shape: f32[2,8,32], index: 2, kind: input, shape index: {}]
  %s3 = inlined_call_operand.hbm [shape: f32[296,128], index: 3, kind: input, shape index: {}]
  %s4 = inlined_call_operand.hbm [shape: f32[16,128], index: 4, kind: output, shape index: {}]
  %s5 = sld [smem:[#allocation0]]
  $region34: #{tpu_custom_call.1} parent=0
    _
  %s7 = ssub.s32 1, %s5
  %s8 = scalar_select 0, %s7, %s5
  %10 = dma.hbm_to_smem %s0, 16, [#allocation3], [#allocation2]
  %11 = dma.done [#allocation2], 16
  %12 = sfence
  $region1: #{tpu_custom_call.1} parent=0
    #allocation4 [shape = 'u8[8192]{0}', space=vmem, size = 0x2000, scoped, tag = 'input window, operand 1, single buffered']
    #allocation5 [shape = 's32[1]{0}', space=sflag, size = 0x4, scoped, tag = 'scoped memory for tpu_custom_call.1']
    #allocation6 [shape = 's32[1]{0}', space=sflag, size = 0x4, scoped, tag = 'scoped memory for tpu_custom_call.1']
    #allocation7 [shape = 'u8[8192]{0}', space=vmem, size = 0x2000, scoped, tag = 'input window, operand 2, single buffered']
    #allocation8 [shape = 's32[1]{0}', space=sflag, size = 0x4, scoped, tag = 'scoped memory for tpu_custom_call.1']
    #allocation9 [shape = 'u8[151552]{0}', space=vmem, size = 0x25000, scoped, tag = 'input window, operand 3, single buffered']
    #allocation10 [shape = 'u8[8192]{0}', space=vmem, size = 0x2000, scoped, tag = 'output window, operand 0, single buffered']
    %13 = vsyncpa [#allocation5], 0
    %14 = vsyncpa [#allocation8], 0
    %15 = vsyncpa [#allocation6], 0
    // Predicated region
    $region2: #{tpu_custom_call.1} parent=1 // pred_check
      _
    $region3: #{tpu_custom_call.1} parent=1 // pred_check_branch
      %17 = sbr.rel (0) target = $region5
    $region4: #{tpu_custom_call.1} parent=1 // pred_region
      %s19 = ssub.s32 256, 256
      %20 = vsyncadd [#allocation5], %s19
      %s21 = sshll.u32 [#allocation4], 4
      %s22 = int_to_ptr.vmem [resolvable:$true] %s21
      %27 = dma.hbm_to_vmem [thread:$0]  %s1, 256, %s22, [#allocation5], 128, 128, 8
    $region5: #{tpu_custom_call.1} parent=1 // pred_fallthru
      _
    // Predicated region
    $region6: #{tpu_custom_call.1} parent=1 // pred_check
      _
    $region7: #{tpu_custom_call.1} parent=1 // pred_check_branch
      %29 = sbr.rel (0) target = $region9
    $region8: #{tpu_custom_call.1} parent=1 // pred_region
      %s31 = ssub.s32 256, 256
      %32 = vsyncadd [#allocation8], %s31
      %s33 = sshll.u32 [#allocation7], 4
      %s34 = int_to_ptr.vmem [resolvable:$true] %s33
      %39 = dma.hbm_to_vmem [thread:$0]  %s2, 256, %s34, [#allocation8], 128, 128, 8
    $region9: #{tpu_custom_call.1} parent=1 // pred_fallthru
      _
    // Predicated region
    $region10: #{tpu_custom_call.1} parent=1 // pred_check
      _
    $region11: #{tpu_custom_call.1} parent=1 // pred_check_branch
      %41 = sbr.rel (0) target = $region13
    $region12: #{tpu_custom_call.1} parent=1 // pred_region
      %s43 = ssub.s32 4736, 4736
      %44 = vsyncadd [#allocation8], %s43
      %s45 = sshll.u32 [#allocation9], 4
      %s46 = int_to_ptr.vmem [resolvable:$true] %s45
      %51 = dma.hbm_to_vmem [thread:$0]  %s3, 4736, %s46, [#allocation8], 128, 128, 8
    $region13: #{tpu_custom_call.1} parent=1 // pred_fallthru
      _
    // Predicated region
    $region14: #{tpu_custom_call.1} parent=1 // pred_check
      _
    $region15: #{tpu_custom_call.1} parent=1 // pred_check_branch
      %53 = sbr.rel (0) target = $region17
    $region16: #{tpu_custom_call.1} parent=1 // pred_region
      %54 = dma.done [#allocation5], 256
    $region17: #{tpu_custom_call.1} parent=1 // pred_fallthru
      _
    // Predicated region
    $region18: #{tpu_custom_call.1} parent=1 // pred_check
      _
    $region19: #{tpu_custom_call.1} parent=1 // pred_check_branch
      %56 = sbr.rel (0) target = $region21
    $region20: #{tpu_custom_call.1} parent=1 // pred_region
      %57 = dma.done [#allocation8], 256
    $region21: #{tpu_custom_call.1} parent=1 // pred_fallthru
      _
    // Predicated region
    $region22: #{tpu_custom_call.1} parent=1 // pred_check
      _
    $region23: #{tpu_custom_call.1} parent=1 // pred_check_branch
      %59 = sbr.rel (0) target = $region25
    $region24: #{tpu_custom_call.1} parent=1 // pred_region
      %60 = dma.done [#allocation8], 4736
    $region25: #{tpu_custom_call.1} parent=1 // pred_fallthru
      _
    %v61 = vld [vmem:[#allocation9] sm:$0xff]
    %v62 = vld [vmem:[#allocation9 + $0x8] sm:$0xff]
    %v63 = vld [vmem:[#allocation9 + $0x10] sm:$0xff]
    %v64 = vld [vmem:[#allocation9 + $0x18] sm:$0xff]
    %v65 = vld [vmem:[#allocation9 + $0x20] sm:$0xff]
    %v66 = vld [vmem:[#allocation9 + $0x28] sm:$0xff]
    %v67 = vld [vmem:[#allocation9 + $0x30] sm:$0xff]
    %v68 = vld [vmem:[#allocation9 + $0x38] sm:$0xff]
    %v69 = vld [vmem:[#allocation9 + $0x40] sm:$0xff]
    %v70 = vld [vmem:[#allocation9 + $0x48] sm:$0xff]
    %v71 = vld [vmem:[#allocation9 + $0x50] sm:$0xff]
    %v72 = vld [vmem:[#allocation9 + $0x58] sm:$0xff]
    %v73 = vld [vmem:[#allocation9 + $0x60] sm:$0xff]
    %v74 = vld [vmem:[#allocation9 + $0x68] sm:$0xff]
    %v75 = vld [vmem:[#allocation9 + $0x70] sm:$0xff]
    %v76 = vld [vmem:[#allocation9 + $0x78] sm:$0xff]
    %v77 = vld [vmem:[#allocation9 + $0x80] sm:$0xff]
    %v78 = vld [vmem:[#allocation9 + $0x88] sm:$0xff]
    %v79 = vld [vmem:[#allocation9 + $0x90] sm:$0xff]
    %v80 = vld [vmem:[#allocation9 + $0x98] sm:$0xff]
    %v81 = vld [vmem:[#allocation9 + $0xa0] sm:$0xff]
    %v82 = vld [vmem:[#allocation9 + $0xa8] sm:$0xff]
    %v83 = vld [vmem:[#allocation9 + $0xb0] sm:$0xff]
    %v84 = vld [vmem:[#allocation9 + $0xb8] sm:$0xff]
    %v85 = vld [vmem:[#allocation9 + $0xc0] sm:$0xff]
    %v86 = vld [vmem:[#allocation9 + $0xc8] sm:$0xff]
    %v87 = vld [vmem:[#allocation9 + $0xd0] sm:$0xff]
    %v88 = vld [vmem:[#allocation9 + $0xd8] sm:$0xff]
    %v89 = vld [vmem:[#allocation9 + $0xe0] sm:$0xff]
    %v90 = vld [vmem:[#allocation9 + $0xe8] sm:$0xff]
    %v91 = vld [vmem:[#allocation9 + $0xf0] sm:$0xff]
    %v92 = vld [vmem:[#allocation9 + $0xf8] sm:$0xff]
    %v93 = vld [vmem:[#allocation9 + $0x100] sm:$0xff]
    %v94 = vld [vmem:[#allocation9 + $0x108] sm:$0xff]
    %v95 = vld [vmem:[#allocation9 + $0x110] sm:$0xff]
    %v96 = vld [vmem:[#allocation9 + $0x118] sm:$0xff]
    %v97 = vld [vmem:[#allocation9 + $0x120] sm:$0xff]
    %v98 = vlaneseq
    %v99 = vshrl.u32 %v98, 7
    %v100 = vlaneseq
    %v101 = vand.u32 %v100, 127
    %vm102 = vcmp.le.s32.totalorder %v101, %v99
    %v103 = vsel %vm102, 0.0, -1000000.0
    %v104 = vld [vmem:[#allocation4] sm:$0xff]
    %v105 = vld [vmem:[#allocation4 + $0x8] sm:$0xff]
    %v106 = vld [vmem:[#allocation7] sm:$0xff]
    %v107 = vld [vmem:[#allocation7 + $0x8] sm:$0xff]
    %vm108 = vcmask 261120
    %v110 = vsel %vm108, %v104, 0
    %v113 = vsel %vm108, %v105, 0
    %115 = vmatprep.subr.mxu0 0.0
    %116 = vmatpush1.msra.mxu0 0.0
    %117 = vmatprep.subr.mxu0 0.0
    %118 = vmatpush1.msra.mxu0 0.0
    %119 = vmatprep.subr.mxu0 0.0
    %120 = vmatpush1.msra.mxu0 0.0
    %121 = vmatprep.subr.mxu0 0.0
    %122 = vmatpush1.msra.mxu0 0.0
    %123 = vmatprep.subr.mxu0 0.0
    %124 = vmatpush1.msra.mxu0 0.0
    %125 = vmatprep.subr.mxu0 0.0
    %126 = vmatpush1.msra.mxu0 0.0
    %127 = vmatprep.subr.mxu0 0.0
    %128 = vmatpush1.msra.mxu0 0.0
    %129 = vmatprep.subr.mxu0 0.0
    %130 = vmatpush1.msra.mxu0 0.0
    %131 = vmatprep.subr.mxu0 0.0
    %132 = vmatpush1.msra.mxu0 0.0
    %133 = vmatprep.subr.mxu0 0.0
    %134 = vmatpush1.msra.mxu0 0.0
    %135 = vmatprep.subr.mxu0 0.0
    %136 = vmatpush1.msra.mxu0 0.0
    %137 = vmatprep.subr.mxu0 0.0
    %138 = vmatpush1.msra.mxu0 0.0
    %139 = vmatprep.subr.mxu0 0.0
    %140 = vmatpush1.msra.mxu0 %v64
    %141 = vmatprep.subr.mxu0 0.0
    %142 = vmatpush1.msra.mxu0 %v63
    %143 = vmatprep.subr.mxu0 0.0
    %144 = vmatpush1.msra.mxu0 %v62
    %145 = vmatprep.subr.mxu0 0.0
    %146 = vmatpush1.msra.mxu0 %v61
    %147 = vmatprep.subr.mxu0 0.0
    %148 = vmatpush2.msra.mxu0 0.0
    %149 = vmatprep.subr.mxu0 0.0
    %150 = vmatpush2.msra.mxu0 0.0
    %151 = vmatprep.subr.mxu0 0.0
    %152 = vmatpush2.msra.mxu0 0.0
    %153 = vmatprep.subr.mxu0 0.0
    %154 = vmatpush2.msra.mxu0 0.0
    %155 = vmatprep.subr.mxu0 0.0
    %156 = vmatpush2.msra.mxu0 0.0
    %157 = vmatprep.subr.mxu0 0.0
    %158 = vmatpush2.msra.mxu0 0.0
    %159 = vmatprep.subr.mxu0 0.0
    %160 = vmatpush2.msra.mxu0 0.0
    %161 = vmatprep.subr.mxu0 0.0
    %162 = vmatpush2.msra.mxu0 0.0
    %163 = vmatprep.subr.mxu0 0.0
    %164 = vmatpush2.msra.mxu0 0.0
    %165 = vmatprep.subr.mxu0 0.0
    %166 = vmatpush2.msra.mxu0 0.0
    %167 = vmatprep.subr.mxu0 0.0
    %168 = vmatpush2.msra.mxu0 0.0
    %169 = vmatprep.subr.mxu0 0.0
    %170 = vmatpush2.msra.mxu0 0.0
    %171 = vmatprep.subr.mxu0 0.0
    %172 = vmatpush2.msra.mxu0 0.0
    %173 = vmatprep.subr.mxu0 0.0
    %174 = vmatpush2.msra.mxu0 0.0
    %175 = vmatprep.subr.mxu0 0.0
    %176 = vmatpush2.msra.mxu0 0.0
    %177 = vmatprep.subr.mxu0 0.0
    %178 = vmatpush2.msra.mxu0 0.0
    %179 = vmatprep.mubr.f32.mxu0 0.0
    %180 = vmatmul.mubr.f32.gmra.mxu0 %v110
    %v181 = vpop.f32.mrf.mxu0
    %v182 = vadd.f32 0.0, %v181
    %v183 = vpop.f32.mrf.mxu0
    %184 = vmatprep.mubr.f32.mxu0 0.0
    %185 = vmatmul.mubr.f32.gmra.mxu0 %v113
    %v186 = vpop.f32.mrf.mxu0
    %v187 = vadd.f32 0.0, %v186
    %v188 = vpop.f32.mrf.mxu0
    %189 = vdwg.mxu0
    %191 = vrot.lane.b32.xlu0 %v182, 96
    %v192 = vpop.permute.xlu0 %191
    %vm193 = vcmask 64512
    %v194 = vsel %vm193, %v182, 0
    %v196 = vsel %vm193, %v192, 0
    %198 = vmatprep.subr.mxu0 0.0
    %199 = vmatpush1.xpose.msra.mxu0 0.0
    %200 = vmatprep.subr.mxu0 0.0
    %201 = vmatpush1.xpose.msra.mxu0 0.0
    %202 = vmatprep.subr.mxu0 0.0
    %203 = vmatpush1.xpose.msra.mxu0 0.0
    %204 = vmatprep.subr.mxu0 0.0
    %205 = vmatpush1.xpose.msra.mxu0 0.0
    %206 = vmatprep.subr.mxu0 0.0
    %207 = vmatpush1.xpose.msra.mxu0 0.0
    %208 = vmatprep.subr.mxu0 0.0
    %209 = vmatpush1.xpose.msra.mxu0 0.0
    %210 = vmatprep.subr.mxu0 0.0
    %211 = vmatpush1.xpose.msra.mxu0 0.0
    %212 = vmatprep.subr.mxu0 0.0
    %213 = vmatpush1.xpose.msra.mxu0 0.0
    %214 = vmatprep.subr.mxu0 0.0
    %215 = vmatpush1.xpose.msra.mxu0 0.0
    %216 = vmatprep.subr.mxu0 0.0
    %217 = vmatpush1.xpose.msra.mxu0 0.0
    %218 = vmatprep.subr.mxu0 0.0
    %219 = vmatpush1.xpose.msra.mxu0 0.0
    %220 = vmatprep.subr.mxu0 0.0
    %221 = vmatpush1.xpose.msra.mxu0 0.0
    %222 = vmatprep.subr.mxu0 0.0
    %223 = vmatpush1.xpose.msra.mxu0 0.0
    %224 = vmatprep.subr.mxu0 0.0
    %225 = vmatpush1.xpose.msra.mxu0 0.0
    %226 = vmatprep.subr.mxu0 0.0
    %227 = vmatpush1.xpose.msra.mxu0 0.0
    %228 = vmatprep.subr.mxu0 0.0
    %229 = vmatpush1.xpose.msra.mxu0 %v196
    %230 = vmatprep.subr.mxu0 0.0
    %231 = vmatpush2.xpose.msra.mxu0 0.0
    %232 = vmatprep.subr.mxu0 0.0
    %233 = vmatpush2.xpose.msra.mxu0 0.0
    %234 = vmatprep.subr.mxu0 0.0
    %235 = vmatpush2.xpose.msra.mxu0 0.0
    %236 = vmatprep.subr.mxu0 0.0
    %237 = vmatpush2.xpose.msra.mxu0 0.0
    %238 = vmatprep.subr.mxu0 0.0
    %239 = vmatpush2.xpose.msra.mxu0 0.0
    %240 = vmatprep.subr.mxu0 0.0
    %241 = vmatpush2.xpose.msra.mxu0 0.0
    %242 = vmatprep.subr.mxu0 0.0
    %243 = vmatpush2.xpose.msra.mxu0 0.0
    %244 = vmatprep.subr.mxu0 0.0
    %245 = vmatpush2.xpose.msra.mxu0 0.0
    %246 = vmatprep.subr.mxu0 0.0
    %247 = vmatpush2.xpose.msra.mxu0 0.0
    %248 = vmatprep.subr.mxu0 0.0
    %249 = vmatpush2.xpose.msra.mxu0 0.0
    %250 = vmatprep.subr.mxu0 0.0
    %251 = vmatpush2.xpose.msra.mxu0 0.0
    %252 = vmatprep.subr.mxu0 0.0
    %253 = vmatpush2.xpose.msra.mxu0 0.0
    %254 = vmatprep.subr.mxu0 0.0
    %255 = vmatpush2.xpose.msra.mxu0 0.0
    %256 = vmatprep.subr.mxu0 0.0
    %257 = vmatpush2.xpose.msra.mxu0 0.0
    %258 = vmatprep.subr.mxu0 0.0
    %259 = vmatpush2.xpose.msra.mxu0 0.0
    %260 = vmatprep.subr.mxu0 0.0
    %261 = vmatpush2.xpose.msra.mxu0 0.0
    %262 = vmatprep.mubr.f32.mxu0 0.0
    %263 = vmatmul.mubr.f32.gmra.mxu0 %v194
    %v264 = vpop.f32.mrf.mxu0
    %v265 = vadd.f32 0.0, %v264
    %v266 = vpop.f32.mrf.mxu0
    %267 = vdwg.mxu0
    %v268 = vmul.f32 %v265, 0.35355338
    %v269 = vadd.f32 %v268, %v103
    %v270 = vsel %vm193, %v269, -inf
    %271 = vmax.xlane.f32.xlu0 %v270
    %v272 = vpop.xlane.xlu0 %271
    %v273 = vsub.f32 %v269, %v272
    %v274 = vmul.f32 %v273, 1.442695
    %v275 = vpow.pop %v274
    %v276 = vsel %vm193, %v275, 0.0
    %277 = vadd.xlane.f32.xlu0 %v276
    %v278 = vpop.xlane.xlu0 %277
    %v279 = vrcp.pop %v278
    %v280 = vmul.f32 %v275, %v279
    %281 = vrot.lane.b32.xlu0 %v182, 64
    %v282 = vpop.permute.xlu0 %281
    %v285 = vsel %vm193, %v280, 0
    %287 = vmatprep.subr.mxu0 0.0
    %288 = vmatpush1.msra.mxu0 0.0
    %289 = vmatprep.subr.mxu0 0.0
    %290 = vmatpush1.msra.mxu0 0.0
    %291 = vmatprep.subr.mxu0 0.0
    %292 = vmatpush1.msra.mxu0 0.0
    %293 = vmatprep.subr.mxu0 0.0
    %294 = vmatpush1.msra.mxu0 0.0
    %295 = vmatprep.subr.mxu0 0.0
    %296 = vmatpush1.msra.mxu0 0.0
    %297 = vmatprep.subr.mxu0 0.0
    %298 = vmatpush1.msra.mxu0 0.0
    %299 = vmatprep.subr.mxu0 0.0
    %300 = vmatpush1.msra.mxu0 0.0
    %301 = vmatprep.subr.mxu0 0.0
    %302 = vmatpush1.msra.mxu0 0.0
    %303 = vmatprep.subr.mxu0 0.0
    %304 = vmatpush1.msra.mxu0 0.0
    %305 = vmatprep.subr.mxu0 0.0
    %306 = vmatpush1.msra.mxu0 0.0
    %307 = vmatprep.subr.mxu0 0.0
    %308 = vmatpush1.msra.mxu0 0.0
    %309 = vmatprep.subr.mxu0 0.0
    %310 = vmatpush1.msra.mxu0 0.0
    %311 = vmatprep.subr.mxu0 0.0
    %312 = vmatpush1.msra.mxu0 0.0
    %313 = vmatprep.subr.mxu0 0.0
    %314 = vmatpush1.msra.mxu0 0.0
    %315 = vmatprep.subr.mxu0 0.0
    %316 = vmatpush1.msra.mxu0 0.0
    %317 = vmatprep.subr.mxu0 0.0
    %318 = vmatpush1.msra.mxu0 %v282
    %319 = vmatprep.subr.mxu0 0.0
    %320 = vmatpush2.msra.mxu0 0.0
    %321 = vmatprep.subr.mxu0 0.0
    %322 = vmatpush2.msra.mxu0 0.0
    %323 = vmatprep.subr.mxu0 0.0
    %324 = vmatpush2.msra.mxu0 0.0
    %325 = vmatprep.subr.mxu0 0.0
    %326 = vmatpush2.msra.mxu0 0.0
    %327 = vmatprep.subr.mxu0 0.0
    %328 = vmatpush2.msra.mxu0 0.0
    %329 = vmatprep.subr.mxu0 0.0
    %330 = vmatpush2.msra.mxu0 0.0
    %331 = vmatprep.subr.mxu0 0.0
    %332 = vmatpush2.msra.mxu0 0.0
    %333 = vmatprep.subr.mxu0 0.0
    %334 = vmatpush2.msra.mxu0 0.0
    %335 = vmatprep.subr.mxu0 0.0
    %336 = vmatpush2.msra.mxu0 0.0
    %337 = vmatprep.subr.mxu0 0.0
    %338 = vmatpush2.msra.mxu0 0.0
    %339 = vmatprep.subr.mxu0 0.0
    %340 = vmatpush2.msra.mxu0 0.0
    %341 = vmatprep.subr.mxu0 0.0
    %342 = vmatpush2.msra.mxu0 0.0
    %343 = vmatprep.subr.mxu0 0.0
    %344 = vmatpush2.msra.mxu0 0.0
    %345 = vmatprep.subr.mxu0 0.0
    %346 = vmatpush2.msra.mxu0 0.0
    %347 = vmatprep.subr.mxu0 0.0
    %348 = vmatpush2.msra.mxu0 0.0
    %349 = vmatprep.subr.mxu0 0.0
    %350 = vmatpush2.msra.mxu0 0.0
    %351 = vmatprep.mubr.f32.mxu0 0.0
    %352 = vmatmul.mubr.f32.gmra.mxu0 %v285
    %v353 = vpop.f32.mrf.mxu0
    %v354 = vadd.f32 0.0, %v353
    %v355 = vpop.f32.mrf.mxu0
    %356 = vdwg.mxu0
    %357 = vrot.lane.b32.xlu0 %v182, 120
    %v358 = vpop.permute.xlu0 %357
    %359 = vrot.lane.b32.xlu0 %v182, 88
    %v360 = vpop.permute.xlu0 %359
    %v361 = vsel %vm193, %v358, 0
    %v363 = vsel %vm193, %v360, 0
    %365 = vmatprep.subr.mxu0 0.0
    %366 = vmatpush1.xpose.msra.mxu0 0.0
    %367 = vmatprep.subr.mxu0 0.0
    %368 = vmatpush1.xpose.msra.mxu0 0.0
    %369 = vmatprep.subr.mxu0 0.0
    %370 = vmatpush1.xpose.msra.mxu0 0.0
    %371 = vmatprep.subr.mxu0 0.0
    %372 = vmatpush1.xpose.msra.mxu0 0.0
    %373 = vmatprep.subr.mxu0 0.0
    %374 = vmatpush1.xpose.msra.mxu0 0.0
    %375 = vmatprep.subr.mxu0 0.0
    %376 = vmatpush1.xpose.msra.mxu0 0.0
    %377 = vmatprep.subr.mxu0 0.0
    %378 = vmatpush1.xpose.msra.mxu0 0.0
    %379 = vmatprep.subr.mxu0 0.0
    %380 = vmatpush1.xpose.msra.mxu0 0.0
    %381 = vmatprep.subr.mxu0 0.0
    %382 = vmatpush1.xpose.msra.mxu0 0.0
    %383 = vmatprep.subr.mxu0 0.0
    %384 = vmatpush1.xpose.msra.mxu0 0.0
    %385 = vmatprep.subr.mxu0 0.0
    %386 = vmatpush1.xpose.msra.mxu0 0.0
    %387 = vmatprep.subr.mxu0 0.0
    %388 = vmatpush1.xpose.msra.mxu0 0.0
    %389 = vmatprep.subr.mxu0 0.0
    %390 = vmatpush1.xpose.msra.mxu0 0.0
    %391 = vmatprep.subr.mxu0 0.0
    %392 = vmatpush1.xpose.msra.mxu0 0.0
    %393 = vmatprep.subr.mxu0 0.0
    %394 = vmatpush1.xpose.msra.mxu0 0.0
    %395 = vmatprep.subr.mxu0 0.0
    %396 = vmatpush1.xpose.msra.mxu0 %v363
    %397 = vmatprep.subr.mxu0 0.0
    %398 = vmatpush2.xpose.msra.mxu0 0.0
    %399 = vmatprep.subr.mxu0 0.0
    %400 = vmatpush2.xpose.msra.mxu0 0.0
    %401 = vmatprep.subr.mxu0 0.0
    %402 = vmatpush2.xpose.msra.mxu0 0.0
    %403 = vmatprep.subr.mxu0 0.0
    %404 = vmatpush2.xpose.msra.mxu0 0.0
    %405 = vmatprep.subr.mxu0 0.0
    %406 = vmatpush2.xpose.msra.mxu0 0.0
    %407 = vmatprep.subr.mxu0 0.0
    %408 = vmatpush2.xpose.msra.mxu0 0.0
    %409 = vmatprep.subr.mxu0 0.0
    %410 = vmatpush2.xpose.msra.mxu0 0.0
    %411 = vmatprep.subr.mxu0 0.0
    %412 = vmatpush2.xpose.msra.mxu0 0.0
    %413 = vmatprep.subr.mxu0 0.0
    %414 = vmatpush2.xpose.msra.mxu0 0.0
    %415 = vmatprep.subr.mxu0 0.0
    %416 = vmatpush2.xpose.msra.mxu0 0.0
    %417 = vmatprep.subr.mxu0 0.0
    %418 = vmatpush2.xpose.msra.mxu0 0.0
    %419 = vmatprep.subr.mxu0 0.0
    %420 = vmatpush2.xpose.msra.mxu0 0.0
    %421 = vmatprep.subr.mxu0 0.0
    %422 = vmatpush2.xpose.msra.mxu0 0.0
    %423 = vmatprep.subr.mxu0 0.0
    %424 = vmatpush2.xpose.msra.mxu0 0.0
    %425 = vmatprep.subr.mxu0 0.0
    %426 = vmatpush2.xpose.msra.mxu0 0.0
    %427 = vmatprep.subr.mxu0 0.0
    %428 = vmatpush2.xpose.msra.mxu0 0.0
    %429 = vmatprep.mubr.f32.mxu0 0.0
    %430 = vmatmul.mubr.f32.gmra.mxu0 %v361
    %v431 = vpop.f32.mrf.mxu0
    %v432 = vadd.f32 0.0, %v431
    %v433 = vpop.f32.mrf.mxu0
    %434 = vdwg.mxu0
    %v435 = vmul.f32 %v432, 0.35355338
    %v436 = vadd.f32 %v435, %v103
    %v437 = vsel %vm193, %v436, -inf
    %438 = vmax.xlane.f32.xlu0 %v437
    %v439 = vpop.xlane.xlu0 %438
    %v440 = vsub.f32 %v436, %v439
    %v441 = vmul.f32 %v440, 1.442695
    %v442 = vpow.pop %v441
    %v443 = vsel %vm193, %v442, 0.0
    %444 = vadd.xlane.f32.xlu0 %v443
    %v445 = vpop.xlane.xlu0 %444
    %v446 = vrcp.pop %v445
    %v447 = vmul.f32 %v442, %v446
    %448 = vrot.lane.b32.xlu0 %v182, 56
    %v449 = vpop.permute.xlu0 %448
    %v452 = vsel %vm193, %v447, 0
    %454 = vmatprep.subr.mxu0 0.0
    %455 = vmatpush1.msra.mxu0 0.0
    %456 = vmatprep.subr.mxu0 0.0
    %457 = vmatpush1.msra.mxu0 0.0
    %458 = vmatprep.subr.mxu0 0.0
    %459 = vmatpush1.msra.mxu0 0.0
    %460 = vmatprep.subr.mxu0 0.0
    %461 = vmatpush1.msra.mxu0 0.0
    %462 = vmatprep.subr.mxu0 0.0
    %463 = vmatpush1.msra.mxu0 0.0
    %464 = vmatprep.subr.mxu0 0.0
    %465 = vmatpush1.msra.mxu0 0.0
    %466 = vmatprep.subr.mxu0 0.0
    %467 = vmatpush1.msra.mxu0 0.0
    %468 = vmatprep.subr.mxu0 0.0
    %469 = vmatpush1.msra.mxu0 0.0
    %470 = vmatprep.subr.mxu0 0.0
    %471 = vmatpush1.msra.mxu0 0.0
    %472 = vmatprep.subr.mxu0 0.0
    %473 = vmatpush1.msra.mxu0 0.0
    %474 = vmatprep.subr.mxu0 0.0
    %475 = vmatpush1.msra.mxu0 0.0
    %476 = vmatprep.subr.mxu0 0.0
    %477 = vmatpush1.msra.mxu0 0.0
    %478 = vmatprep.subr.mxu0 0.0
    %479 = vmatpush1.msra.mxu0 0.0
    %480 = vmatprep.subr.mxu0 0.0
    %481 = vmatpush1.msra.mxu0 0.0
    %482 = vmatprep.subr.mxu0 0.0
    %483 = vmatpush1.msra.mxu0 0.0
    %484 = vmatprep.subr.mxu0 0.0
    %485 = vmatpush1.msra.mxu0 %v449
    %486 = vmatprep.subr.mxu0 0.0
    %487 = vmatpush2.msra.mxu0 0.0
    %488 = vmatprep.subr.mxu0 0.0
    %489 = vmatpush2.msra.mxu0 0.0
    %490 = vmatprep.subr.mxu0 0.0
    %491 = vmatpush2.msra.mxu0 0.0
    %492 = vmatprep.subr.mxu0 0.0
    %493 = vmatpush2.msra.mxu0 0.0
    %494 = vmatprep.subr.mxu0 0.0
    %495 = vmatpush2.msra.mxu0 0.0
    %496 = vmatprep.subr.mxu0 0.0
    %497 = vmatpush2.msra.mxu0 0.0
    %498 = vmatprep.subr.mxu0 0.0
    %499 = vmatpush2.msra.mxu0 0.0
    %500 = vmatprep.subr.mxu0 0.0
    %501 = vmatpush2.msra.mxu0 0.0
    %502 = vmatprep.subr.mxu0 0.0
    %503 = vmatpush2.msra.mxu0 0.0
    %504 = vmatprep.subr.mxu0 0.0
    %505 = vmatpush2.msra.mxu0 0.0
    %506 = vmatprep.subr.mxu0 0.0
    %507 = vmatpush2.msra.mxu0 0.0
    %508 = vmatprep.subr.mxu0 0.0
    %509 = vmatpush2.msra.mxu0 0.0
    %510 = vmatprep.subr.mxu0 0.0
    %511 = vmatpush2.msra.mxu0 0.0
    %512 = vmatprep.subr.mxu0 0.0
    %513 = vmatpush2.msra.mxu0 0.0
    %514 = vmatprep.subr.mxu0 0.0
    %515 = vmatpush2.msra.mxu0 0.0
    %516 = vmatprep.subr.mxu0 0.0
    %517 = vmatpush2.msra.mxu0 0.0
    %518 = vmatprep.mubr.f32.mxu0 0.0
    %519 = vmatmul.mubr.f32.gmra.mxu0 %v452
    %v520 = vpop.f32.mrf.mxu0
    %v521 = vadd.f32 0.0, %v520
    %v522 = vpop.f32.mrf.mxu0
    %523 = vdwg.mxu0
    %v525 = vsel %vm193, %v521, 0
    %527 = vmatprep.subr.mxu0 0.0
    %528 = vmatpush1.msra.mxu0 0.0
    %529 = vmatprep.subr.mxu0 0.0
    %530 = vmatpush1.msra.mxu0 0.0
    %531 = vmatprep.subr.mxu0 0.0
    %532 = vmatpush1.msra.mxu0 0.0
    %533 = vmatprep.subr.mxu0 0.0
    %534 = vmatpush1.msra.mxu0 0.0
    %535 = vmatprep.subr.mxu0 0.0
    %536 = vmatpush1.msra.mxu0 0.0
    %537 = vmatprep.subr.mxu0 0.0
    %538 = vmatpush1.msra.mxu0 0.0
    %539 = vmatprep.subr.mxu0 0.0
    %540 = vmatpush1.msra.mxu0 0.0
    %541 = vmatprep.subr.mxu0 0.0
    %542 = vmatpush1.msra.mxu0 0.0
    %543 = vmatprep.subr.mxu0 0.0
    %544 = vmatpush1.msra.mxu0 0.0
    %545 = vmatprep.subr.mxu0 0.0
    %546 = vmatpush1.msra.mxu0 0.0
    %547 = vmatprep.subr.mxu0 0.0
    %548 = vmatpush1.msra.mxu0 0.0
    %549 = vmatprep.subr.mxu0 0.0
    %550 = vmatpush1.msra.mxu0 0.0
    %551 = vmatprep.subr.mxu0 0.0
    %552 = vmatpush1.msra.mxu0 0.0
    %553 = vmatprep.subr.mxu0 0.0
    %554 = vmatpush1.msra.mxu0 0.0
    %555 = vmatprep.subr.mxu0 0.0
    %556 = vmatpush1.msra.mxu0 0.0
    %557 = vmatprep.subr.mxu0 0.0
    %558 = vmatpush1.msra.mxu0 %v66
    %559 = vmatprep.subr.mxu0 0.0
    %560 = vmatpush2.msra.mxu0 0.0
    %561 = vmatprep.subr.mxu0 0.0
    %562 = vmatpush2.msra.mxu0 0.0
    %563 = vmatprep.subr.mxu0 0.0
    %564 = vmatpush2.msra.mxu0 0.0
    %565 = vmatprep.subr.mxu0 0.0
    %566 = vmatpush2.msra.mxu0 0.0
    %567 = vmatprep.subr.mxu0 0.0
    %568 = vmatpush2.msra.mxu0 0.0
    %569 = vmatprep.subr.mxu0 0.0
    %570 = vmatpush2.msra.mxu0 0.0
    %571 = vmatprep.subr.mxu0 0.0
    %572 = vmatpush2.msra.mxu0 0.0
    %573 = vmatprep.subr.mxu0 0.0
    %574 = vmatpush2.msra.mxu0 0.0
    %575 = vmatprep.subr.mxu0 0.0
    %576 = vmatpush2.msra.mxu0 0.0
    %577 = vmatprep.subr.mxu0 0.0
    %578 = vmatpush2.msra.mxu0 0.0
    %579 = vmatprep.subr.mxu0 0.0
    %580 = vmatpush2.msra.mxu0 0.0
    %581 = vmatprep.subr.mxu0 0.0
    %582 = vmatpush2.msra.mxu0 0.0
    %583 = vmatprep.subr.mxu0 0.0
    %584 = vmatpush2.msra.mxu0 0.0
    %585 = vmatprep.subr.mxu0 0.0
    %586 = vmatpush2.msra.mxu0 0.0
    %587 = vmatprep.subr.mxu0 0.0
    %588 = vmatpush2.msra.mxu0 0.0
    %589 = vmatprep.subr.mxu0 0.0
    %590 = vmatpush2.msra.mxu0 0.0
    %591 = vmatprep.mubr.f32.mxu0 0.0
    %592 = vmatmul.mubr.f32.gmra.mxu0 %v525
    %v593 = vpop.f32.mrf.mxu0
    %v594 = vadd.f32 0.0, %v593
    %v595 = vpop.f32.mrf.mxu0
    %596 = vdwg.mxu0
    %v598 = vsel %vm193, %v354, 0
    %600 = vmatprep.subr.mxu0 0.0
    %601 = vmatpush1.msra.mxu0 0.0
    %602 = vmatprep.subr.mxu0 0.0
    %603 = vmatpush1.msra.mxu0 0.0
    %604 = vmatprep.subr.mxu0 0.0
    %605 = vmatpush1.msra.mxu0 0.0
    %606 = vmatprep.subr.mxu0 0.0
    %607 = vmatpush1.msra.mxu0 0.0
    %608 = vmatprep.subr.mxu0 0.0
    %609 = vmatpush1.msra.mxu0 0.0
    %610 = vmatprep.subr.mxu0 0.0
    %611 = vmatpush1.msra.mxu0 0.0
    %612 = vmatprep.subr.mxu0 0.0
    %613 = vmatpush1.msra.mxu0 0.0
    %614 = vmatprep.subr.mxu0 0.0
    %615 = vmatpush1.msra.mxu0 0.0
    %616 = vmatprep.subr.mxu0 0.0
    %617 = vmatpush1.msra.mxu0 0.0
    %618 = vmatprep.subr.mxu0 0.0
    %619 = vmatpush1.msra.mxu0 0.0
    %620 = vmatprep.subr.mxu0 0.0
    %621 = vmatpush1.msra.mxu0 0.0
    %622 = vmatprep.subr.mxu0 0.0
    %623 = vmatpush1.msra.mxu0 0.0
    %624 = vmatprep.subr.mxu0 0.0
    %625 = vmatpush1.msra.mxu0 0.0
    %626 = vmatprep.subr.mxu0 0.0
    %627 = vmatpush1.msra.mxu0 0.0
    %628 = vmatprep.subr.mxu0 0.0
    %629 = vmatpush1.msra.mxu0 0.0
    %630 = vmatprep.subr.mxu0 0.0
    %631 = vmatpush1.msra.mxu0 %v65
    %632 = vmatprep.subr.mxu0 0.0
    %633 = vmatpush2.msra.mxu0 0.0
    %634 = vmatprep.subr.mxu0 0.0
    %635 = vmatpush2.msra.mxu0 0.0
    %636 = vmatprep.subr.mxu0 0.0
    %637 = vmatpush2.msra.mxu0 0.0
    %638 = vmatprep.subr.mxu0 0.0
    %639 = vmatpush2.msra.mxu0 0.0
    %640 = vmatprep.subr.mxu0 0.0
    %641 = vmatpush2.msra.mxu0 0.0
    %642 = vmatprep.subr.mxu0 0.0
    %643 = vmatpush2.msra.mxu0 0.0
    %644 = vmatprep.subr.mxu0 0.0
    %645 = vmatpush2.msra.mxu0 0.0
    %646 = vmatprep.subr.mxu0 0.0
    %647 = vmatpush2.msra.mxu0 0.0
    %648 = vmatprep.subr.mxu0 0.0
    %649 = vmatpush2.msra.mxu0 0.0
    %650 = vmatprep.subr.mxu0 0.0
    %651 = vmatpush2.msra.mxu0 0.0
    %652 = vmatprep.subr.mxu0 0.0
    %653 = vmatpush2.msra.mxu0 0.0
    %654 = vmatprep.subr.mxu0 0.0
    %655 = vmatpush2.msra.mxu0 0.0
    %656 = vmatprep.subr.mxu0 0.0
    %657 = vmatpush2.msra.mxu0 0.0
    %658 = vmatprep.subr.mxu0 0.0
    %659 = vmatpush2.msra.mxu0 0.0
    %660 = vmatprep.subr.mxu0 0.0
    %661 = vmatpush2.msra.mxu0 0.0
    %662 = vmatprep.subr.mxu0 0.0
    %663 = vmatpush2.msra.mxu0 0.0
    %664 = vmatprep.mubr.f32.mxu0 0.0
    %665 = vmatmul.mubr.f32.gmra.mxu0 %v598
    %v666 = vpop.f32.mrf.mxu0
    %v667 = vadd.f32 %v594, %v666
    %v668 = vpop.f32.mrf.mxu0
    %669 = vdwg.mxu0
    %670 = vrot.lane.b32.xlu0 %v182, 112
    %v671 = vpop.permute.xlu0 %670
    %672 = vrot.lane.b32.xlu0 %v182, 80
    %v673 = vpop.permute.xlu0 %672
    %v674 = vsel %vm193, %v671, 0
    %v676 = vsel %vm193, %v673, 0
    %678 = vmatprep.subr.mxu0 0.0
    %679 = vmatpush1.xpose.msra.mxu0 0.0
    %680 = vmatprep.subr.mxu0 0.0
    %681 = vmatpush1.xpose.msra.mxu0 0.0
    %682 = vmatprep.subr.mxu0 0.0
    %683 = vmatpush1.xpose.msra.mxu0 0.0
    %684 = vmatprep.subr.mxu0 0.0
    %685 = vmatpush1.xpose.msra.mxu0 0.0
    %686 = vmatprep.subr.mxu0 0.0
    %687 = vmatpush1.xpose.msra.mxu0 0.0
    %688 = vmatprep.subr.mxu0 0.0
    %689 = vmatpush1.xpose.msra.mxu0 0.0
    %690 = vmatprep.subr.mxu0 0.0
    %691 = vmatpush1.xpose.msra.mxu0 0.0
    %692 = vmatprep.subr.mxu0 0.0
    %693 = vmatpush1.xpose.msra.mxu0 0.0
    %694 = vmatprep.subr.mxu0 0.0
    %695 = vmatpush1.xpose.msra.mxu0 0.0
    %696 = vmatprep.subr.mxu0 0.0
    %697 = vmatpush1.xpose.msra.mxu0 0.0
    %698 = vmatprep.subr.mxu0 0.0
    %699 = vmatpush1.xpose.msra.mxu0 0.0
    %700 = vmatprep.subr.mxu0 0.0
    %701 = vmatpush1.xpose.msra.mxu0 0.0
    %702 = vmatprep.subr.mxu0 0.0
    %703 = vmatpush1.xpose.msra.mxu0 0.0
    %704 = vmatprep.subr.mxu0 0.0
    %705 = vmatpush1.xpose.msra.mxu0 0.0
    %706 = vmatprep.subr.mxu0 0.0
    %707 = vmatpush1.xpose.msra.mxu0 0.0
    %708 = vmatprep.subr.mxu0 0.0
    %709 = vmatpush1.xpose.msra.mxu0 %v676
    %710 = vmatprep.subr.mxu0 0.0
    %711 = vmatpush2.xpose.msra.mxu0 0.0
    %712 = vmatprep.subr.mxu0 0.0
    %713 = vmatpush2.xpose.msra.mxu0 0.0
    %714 = vmatprep.subr.mxu0 0.0
    %715 = vmatpush2.xpose.msra.mxu0 0.0
    %716 = vmatprep.subr.mxu0 0.0
    %717 = vmatpush2.xpose.msra.mxu0 0.0
    %718 = vmatprep.subr.mxu0 0.0
    %719 = vmatpush2.xpose.msra.mxu0 0.0
    %720 = vmatprep.subr.mxu0 0.0
    %721 = vmatpush2.xpose.msra.mxu0 0.0
    %722 = vmatprep.subr.mxu0 0.0
    %723 = vmatpush2.xpose.msra.mxu0 0.0
    %724 = vmatprep.subr.mxu0 0.0
    %725 = vmatpush2.xpose.msra.mxu0 0.0
    %726 = vmatprep.subr.mxu0 0.0
    %727 = vmatpush2.xpose.msra.mxu0 0.0
    %728 = vmatprep.subr.mxu0 0.0
    %729 = vmatpush2.xpose.msra.mxu0 0.0
    %730 = vmatprep.subr.mxu0 0.0
    %731 = vmatpush2.xpose.msra.mxu0 0.0
    %732 = vmatprep.subr.mxu0 0.0
    %733 = vmatpush2.xpose.msra.mxu0 0.0
    %734 = vmatprep.subr.mxu0 0.0
    %735 = vmatpush2.xpose.msra.mxu0 0.0
    %736 = vmatprep.subr.mxu0 0.0
    %737 = vmatpush2.xpose.msra.mxu0 0.0
    %738 = vmatprep.subr.mxu0 0.0
    %739 = vmatpush2.xpose.msra.mxu0 0.0
    %740 = vmatprep.subr.mxu0 0.0
    %741 = vmatpush2.xpose.msra.mxu0 0.0
    %742 = vmatprep.mubr.f32.mxu0 0.0
    %743 = vmatmul.mubr.f32.gmra.mxu0 %v674
    %v744 = vpop.f32.mrf.mxu0
    %v745 = vadd.f32 0.0, %v744
    %v746 = vpop.f32.mrf.mxu0
    %747 = vdwg.mxu0
    %v748 = vmul.f32 %v745, 0.35355338
    %v749 = vadd.f32 %v748, %v103
    %v750 = vsel %vm193, %v749, -inf
    %751 = vmax.xlane.f32.xlu0 %v750
    %v752 = vpop.xlane.xlu0 %751
    %v753 = vsub.f32 %v749, %v752
    %v754 = vmul.f32 %v753, 1.442695
    %v755 = vpow.pop %v754
    %v756 = vsel %vm193, %v755, 0.0
    %757 = vadd.xlane.f32.xlu0 %v756
    %v758 = vpop.xlane.xlu0 %757
    %v759 = vrcp.pop %v758
    %v760 = vmul.f32 %v755, %v759
    %761 = vrot.lane.b32.xlu0 %v182, 48
    %v762 = vpop.permute.xlu0 %761
    %v765 = vsel %vm193, %v760, 0
    %767 = vmatprep.subr.mxu0 0.0
    %768 = vmatpush1.msra.mxu0 0.0
    %769 = vmatprep.subr.mxu0 0.0
    %770 = vmatpush1.msra.mxu0 0.0
    %771 = vmatprep.subr.mxu0 0.0
    %772 = vmatpush1.msra.mxu0 0.0
    %773 = vmatprep.subr.mxu0 0.0
    %774 = vmatpush1.msra.mxu0 0.0
    %775 = vmatprep.subr.mxu0 0.0
    %776 = vmatpush1.msra.mxu0 0.0
    %777 = vmatprep.subr.mxu0 0.0
    %778 = vmatpush1.msra.mxu0 0.0
    %779 = vmatprep.subr.mxu0 0.0
    %780 = vmatpush1.msra.mxu0 0.0
    %781 = vmatprep.subr.mxu0 0.0
    %782 = vmatpush1.msra.mxu0 0.0
    %783 = vmatprep.subr.mxu0 0.0
    %784 = vmatpush1.msra.mxu0 0.0
    %785 = vmatprep.subr.mxu0 0.0
    %786 = vmatpush1.msra.mxu0 0.0
    %787 = vmatprep.subr.mxu0 0.0
    %788 = vmatpush1.msra.mxu0 0.0
    %789 = vmatprep.subr.mxu0 0.0
    %790 = vmatpush1.msra.mxu0 0.0
    %791 = vmatprep.subr.mxu0 0.0
    %792 = vmatpush1.msra.mxu0 0.0
    %793 = vmatprep.subr.mxu0 0.0
    %794 = vmatpush1.msra.mxu0 0.0
    %795 = vmatprep.subr.mxu0 0.0
    %796 = vmatpush1.msra.mxu0 0.0
    %797 = vmatprep.subr.mxu0 0.0
    %798 = vmatpush1.msra.mxu0 %v762
    %799 = vmatprep.subr.mxu0 0.0
    %800 = vmatpush2.msra.mxu0 0.0
    %801 = vmatprep.subr.mxu0 0.0
    %802 = vmatpush2.msra.mxu0 0.0
    %803 = vmatprep.subr.mxu0 0.0
    %804 = vmatpush2.msra.mxu0 0.0
    %805 = vmatprep.subr.mxu0 0.0
    %806 = vmatpush2.msra.mxu0 0.0
    %807 = vmatprep.subr.mxu0 0.0
    %808 = vmatpush2.msra.mxu0 0.0
    %809 = vmatprep.subr.mxu0 0.0
    %810 = vmatpush2.msra.mxu0 0.0
    %811 = vmatprep.subr.mxu0 0.0
    %812 = vmatpush2.msra.mxu0 0.0
    %813 = vmatprep.subr.mxu0 0.0
    %814 = vmatpush2.msra.mxu0 0.0
    %815 = vmatprep.subr.mxu0 0.0
    %816 = vmatpush2.msra.mxu0 0.0
    %817 = vmatprep.subr.mxu0 0.0
    %818 = vmatpush2.msra.mxu0 0.0
    %819 = vmatprep.subr.mxu0 0.0
    %820 = vmatpush2.msra.mxu0 0.0
    %821 = vmatprep.subr.mxu0 0.0
    %822 = vmatpush2.msra.mxu0 0.0
    %823 = vmatprep.subr.mxu0 0.0
    %824 = vmatpush2.msra.mxu0 0.0
    %825 = vmatprep.subr.mxu0 0.0
    %826 = vmatpush2.msra.mxu0 0.0
    %827 = vmatprep.subr.mxu0 0.0
    %828 = vmatpush2.msra.mxu0 0.0
    %829 = vmatprep.subr.mxu0 0.0
    %830 = vmatpush2.msra.mxu0 0.0
    %831 = vmatprep.mubr.f32.mxu0 0.0
    %832 = vmatmul.mubr.f32.gmra.mxu0 %v765
    %v833 = vpop.f32.mrf.mxu0
    %v834 = vadd.f32 0.0, %v833
    %v835 = vpop.f32.mrf.mxu0
    %836 = vdwg.mxu0
    %v838 = vsel %vm193, %v834, 0
    %840 = vmatprep.subr.mxu0 0.0
    %841 = vmatpush1.msra.mxu0 0.0
    %842 = vmatprep.subr.mxu0 0.0
    %843 = vmatpush1.msra.mxu0 0.0
    %844 = vmatprep.subr.mxu0 0.0
    %845 = vmatpush1.msra.mxu0 0.0
    %846 = vmatprep.subr.mxu0 0.0
    %847 = vmatpush1.msra.mxu0 0.0
    %848 = vmatprep.subr.mxu0 0.0
    %849 = vmatpush1.msra.mxu0 0.0
    %850 = vmatprep.subr.mxu0 0.0
    %851 = vmatpush1.msra.mxu0 0.0
    %852 = vmatprep.subr.mxu0 0.0
    %853 = vmatpush1.msra.mxu0 0.0
    %854 = vmatprep.subr.mxu0 0.0
    %855 = vmatpush1.msra.mxu0 0.0
    %856 = vmatprep.subr.mxu0 0.0
    %857 = vmatpush1.msra.mxu0 0.0
    %858 = vmatprep.subr.mxu0 0.0
    %859 = vmatpush1.msra.mxu0 0.0
    %860 = vmatprep.subr.mxu0 0.0
    %861 = vmatpush1.msra.mxu0 0.0
    %862 = vmatprep.subr.mxu0 0.0
    %863 = vmatpush1.msra.mxu0 0.0
    %864 = vmatprep.subr.mxu0 0.0
    %865 = vmatpush1.msra.mxu0 0.0
    %866 = vmatprep.subr.mxu0 0.0
    %867 = vmatpush1.msra.mxu0 0.0
    %868 = vmatprep.subr.mxu0 0.0
    %869 = vmatpush1.msra.mxu0 0.0
    %870 = vmatprep.subr.mxu0 0.0
    %871 = vmatpush1.msra.mxu0 %v67
    %872 = vmatprep.subr.mxu0 0.0
    %873 = vmatpush2.msra.mxu0 0.0
    %874 = vmatprep.subr.mxu0 0.0
    %875 = vmatpush2.msra.mxu0 0.0
    %876 = vmatprep.subr.mxu0 0.0
    %877 = vmatpush2.msra.mxu0 0.0
    %878 = vmatprep.subr.mxu0 0.0
    %879 = vmatpush2.msra.mxu0 0.0
    %880 = vmatprep.subr.mxu0 0.0
    %881 = vmatpush2.msra.mxu0 0.0
    %882 = vmatprep.subr.mxu0 0.0
    %883 = vmatpush2.msra.mxu0 0.0
    %884 = vmatprep.subr.mxu0 0.0
    %885 = vmatpush2.msra.mxu0 0.0
    %886 = vmatprep.subr.mxu0 0.0
    %887 = vmatpush2.msra.mxu0 0.0
    %888 = vmatprep.subr.mxu0 0.0
    %889 = vmatpush2.msra.mxu0 0.0
    %890 = vmatprep.subr.mxu0 0.0
    %891 = vmatpush2.msra.mxu0 0.0
    %892 = vmatprep.subr.mxu0 0.0
    %893 = vmatpush2.msra.mxu0 0.0
    %894 = vmatprep.subr.mxu0 0.0
    %895 = vmatpush2.msra.mxu0 0.0
    %896 = vmatprep.subr.mxu0 0.0
    %897 = vmatpush2.msra.mxu0 0.0
    %898 = vmatprep.subr.mxu0 0.0
    %899 = vmatpush2.msra.mxu0 0.0
    %900 = vmatprep.subr.mxu0 0.0
    %901 = vmatpush2.msra.mxu0 0.0
    %902 = vmatprep.subr.mxu0 0.0
    %903 = vmatpush2.msra.mxu0 0.0
    %904 = vmatprep.mubr.f32.mxu0 0.0
    %905 = vmatmul.mubr.f32.gmra.mxu0 %v838
    %v906 = vpop.f32.mrf.mxu0
    %v907 = vadd.f32 0.0, %v906
    %v908 = vpop.f32.mrf.mxu0
    %909 = vdwg.mxu0
    %v910 = vadd.f32 %v667, %v907
    %911 = vrot.lane.b32.xlu0 %v182, 104
    %v912 = vpop.permute.xlu0 %911
    %913 = vrot.lane.b32.xlu0 %v182, 72
    %v914 = vpop.permute.xlu0 %913
    %v915 = vsel %vm193, %v912, 0
    %v917 = vsel %vm193, %v914, 0
    %919 = vmatprep.subr.mxu0 0.0
    %920 = vmatpush1.xpose.msra.mxu0 0.0
    %921 = vmatprep.subr.mxu0 0.0
    %922 = vmatpush1.xpose.msra.mxu0 0.0
    %923 = vmatprep.subr.mxu0 0.0
    %924 = vmatpush1.xpose.msra.mxu0 0.0
    %925 = vmatprep.subr.mxu0 0.0
    %926 = vmatpush1.xpose.msra.mxu0 0.0
    %927 = vmatprep.subr.mxu0 0.0
    %928 = vmatpush1.xpose.msra.mxu0 0.0
    %929 = vmatprep.subr.mxu0 0.0
    %930 = vmatpush1.xpose.msra.mxu0 0.0
    %931 = vmatprep.subr.mxu0 0.0
    %932 = vmatpush1.xpose.msra.mxu0 0.0
    %933 = vmatprep.subr.mxu0 0.0
    %934 = vmatpush1.xpose.msra.mxu0 0.0
    %935 = vmatprep.subr.mxu0 0.0
    %936 = vmatpush1.xpose.msra.mxu0 0.0
    %937 = vmatprep.subr.mxu0 0.0
    %938 = vmatpush1.xpose.msra.mxu0 0.0
    %939 = vmatprep.subr.mxu0 0.0
    %940 = vmatpush1.xpose.msra.mxu0 0.0
    %941 = vmatprep.subr.mxu0 0.0
    %942 = vmatpush1.xpose.msra.mxu0 0.0
    %943 = vmatprep.subr.mxu0 0.0
    %944 = vmatpush1.xpose.msra.mxu0 0.0
    %945 = vmatprep.subr.mxu0 0.0
    %946 = vmatpush1.xpose.msra.mxu0 0.0
    %947 = vmatprep.subr.mxu0 0.0
    %948 = vmatpush1.xpose.msra.mxu0 0.0
    %949 = vmatprep.subr.mxu0 0.0
    %950 = vmatpush1.xpose.msra.mxu0 %v917
    %951 = vmatprep.subr.mxu0 0.0
    %952 = vmatpush2.xpose.msra.mxu0 0.0
    %953 = vmatprep.subr.mxu0 0.0
    %954 = vmatpush2.xpose.msra.mxu0 0.0
    %955 = vmatprep.subr.mxu0 0.0
    %956 = vmatpush2.xpose.msra.mxu0 0.0
    %957 = vmatprep.subr.mxu0 0.0
    %958 = vmatpush2.xpose.msra.mxu0 0.0
    %959 = vmatprep.subr.mxu0 0.0
    %960 = vmatpush2.xpose.msra.mxu0 0.0
    %961 = vmatprep.subr.mxu0 0.0
    %962 = vmatpush2.xpose.msra.mxu0 0.0
    %963 = vmatprep.subr.mxu0 0.0
    %964 = vmatpush2.xpose.msra.mxu0 0.0
    %965 = vmatprep.subr.mxu0 0.0
    %966 = vmatpush2.xpose.msra.mxu0 0.0
    %967 = vmatprep.subr.mxu0 0.0
    %968 = vmatpush2.xpose.msra.mxu0 0.0
    %969 = vmatprep.subr.mxu0 0.0
    %970 = vmatpush2.xpose.msra.mxu0 0.0
    %971 = vmatprep.subr.mxu0 0.0
    %972 = vmatpush2.xpose.msra.mxu0 0.0
    %973 = vmatprep.subr.mxu0 0.0
    %974 = vmatpush2.xpose.msra.mxu0 0.0
    %975 = vmatprep.subr.mxu0 0.0
    %976 = vmatpush2.xpose.msra.mxu0 0.0
    %977 = vmatprep.subr.mxu0 0.0
    %978 = vmatpush2.xpose.msra.mxu0 0.0
    %979 = vmatprep.subr.mxu0 0.0
    %980 = vmatpush2.xpose.msra.mxu0 0.0
    %981 = vmatprep.subr.mxu0 0.0
    %982 = vmatpush2.xpose.msra.mxu0 0.0
    %983 = vmatprep.mubr.f32.mxu0 0.0
    %984 = vmatmul.mubr.f32.gmra.mxu0 %v915
    %v985 = vpop.f32.mrf.mxu0
    %v986 = vadd.f32 0.0, %v985
    %v987 = vpop.f32.mrf.mxu0
    %988 = vdwg.mxu0
    %v989 = vmul.f32 %v986, 0.35355338
    %v990 = vadd.f32 %v989, %v103
    %v991 = vsel %vm193, %v990, -inf
    %992 = vmax.xlane.f32.xlu0 %v991
    %v993 = vpop.xlane.xlu0 %992
    %v994 = vsub.f32 %v990, %v993
    %v995 = vmul.f32 %v994, 1.442695
    %v996 = vpow.pop %v995
    %v997 = vsel %vm193, %v996, 0.0
    %998 = vadd.xlane.f32.xlu0 %v997
    %v999 = vpop.xlane.xlu0 %998
    %v1000 = vrcp.pop %v999
    %v1001 = vmul.f32 %v996, %v1000
    %1002 = vrot.lane.b32.xlu0 %v182, 40
    %v1003 = vpop.permute.xlu0 %1002
    %v1006 = vsel %vm193, %v1001, 0
    %1008 = vmatprep.subr.mxu0 0.0
    %1009 = vmatpush1.msra.mxu0 0.0
    %1010 = vmatprep.subr.mxu0 0.0
    %1011 = vmatpush1.msra.mxu0 0.0
    %1012 = vmatprep.subr.mxu0 0.0
    %1013 = vmatpush1.msra.mxu0 0.0
    %1014 = vmatprep.subr.mxu0 0.0
    %1015 = vmatpush1.msra.mxu0 0.0
    %1016 = vmatprep.subr.mxu0 0.0
    %1017 = vmatpush1.msra.mxu0 0.0
    %1018 = vmatprep.subr.mxu0 0.0
    %1019 = vmatpush1.msra.mxu0 0.0
    %1020 = vmatprep.subr.mxu0 0.0
    %1021 = vmatpush1.msra.mxu0 0.0
    %1022 = vmatprep.subr.mxu0 0.0
    %1023 = vmatpush1.msra.mxu0 0.0
    %1024 = vmatprep.subr.mxu0 0.0
    %1025 = vmatpush1.msra.mxu0 0.0
    %1026 = vmatprep.subr.mxu0 0.0
    %1027 = vmatpush1.msra.mxu0 0.0
    %1028 = vmatprep.subr.mxu0 0.0
    %1029 = vmatpush1.msra.mxu0 0.0
    %1030 = vmatprep.subr.mxu0 0.0
    %1031 = vmatpush1.msra.mxu0 0.0
    %1032 = vmatprep.subr.mxu0 0.0
    %1033 = vmatpush1.msra.mxu0 0.0
    %1034 = vmatprep.subr.mxu0 0.0
    %1035 = vmatpush1.msra.mxu0 0.0
    %1036 = vmatprep.subr.mxu0 0.0
    %1037 = vmatpush1.msra.mxu0 0.0
    %1038 = vmatprep.subr.mxu0 0.0
    %1039 = vmatpush1.msra.mxu0 %v1003
    %1040 = vmatprep.subr.mxu0 0.0
    %1041 = vmatpush2.msra.mxu0 0.0
    %1042 = vmatprep.subr.mxu0 0.0
    %1043 = vmatpush2.msra.mxu0 0.0
    %1044 = vmatprep.subr.mxu0 0.0
    %1045 = vmatpush2.msra.mxu0 0.0
    %1046 = vmatprep.subr.mxu0 0.0
    %1047 = vmatpush2.msra.mxu0 0.0
    %1048 = vmatprep.subr.mxu0 0.0
    %1049 = vmatpush2.msra.mxu0 0.0
    %1050 = vmatprep.subr.mxu0 0.0
    %1051 = vmatpush2.msra.mxu0 0.0
    %1052 = vmatprep.subr.mxu0 0.0
    %1053 = vmatpush2.msra.mxu0 0.0
    %1054 = vmatprep.subr.mxu0 0.0
    %1055 = vmatpush2.msra.mxu0 0.0
    %1056 = vmatprep.subr.mxu0 0.0
    %1057 = vmatpush2.msra.mxu0 0.0
    %1058 = vmatprep.subr.mxu0 0.0
    %1059 = vmatpush2.msra.mxu0 0.0
    %1060 = vmatprep.subr.mxu0 0.0
    %1061 = vmatpush2.msra.mxu0 0.0
    %1062 = vmatprep.subr.mxu0 0.0
    %1063 = vmatpush2.msra.mxu0 0.0
    %1064 = vmatprep.subr.mxu0 0.0
    %1065 = vmatpush2.msra.mxu0 0.0
    %1066 = vmatprep.subr.mxu0 0.0
    %1067 = vmatpush2.msra.mxu0 0.0
    %1068 = vmatprep.subr.mxu0 0.0
    %1069 = vmatpush2.msra.mxu0 0.0
    %1070 = vmatprep.subr.mxu0 0.0
    %1071 = vmatpush2.msra.mxu0 0.0
    %1072 = vmatprep.mubr.f32.mxu0 0.0
    %1073 = vmatmul.mubr.f32.gmra.mxu0 %v1006
    %v1074 = vpop.f32.mrf.mxu0
    %v1075 = vadd.f32 0.0, %v1074
    %v1076 = vpop.f32.mrf.mxu0
    %1077 = vdwg.mxu0
    %v1079 = vsel %vm193, %v1075, 0
    %1081 = vmatprep.subr.mxu0 0.0
    %1082 = vmatpush1.msra.mxu0 0.0
    %1083 = vmatprep.subr.mxu0 0.0
    %1084 = vmatpush1.msra.mxu0 0.0
    %1085 = vmatprep.subr.mxu0 0.0
    %1086 = vmatpush1.msra.mxu0 0.0
    %1087 = vmatprep.subr.mxu0 0.0
    %1088 = vmatpush1.msra.mxu0 0.0
    %1089 = vmatprep.subr.mxu0 0.0
    %1090 = vmatpush1.msra.mxu0 0.0
    %1091 = vmatprep.subr.mxu0 0.0
    %1092 = vmatpush1.msra.mxu0 0.0
    %1093 = vmatprep.subr.mxu0 0.0
    %1094 = vmatpush1.msra.mxu0 0.0
    %1095 = vmatprep.subr.mxu0 0.0
    %1096 = vmatpush1.msra.mxu0 0.0
    %1097 = vmatprep.subr.mxu0 0.0
    %1098 = vmatpush1.msra.mxu0 0.0
    %1099 = vmatprep.subr.mxu0 0.0
    %1100 = vmatpush1.msra.mxu0 0.0
    %1101 = vmatprep.subr.mxu0 0.0
    %1102 = vmatpush1.msra.mxu0 0.0
    %1103 = vmatprep.subr.mxu0 0.0
    %1104 = vmatpush1.msra.mxu0 0.0
    %1105 = vmatprep.subr.mxu0 0.0
    %1106 = vmatpush1.msra.mxu0 0.0
    %1107 = vmatprep.subr.mxu0 0.0
    %1108 = vmatpush1.msra.mxu0 0.0
    %1109 = vmatprep.subr.mxu0 0.0
    %1110 = vmatpush1.msra.mxu0 0.0
    %1111 = vmatprep.subr.mxu0 0.0
    %1112 = vmatpush1.msra.mxu0 %v68
    %1113 = vmatprep.subr.mxu0 0.0
    %1114 = vmatpush2.msra.mxu0 0.0
    %1115 = vmatprep.subr.mxu0 0.0
    %1116 = vmatpush2.msra.mxu0 0.0
    %1117 = vmatprep.subr.mxu0 0.0
    %1118 = vmatpush2.msra.mxu0 0.0
    %1119 = vmatprep.subr.mxu0 0.0
    %1120 = vmatpush2.msra.mxu0 0.0
    %1121 = vmatprep.subr.mxu0 0.0
    %1122 = vmatpush2.msra.mxu0 0.0
    %1123 = vmatprep.subr.mxu0 0.0
    %1124 = vmatpush2.msra.mxu0 0.0
    %1125 = vmatprep.subr.mxu0 0.0
    %1126 = vmatpush2.msra.mxu0 0.0
    %1127 = vmatprep.subr.mxu0 0.0
    %1128 = vmatpush2.msra.mxu0 0.0
    %1129 = vmatprep.subr.mxu0 0.0
    %1130 = vmatpush2.msra.mxu0 0.0
    %1131 = vmatprep.subr.mxu0 0.0
    %1132 = vmatpush2.msra.mxu0 0.0
    %1133 = vmatprep.subr.mxu0 0.0
    %1134 = vmatpush2.msra.mxu0 0.0
    %1135 = vmatprep.subr.mxu0 0.0
    %1136 = vmatpush2.msra.mxu0 0.0
    %1137 = vmatprep.subr.mxu0 0.0
    %1138 = vmatpush2.msra.mxu0 0.0
    %1139 = vmatprep.subr.mxu0 0.0
    %1140 = vmatpush2.msra.mxu0 0.0
    %1141 = vmatprep.subr.mxu0 0.0
    %1142 = vmatpush2.msra.mxu0 0.0
    %1143 = vmatprep.subr.mxu0 0.0
    %1144 = vmatpush2.msra.mxu0 0.0
    %1145 = vmatprep.mubr.f32.mxu0 0.0
    %1146 = vmatmul.mubr.f32.gmra.mxu0 %v1079
    %v1147 = vpop.f32.mrf.mxu0
    %v1148 = vadd.f32 0.0, %v1147
    %v1149 = vpop.f32.mrf.mxu0
    %1150 = vdwg.mxu0
    %v1151 = vadd.f32 %v910, %v1148
    %1153 = vrot.lane.b32.xlu0 %v187, 96
    %v1154 = vpop.permute.xlu0 %1153
    %v1155 = vsel %vm193, %v187, 0
    %v1157 = vsel %vm193, %v1154, 0
    %1159 = vmatprep.subr.mxu0 0.0
    %1160 = vmatpush1.xpose.msra.mxu0 0.0
    %1161 = vmatprep.subr.mxu0 0.0
    %1162 = vmatpush1.xpose.msra.mxu0 0.0
    %1163 = vmatprep.subr.mxu0 0.0
    %1164 = vmatpush1.xpose.msra.mxu0 0.0
    %1165 = vmatprep.subr.mxu0 0.0
    %1166 = vmatpush1.xpose.msra.mxu0 0.0
    %1167 = vmatprep.subr.mxu0 0.0
    %1168 = vmatpush1.xpose.msra.mxu0 0.0
    %1169 = vmatprep.subr.mxu0 0.0
    %1170 = vmatpush1.xpose.msra.mxu0 0.0
    %1171 = vmatprep.subr.mxu0 0.0
    %1172 = vmatpush1.xpose.msra.mxu0 0.0
    %1173 = vmatprep.subr.mxu0 0.0
    %1174 = vmatpush1.xpose.msra.mxu0 0.0
    %1175 = vmatprep.subr.mxu0 0.0
    %1176 = vmatpush1.xpose.msra.mxu0 0.0
    %1177 = vmatprep.subr.mxu0 0.0
    %1178 = vmatpush1.xpose.msra.mxu0 0.0
    %1179 = vmatprep.subr.mxu0 0.0
    %1180 = vmatpush1.xpose.msra.mxu0 0.0
    %1181 = vmatprep.subr.mxu0 0.0
    %1182 = vmatpush1.xpose.msra.mxu0 0.0
    %1183 = vmatprep.subr.mxu0 0.0
    %1184 = vmatpush1.xpose.msra.mxu0 0.0
    %1185 = vmatprep.subr.mxu0 0.0
    %1186 = vmatpush1.xpose.msra.mxu0 0.0
    %1187 = vmatprep.subr.mxu0 0.0
    %1188 = vmatpush1.xpose.msra.mxu0 0.0
    %1189 = vmatprep.subr.mxu0 0.0
    %1190 = vmatpush1.xpose.msra.mxu0 %v1157
    %1191 = vmatprep.subr.mxu0 0.0
    %1192 = vmatpush2.xpose.msra.mxu0 0.0
    %1193 = vmatprep.subr.mxu0 0.0
    %1194 = vmatpush2.xpose.msra.mxu0 0.0
    %1195 = vmatprep.subr.mxu0 0.0
    %1196 = vmatpush2.xpose.msra.mxu0 0.0
    %1197 = vmatprep.subr.mxu0 0.0
    %1198 = vmatpush2.xpose.msra.mxu0 0.0
    %1199 = vmatprep.subr.mxu0 0.0
    %1200 = vmatpush2.xpose.msra.mxu0 0.0
    %1201 = vmatprep.subr.mxu0 0.0
    %1202 = vmatpush2.xpose.msra.mxu0 0.0
    %1203 = vmatprep.subr.mxu0 0.0
    %1204 = vmatpush2.xpose.msra.mxu0 0.0
    %1205 = vmatprep.subr.mxu0 0.0
    %1206 = vmatpush2.xpose.msra.mxu0 0.0
    %1207 = vmatprep.subr.mxu0 0.0
    %1208 = vmatpush2.xpose.msra.mxu0 0.0
    %1209 = vmatprep.subr.mxu0 0.0
    %1210 = vmatpush2.xpose.msra.mxu0 0.0
    %1211 = vmatprep.subr.mxu0 0.0
    %1212 = vmatpush2.xpose.msra.mxu0 0.0
    %1213 = vmatprep.subr.mxu0 0.0
    %1214 = vmatpush2.xpose.msra.mxu0 0.0
    %1215 = vmatprep.subr.mxu0 0.0
    %1216 = vmatpush2.xpose.msra.mxu0 0.0
    %1217 = vmatprep.subr.mxu0 0.0
    %1218 = vmatpush2.xpose.msra.mxu0 0.0
    %1219 = vmatprep.subr.mxu0 0.0
    %1220 = vmatpush2.xpose.msra.mxu0 0.0
    %1221 = vmatprep.subr.mxu0 0.0
    %1222 = vmatpush2.xpose.msra.mxu0 0.0
    %1223 = vmatprep.mubr.f32.mxu0 0.0
    %1224 = vmatmul.mubr.f32.gmra.mxu0 %v1155
    %v1225 = vpop.f32.mrf.mxu0
    %v1226 = vadd.f32 0.0, %v1225
    %v1227 = vpop.f32.mrf.mxu0
    %1228 = vdwg.mxu0
    %v1229 = vmul.f32 %v1226, 0.35355338
    %v1230 = vadd.f32 %v1229, %v103
    %v1231 = vsel %vm193, %v1230, -inf
    %1232 = vmax.xlane.f32.xlu0 %v1231
    %v1233 = vpop.xlane.xlu0 %1232
    %v1234 = vsub.f32 %v1230, %v1233
    %v1235 = vmul.f32 %v1234, 1.442695
    %v1236 = vpow.pop %v1235
    %v1237 = vsel %vm193, %v1236, 0.0
    %1238 = vadd.xlane.f32.xlu0 %v1237
    %v1239 = vpop.xlane.xlu0 %1238
    %v1240 = vrcp.pop %v1239
    %v1241 = vmul.f32 %v1236, %v1240
    %1242 = vrot.lane.b32.xlu0 %v187, 64
    %v1243 = vpop.permute.xlu0 %1242
    %v1246 = vsel %vm193, %v1241, 0
    %1248 = vmatprep.subr.mxu0 0.0
    %1249 = vmatpush1.msra.mxu0 0.0
    %1250 = vmatprep.subr.mxu0 0.0
    %1251 = vmatpush1.msra.mxu0 0.0
    %1252 = vmatprep.subr.mxu0 0.0
    %1253 = vmatpush1.msra.mxu0 0.0
    %1254 = vmatprep.subr.mxu0 0.0
    %1255 = vmatpush1.msra.mxu0 0.0
    %1256 = vmatprep.subr.mxu0 0.0
    %1257 = vmatpush1.msra.mxu0 0.0
    %1258 = vmatprep.subr.mxu0 0.0
    %1259 = vmatpush1.msra.mxu0 0.0
    %1260 = vmatprep.subr.mxu0 0.0
    %1261 = vmatpush1.msra.mxu0 0.0
    %1262 = vmatprep.subr.mxu0 0.0
    %1263 = vmatpush1.msra.mxu0 0.0
    %1264 = vmatprep.subr.mxu0 0.0
    %1265 = vmatpush1.msra.mxu0 0.0
    %1266 = vmatprep.subr.mxu0 0.0
    %1267 = vmatpush1.msra.mxu0 0.0
    %1268 = vmatprep.subr.mxu0 0.0
    %1269 = vmatpush1.msra.mxu0 0.0
    %1270 = vmatprep.subr.mxu0 0.0
    %1271 = vmatpush1.msra.mxu0 0.0
    %1272 = vmatprep.subr.mxu0 0.0
    %1273 = vmatpush1.msra.mxu0 0.0
    %1274 = vmatprep.subr.mxu0 0.0
    %1275 = vmatpush1.msra.mxu0 0.0
    %1276 = vmatprep.subr.mxu0 0.0
    %1277 = vmatpush1.msra.mxu0 0.0
    %1278 = vmatprep.subr.mxu0 0.0
    %1279 = vmatpush1.msra.mxu0 %v1243
    %1280 = vmatprep.subr.mxu0 0.0
    %1281 = vmatpush2.msra.mxu0 0.0
    %1282 = vmatprep.subr.mxu0 0.0
    %1283 = vmatpush2.msra.mxu0 0.0
    %1284 = vmatprep.subr.mxu0 0.0
    %1285 = vmatpush2.msra.mxu0 0.0
    %1286 = vmatprep.subr.mxu0 0.0
    %1287 = vmatpush2.msra.mxu0 0.0
    %1288 = vmatprep.subr.mxu0 0.0
    %1289 = vmatpush2.msra.mxu0 0.0
    %1290 = vmatprep.subr.mxu0 0.0
    %1291 = vmatpush2.msra.mxu0 0.0
    %1292 = vmatprep.subr.mxu0 0.0
    %1293 = vmatpush2.msra.mxu0 0.0
    %1294 = vmatprep.subr.mxu0 0.0
    %1295 = vmatpush2.msra.mxu0 0.0
    %1296 = vmatprep.subr.mxu0 0.0
    %1297 = vmatpush2.msra.mxu0 0.0
    %1298 = vmatprep.subr.mxu0 0.0
    %1299 = vmatpush2.msra.mxu0 0.0
    %1300 = vmatprep.subr.mxu0 0.0
    %1301 = vmatpush2.msra.mxu0 0.0
    %1302 = vmatprep.subr.mxu0 0.0
    %1303 = vmatpush2.msra.mxu0 0.0
    %1304 = vmatprep.subr.mxu0 0.0
    %1305 = vmatpush2.msra.mxu0 0.0
    %1306 = vmatprep.subr.mxu0 0.0
    %1307 = vmatpush2.msra.mxu0 0.0
    %1308 = vmatprep.subr.mxu0 0.0
    %1309 = vmatpush2.msra.mxu0 0.0
    %1310 = vmatprep.subr.mxu0 0.0
    %1311 = vmatpush2.msra.mxu0 0.0
    %1312 = vmatprep.mubr.f32.mxu0 0.0
    %1313 = vmatmul.mubr.f32.gmra.mxu0 %v1246
    %v1314 = vpop.f32.mrf.mxu0
    %v1315 = vadd.f32 0.0, %v1314
    %v1316 = vpop.f32.mrf.mxu0
    %1317 = vdwg.mxu0
    %1318 = vrot.lane.b32.xlu0 %v187, 120
    %v1319 = vpop.permute.xlu0 %1318
    %1320 = vrot.lane.b32.xlu0 %v187, 88
    %v1321 = vpop.permute.xlu0 %1320
    %v1322 = vsel %vm193, %v1319, 0
    %v1324 = vsel %vm193, %v1321, 0
    %1326 = vmatprep.subr.mxu0 0.0
    %1327 = vmatpush1.xpose.msra.mxu0 0.0
    %1328 = vmatprep.subr.mxu0 0.0
    %1329 = vmatpush1.xpose.msra.mxu0 0.0
    %1330 = vmatprep.subr.mxu0 0.0
    %1331 = vmatpush1.xpose.msra.mxu0 0.0
    %1332 = vmatprep.subr.mxu0 0.0
    %1333 = vmatpush1.xpose.msra.mxu0 0.0
    %1334 = vmatprep.subr.mxu0 0.0
    %1335 = vmatpush1.xpose.msra.mxu0 0.0
    %1336 = vmatprep.subr.mxu0 0.0
    %1337 = vmatpush1.xpose.msra.mxu0 0.0
    %1338 = vmatprep.subr.mxu0 0.0
    %1339 = vmatpush1.xpose.msra.mxu0 0.0
    %1340 = vmatprep.subr.mxu0 0.0
    %1341 = vmatpush1.xpose.msra.mxu0 0.0
    %1342 = vmatprep.subr.mxu0 0.0
    %1343 = vmatpush1.xpose.msra.mxu0 0.0
    %1344 = vmatprep.subr.mxu0 0.0
    %1345 = vmatpush1.xpose.msra.mxu0 0.0
    %1346 = vmatprep.subr.mxu0 0.0
    %1347 = vmatpush1.xpose.msra.mxu0 0.0
    %1348 = vmatprep.subr.mxu0 0.0
    %1349 = vmatpush1.xpose.msra.mxu0 0.0
    %1350 = vmatprep.subr.mxu0 0.0
    %1351 = vmatpush1.xpose.msra.mxu0 0.0
    %1352 = vmatprep.subr.mxu0 0.0
    %1353 = vmatpush1.xpose.msra.mxu0 0.0
    %1354 = vmatprep.subr.mxu0 0.0
    %1355 = vmatpush1.xpose.msra.mxu0 0.0
    %1356 = vmatprep.subr.mxu0 0.0
    %1357 = vmatpush1.xpose.msra.mxu0 %v1324
    %1358 = vmatprep.subr.mxu0 0.0
    %1359 = vmatpush2.xpose.msra.mxu0 0.0
    %1360 = vmatprep.subr.mxu0 0.0
    %1361 = vmatpush2.xpose.msra.mxu0 0.0
    %1362 = vmatprep.subr.mxu0 0.0
    %1363 = vmatpush2.xpose.msra.mxu0 0.0
    %1364 = vmatprep.subr.mxu0 0.0
    %1365 = vmatpush2.xpose.msra.mxu0 0.0
    %1366 = vmatprep.subr.mxu0 0.0
    %1367 = vmatpush2.xpose.msra.mxu0 0.0
    %1368 = vmatprep.subr.mxu0 0.0
    %1369 = vmatpush2.xpose.msra.mxu0 0.0
    %1370 = vmatprep.subr.mxu0 0.0
    %1371 = vmatpush2.xpose.msra.mxu0 0.0
    %1372 = vmatprep.subr.mxu0 0.0
    %1373 = vmatpush2.xpose.msra.mxu0 0.0
    %1374 = vmatprep.subr.mxu0 0.0
    %1375 = vmatpush2.xpose.msra.mxu0 0.0
    %1376 = vmatprep.subr.mxu0 0.0
    %1377 = vmatpush2.xpose.msra.mxu0 0.0
    %1378 = vmatprep.subr.mxu0 0.0
    %1379 = vmatpush2.xpose.msra.mxu0 0.0
    %1380 = vmatprep.subr.mxu0 0.0
    %1381 = vmatpush2.xpose.msra.mxu0 0.0
    %1382 = vmatprep.subr.mxu0 0.0
    %1383 = vmatpush2.xpose.msra.mxu0 0.0
    %1384 = vmatprep.subr.mxu0 0.0
    %1385 = vmatpush2.xpose.msra.mxu0 0.0
    %1386 = vmatprep.subr.mxu0 0.0
    %1387 = vmatpush2.xpose.msra.mxu0 0.0
    %1388 = vmatprep.subr.mxu0 0.0
    %1389 = vmatpush2.xpose.msra.mxu0 0.0
    %1390 = vmatprep.mubr.f32.mxu0 0.0
    %1391 = vmatmul.mubr.f32.gmra.mxu0 %v1322
    %v1392 = vpop.f32.mrf.mxu0
    %v1393 = vadd.f32 0.0, %v1392
    %v1394 = vpop.f32.mrf.mxu0
    %1395 = vdwg.mxu0
    %v1396 = vmul.f32 %v1393, 0.35355338
    %v1397 = vadd.f32 %v1396, %v103
    %v1398 = vsel %vm193, %v1397, -inf
    %1399 = vmax.xlane.f32.xlu0 %v1398
    %v1400 = vpop.xlane.xlu0 %1399
    %v1401 = vsub.f32 %v1397, %v1400
    %v1402 = vmul.f32 %v1401, 1.442695
    %v1403 = vpow.pop %v1402
    %v1404 = vsel %vm193, %v1403, 0.0
    %1405 = vadd.xlane.f32.xlu0 %v1404
    %v1406 = vpop.xlane.xlu0 %1405
    %v1407 = vrcp.pop %v1406
    %v1408 = vmul.f32 %v1403, %v1407
    %1409 = vrot.lane.b32.xlu0 %v187, 56
    %v1410 = vpop.permute.xlu0 %1409
    %v1413 = vsel %vm193, %v1408, 0
    %1415 = vmatprep.subr.mxu0 0.0
    %1416 = vmatpush1.msra.mxu0 0.0
    %1417 = vmatprep.subr.mxu0 0.0
    %1418 = vmatpush1.msra.mxu0 0.0
    %1419 = vmatprep.subr.mxu0 0.0
    %1420 = vmatpush1.msra.mxu0 0.0
    %1421 = vmatprep.subr.mxu0 0.0
    %1422 = vmatpush1.msra.mxu0 0.0
    %1423 = vmatprep.subr.mxu0 0.0
    %1424 = vmatpush1.msra.mxu0 0.0
    %1425 = vmatprep.subr.mxu0 0.0
    %1426 = vmatpush1.msra.mxu0 0.0
    %1427 = vmatprep.subr.mxu0 0.0
    %1428 = vmatpush1.msra.mxu0 0.0
    %1429 = vmatprep.subr.mxu0 0.0
    %1430 = vmatpush1.msra.mxu0 0.0
    %1431 = vmatprep.subr.mxu0 0.0
    %1432 = vmatpush1.msra.mxu0 0.0
    %1433 = vmatprep.subr.mxu0 0.0
    %1434 = vmatpush1.msra.mxu0 0.0
    %1435 = vmatprep.subr.mxu0 0.0
    %1436 = vmatpush1.msra.mxu0 0.0
    %1437 = vmatprep.subr.mxu0 0.0
    %1438 = vmatpush1.msra.mxu0 0.0
    %1439 = vmatprep.subr.mxu0 0.0
    %1440 = vmatpush1.msra.mxu0 0.0
    %1441 = vmatprep.subr.mxu0 0.0
    %1442 = vmatpush1.msra.mxu0 0.0
    %1443 = vmatprep.subr.mxu0 0.0
    %1444 = vmatpush1.msra.mxu0 0.0
    %1445 = vmatprep.subr.mxu0 0.0
    %1446 = vmatpush1.msra.mxu0 %v1410
    %1447 = vmatprep.subr.mxu0 0.0
    %1448 = vmatpush2.msra.mxu0 0.0
    %1449 = vmatprep.subr.mxu0 0.0
    %1450 = vmatpush2.msra.mxu0 0.0
    %1451 = vmatprep.subr.mxu0 0.0
    %1452 = vmatpush2.msra.mxu0 0.0
    %1453 = vmatprep.subr.mxu0 0.0
    %1454 = vmatpush2.msra.mxu0 0.0
    %1455 = vmatprep.subr.mxu0 0.0
    %1456 = vmatpush2.msra.mxu0 0.0
    %1457 = vmatprep.subr.mxu0 0.0
    %1458 = vmatpush2.msra.mxu0 0.0
    %1459 = vmatprep.subr.mxu0 0.0
    %1460 = vmatpush2.msra.mxu0 0.0
    %1461 = vmatprep.subr.mxu0 0.0
    %1462 = vmatpush2.msra.mxu0 0.0
    %1463 = vmatprep.subr.mxu0 0.0
    %1464 = vmatpush2.msra.mxu0 0.0
    %1465 = vmatprep.subr.mxu0 0.0
    %1466 = vmatpush2.msra.mxu0 0.0
    %1467 = vmatprep.subr.mxu0 0.0
    %1468 = vmatpush2.msra.mxu0 0.0
    %1469 = vmatprep.subr.mxu0 0.0
    %1470 = vmatpush2.msra.mxu0 0.0
    %1471 = vmatprep.subr.mxu0 0.0
    %1472 = vmatpush2.msra.mxu0 0.0
    %1473 = vmatprep.subr.mxu0 0.0
    %1474 = vmatpush2.msra.mxu0 0.0
    %1475 = vmatprep.subr.mxu0 0.0
    %1476 = vmatpush2.msra.mxu0 0.0
    %1477 = vmatprep.subr.mxu0 0.0
    %1478 = vmatpush2.msra.mxu0 0.0
    %1479 = vmatprep.mubr.f32.mxu0 0.0
    %1480 = vmatmul.mubr.f32.gmra.mxu0 %v1413
    %v1481 = vpop.f32.mrf.mxu0
    %v1482 = vadd.f32 0.0, %v1481
    %v1483 = vpop.f32.mrf.mxu0
    %1484 = vdwg.mxu0
    %v1486 = vsel %vm193, %v1482, 0
    %1488 = vmatprep.subr.mxu0 0.0
    %1489 = vmatpush1.msra.mxu0 0.0
    %1490 = vmatprep.subr.mxu0 0.0
    %1491 = vmatpush1.msra.mxu0 0.0
    %1492 = vmatprep.subr.mxu0 0.0
    %1493 = vmatpush1.msra.mxu0 0.0
    %1494 = vmatprep.subr.mxu0 0.0
    %1495 = vmatpush1.msra.mxu0 0.0
    %1496 = vmatprep.subr.mxu0 0.0
    %1497 = vmatpush1.msra.mxu0 0.0
    %1498 = vmatprep.subr.mxu0 0.0
    %1499 = vmatpush1.msra.mxu0 0.0
    %1500 = vmatprep.subr.mxu0 0.0
    %1501 = vmatpush1.msra.mxu0 0.0
    %1502 = vmatprep.subr.mxu0 0.0
    %1503 = vmatpush1.msra.mxu0 0.0
    %1504 = vmatprep.subr.mxu0 0.0
    %1505 = vmatpush1.msra.mxu0 0.0
    %1506 = vmatprep.subr.mxu0 0.0
    %1507 = vmatpush1.msra.mxu0 0.0
    %1508 = vmatprep.subr.mxu0 0.0
    %1509 = vmatpush1.msra.mxu0 0.0
    %1510 = vmatprep.subr.mxu0 0.0
    %1511 = vmatpush1.msra.mxu0 0.0
    %1512 = vmatprep.subr.mxu0 0.0
    %1513 = vmatpush1.msra.mxu0 0.0
    %1514 = vmatprep.subr.mxu0 0.0
    %1515 = vmatpush1.msra.mxu0 0.0
    %1516 = vmatprep.subr.mxu0 0.0
    %1517 = vmatpush1.msra.mxu0 0.0
    %1518 = vmatprep.subr.mxu0 0.0
    %1519 = vmatpush1.msra.mxu0 %v66
    %1520 = vmatprep.subr.mxu0 0.0
    %1521 = vmatpush2.msra.mxu0 0.0
    %1522 = vmatprep.subr.mxu0 0.0
    %1523 = vmatpush2.msra.mxu0 0.0
    %1524 = vmatprep.subr.mxu0 0.0
    %1525 = vmatpush2.msra.mxu0 0.0
    %1526 = vmatprep.subr.mxu0 0.0
    %1527 = vmatpush2.msra.mxu0 0.0
    %1528 = vmatprep.subr.mxu0 0.0
    %1529 = vmatpush2.msra.mxu0 0.0
    %1530 = vmatprep.subr.mxu0 0.0
    %1531 = vmatpush2.msra.mxu0 0.0
    %1532 = vmatprep.subr.mxu0 0.0
    %1533 = vmatpush2.msra.mxu0 0.0
    %1534 = vmatprep.subr.mxu0 0.0
    %1535 = vmatpush2.msra.mxu0 0.0
    %1536 = vmatprep.subr.mxu0 0.0
    %1537 = vmatpush2.msra.mxu0 0.0
    %1538 = vmatprep.subr.mxu0 0.0
    %1539 = vmatpush2.msra.mxu0 0.0
    %1540 = vmatprep.subr.mxu0 0.0
    %1541 = vmatpush2.msra.mxu0 0.0
    %1542 = vmatprep.subr.mxu0 0.0
    %1543 = vmatpush2.msra.mxu0 0.0
    %1544 = vmatprep.subr.mxu0 0.0
    %1545 = vmatpush2.msra.mxu0 0.0
    %1546 = vmatprep.subr.mxu0 0.0
    %1547 = vmatpush2.msra.mxu0 0.0
    %1548 = vmatprep.subr.mxu0 0.0
    %1549 = vmatpush2.msra.mxu0 0.0
    %1550 = vmatprep.subr.mxu0 0.0
    %1551 = vmatpush2.msra.mxu0 0.0
    %1552 = vmatprep.mubr.f32.mxu0 0.0
    %1553 = vmatmul.mubr.f32.gmra.mxu0 %v1486
    %v1554 = vpop.f32.mrf.mxu0
    %v1555 = vadd.f32 0.0, %v1554
    %v1556 = vpop.f32.mrf.mxu0
    %1557 = vdwg.mxu0
    %v1559 = vsel %vm193, %v1315, 0
    %1561 = vmatprep.subr.mxu0 0.0
    %1562 = vmatpush1.msra.mxu0 0.0
    %1563 = vmatprep.subr.mxu0 0.0
    %1564 = vmatpush1.msra.mxu0 0.0
    %1565 = vmatprep.subr.mxu0 0.0
    %1566 = vmatpush1.msra.mxu0 0.0
    %1567 = vmatprep.subr.mxu0 0.0
    %1568 = vmatpush1.msra.mxu0 0.0
    %1569 = vmatprep.subr.mxu0 0.0
    %1570 = vmatpush1.msra.mxu0 0.0
    %1571 = vmatprep.subr.mxu0 0.0
    %1572 = vmatpush1.msra.mxu0 0.0
    %1573 = vmatprep.subr.mxu0 0.0
    %1574 = vmatpush1.msra.mxu0 0.0
    %1575 = vmatprep.subr.mxu0 0.0
    %1576 = vmatpush1.msra.mxu0 0.0
    %1577 = vmatprep.subr.mxu0 0.0
    %1578 = vmatpush1.msra.mxu0 0.0
    %1579 = vmatprep.subr.mxu0 0.0
    %1580 = vmatpush1.msra.mxu0 0.0
    %1581 = vmatprep.subr.mxu0 0.0
    %1582 = vmatpush1.msra.mxu0 0.0
    %1583 = vmatprep.subr.mxu0 0.0
    %1584 = vmatpush1.msra.mxu0 0.0
    %1585 = vmatprep.subr.mxu0 0.0
    %1586 = vmatpush1.msra.mxu0 0.0
    %1587 = vmatprep.subr.mxu0 0.0
    %1588 = vmatpush1.msra.mxu0 0.0
    %1589 = vmatprep.subr.mxu0 0.0
    %1590 = vmatpush1.msra.mxu0 0.0
    %1591 = vmatprep.subr.mxu0 0.0
    %1592 = vmatpush1.msra.mxu0 %v65
    %1593 = vmatprep.subr.mxu0 0.0
    %1594 = vmatpush2.msra.mxu0 0.0
    %1595 = vmatprep.subr.mxu0 0.0
    %1596 = vmatpush2.msra.mxu0 0.0
    %1597 = vmatprep.subr.mxu0 0.0
    %1598 = vmatpush2.msra.mxu0 0.0
    %1599 = vmatprep.subr.mxu0 0.0
    %1600 = vmatpush2.msra.mxu0 0.0
    %1601 = vmatprep.subr.mxu0 0.0
    %1602 = vmatpush2.msra.mxu0 0.0
    %1603 = vmatprep.subr.mxu0 0.0
    %1604 = vmatpush2.msra.mxu0 0.0
    %1605 = vmatprep.subr.mxu0 0.0
    %1606 = vmatpush2.msra.mxu0 0.0
    %1607 = vmatprep.subr.mxu0 0.0
    %1608 = vmatpush2.msra.mxu0 0.0
    %1609 = vmatprep.subr.mxu0 0.0
    %1610 = vmatpush2.msra.mxu0 0.0
    %1611 = vmatprep.subr.mxu0 0.0
    %1612 = vmatpush2.msra.mxu0 0.0
    %1613 = vmatprep.subr.mxu0 0.0
    %1614 = vmatpush2.msra.mxu0 0.0
    %1615 = vmatprep.subr.mxu0 0.0
    %1616 = vmatpush2.msra.mxu0 0.0
    %1617 = vmatprep.subr.mxu0 0.0
    %1618 = vmatpush2.msra.mxu0 0.0
    %1619 = vmatprep.subr.mxu0 0.0
    %1620 = vmatpush2.msra.mxu0 0.0
    %1621 = vmatprep.subr.mxu0 0.0
    %1622 = vmatpush2.msra.mxu0 0.0
    %1623 = vmatprep.subr.mxu0 0.0
    %1624 = vmatpush2.msra.mxu0 0.0
    %1625 = vmatprep.mubr.f32.mxu0 0.0
    %1626 = vmatmul.mubr.f32.gmra.mxu0 %v1559
    %v1627 = vpop.f32.mrf.mxu0
    %v1628 = vadd.f32 %v1555, %v1627
    %v1629 = vpop.f32.mrf.mxu0
    %1630 = vdwg.mxu0
    %1631 = vrot.lane.b32.xlu0 %v187, 112
    %v1632 = vpop.permute.xlu0 %1631
    %1633 = vrot.lane.b32.xlu0 %v187, 80
    %v1634 = vpop.permute.xlu0 %1633
    %v1635 = vsel %vm193, %v1632, 0
    %v1637 = vsel %vm193, %v1634, 0
    %1639 = vmatprep.subr.mxu0 0.0
    %1640 = vmatpush1.xpose.msra.mxu0 0.0
    %1641 = vmatprep.subr.mxu0 0.0
    %1642 = vmatpush1.xpose.msra.mxu0 0.0
    %1643 = vmatprep.subr.mxu0 0.0
    %1644 = vmatpush1.xpose.msra.mxu0 0.0
    %1645 = vmatprep.subr.mxu0 0.0
    %1646 = vmatpush1.xpose.msra.mxu0 0.0
    %1647 = vmatprep.subr.mxu0 0.0
    %1648 = vmatpush1.xpose.msra.mxu0 0.0
    %1649 = vmatprep.subr.mxu0 0.0
    %1650 = vmatpush1.xpose.msra.mxu0 0.0
    %1651 = vmatprep.subr.mxu0 0.0
    %1652 = vmatpush1.xpose.msra.mxu0 0.0
    %1653 = vmatprep.subr.mxu0 0.0
    %1654 = vmatpush1.xpose.msra.mxu0 0.0
    %1655 = vmatprep.subr.mxu0 0.0
    %1656 = vmatpush1.xpose.msra.mxu0 0.0
    %1657 = vmatprep.subr.mxu0 0.0
    %1658 = vmatpush1.xpose.msra.mxu0 0.0
    %1659 = vmatprep.subr.mxu0 0.0
    %1660 = vmatpush1.xpose.msra.mxu0 0.0
    %1661 = vmatprep.subr.mxu0 0.0
    %1662 = vmatpush1.xpose.msra.mxu0 0.0
    %1663 = vmatprep.subr.mxu0 0.0
    %1664 = vmatpush1.xpose.msra.mxu0 0.0
    %1665 = vmatprep.subr.mxu0 0.0
    %1666 = vmatpush1.xpose.msra.mxu0 0.0
    %1667 = vmatprep.subr.mxu0 0.0
    %1668 = vmatpush1.xpose.msra.mxu0 0.0
    %1669 = vmatprep.subr.mxu0 0.0
    %1670 = vmatpush1.xpose.msra.mxu0 %v1637
    %1671 = vmatprep.subr.mxu0 0.0
    %1672 = vmatpush2.xpose.msra.mxu0 0.0
    %1673 = vmatprep.subr.mxu0 0.0
    %1674 = vmatpush2.xpose.msra.mxu0 0.0
    %1675 = vmatprep.subr.mxu0 0.0
    %1676 = vmatpush2.xpose.msra.mxu0 0.0
    %1677 = vmatprep.subr.mxu0 0.0
    %1678 = vmatpush2.xpose.msra.mxu0 0.0
    %1679 = vmatprep.subr.mxu0 0.0
    %1680 = vmatpush2.xpose.msra.mxu0 0.0
    %1681 = vmatprep.subr.mxu0 0.0
    %1682 = vmatpush2.xpose.msra.mxu0 0.0
    %1683 = vmatprep.subr.mxu0 0.0
    %1684 = vmatpush2.xpose.msra.mxu0 0.0
    %1685 = vmatprep.subr.mxu0 0.0
    %1686 = vmatpush2.xpose.msra.mxu0 0.0
    %1687 = vmatprep.subr.mxu0 0.0
    %1688 = vmatpush2.xpose.msra.mxu0 0.0
    %1689 = vmatprep.subr.mxu0 0.0
    %1690 = vmatpush2.xpose.msra.mxu0 0.0
    %1691 = vmatprep.subr.mxu0 0.0
    %1692 = vmatpush2.xpose.msra.mxu0 0.0
    %1693 = vmatprep.subr.mxu0 0.0
    %1694 = vmatpush2.xpose.msra.mxu0 0.0
    %1695 = vmatprep.subr.mxu0 0.0
    %1696 = vmatpush2.xpose.msra.mxu0 0.0
    %1697 = vmatprep.subr.mxu0 0.0
    %1698 = vmatpush2.xpose.msra.mxu0 0.0
    %1699 = vmatprep.subr.mxu0 0.0
    %1700 = vmatpush2.xpose.msra.mxu0 0.0
    %1701 = vmatprep.subr.mxu0 0.0
    %1702 = vmatpush2.xpose.msra.mxu0 0.0
    %1703 = vmatprep.mubr.f32.mxu0 0.0
    %1704 = vmatmul.mubr.f32.gmra.mxu0 %v1635
    %v1705 = vpop.f32.mrf.mxu0
    %v1706 = vadd.f32 0.0, %v1705
    %v1707 = vpop.f32.mrf.mxu0
    %1708 = vdwg.mxu0
    %v1709 = vmul.f32 %v1706, 0.35355338
    %v1710 = vadd.f32 %v1709, %v103
    %v1711 = vsel %vm193, %v1710, -inf
    %1712 = vmax.xlane.f32.xlu0 %v1711
    %v1713 = vpop.xlane.xlu0 %1712
    %v1714 = vsub.f32 %v1710, %v1713
    %v1715 = vmul.f32 %v1714, 1.442695
    %v1716 = vpow.pop %v1715
    %v1717 = vsel %vm193, %v1716, 0.0
    %1718 = vadd.xlane.f32.xlu0 %v1717
    %v1719 = vpop.xlane.xlu0 %1718
    %v1720 = vrcp.pop %v1719
    %v1721 = vmul.f32 %v1716, %v1720
    %1722 = vrot.lane.b32.xlu0 %v187, 48
    %v1723 = vpop.permute.xlu0 %1722
    %v1726 = vsel %vm193, %v1721, 0
    %1728 = vmatprep.subr.mxu0 0.0
    %1729 = vmatpush1.msra.mxu0 0.0
    %1730 = vmatprep.subr.mxu0 0.0
    %1731 = vmatpush1.msra.mxu0 0.0
    %1732 = vmatprep.subr.mxu0 0.0
    %1733 = vmatpush1.msra.mxu0 0.0
    %1734 = vmatprep.subr.mxu0 0.0
    %1735 = vmatpush1.msra.mxu0 0.0
    %1736 = vmatprep.subr.mxu0 0.0
    %1737 = vmatpush1.msra.mxu0 0.0
    %1738 = vmatprep.subr.mxu0 0.0
    %1739 = vmatpush1.msra.mxu0 0.0
    %1740 = vmatprep.subr.mxu0 0.0
    %1741 = vmatpush1.msra.mxu0 0.0
    %1742 = vmatprep.subr.mxu0 0.0
    %1743 = vmatpush1.msra.mxu0 0.0
    %1744 = vmatprep.subr.mxu0 0.0
    %1745 = vmatpush1.msra.mxu0 0.0
    %1746 = vmatprep.subr.mxu0 0.0
    %1747 = vmatpush1.msra.mxu0 0.0
    %1748 = vmatprep.subr.mxu0 0.0
    %1749 = vmatpush1.msra.mxu0 0.0
    %1750 = vmatprep.subr.mxu0 0.0
    %1751 = vmatpush1.msra.mxu0 0.0
    %1752 = vmatprep.subr.mxu0 0.0
    %1753 = vmatpush1.msra.mxu0 0.0
    %1754 = vmatprep.subr.mxu0 0.0
    %1755 = vmatpush1.msra.mxu0 0.0
    %1756 = vmatprep.subr.mxu0 0.0
    %1757 = vmatpush1.msra.mxu0 0.0
    %1758 = vmatprep.subr.mxu0 0.0
    %1759 = vmatpush1.msra.mxu0 %v1723
    %1760 = vmatprep.subr.mxu0 0.0
    %1761 = vmatpush2.msra.mxu0 0.0
    %1762 = vmatprep.subr.mxu0 0.0
    %1763 = vmatpush2.msra.mxu0 0.0
    %1764 = vmatprep.subr.mxu0 0.0
    %1765 = vmatpush2.msra.mxu0 0.0
    %1766 = vmatprep.subr.mxu0 0.0
    %1767 = vmatpush2.msra.mxu0 0.0
    %1768 = vmatprep.subr.mxu0 0.0
    %1769 = vmatpush2.msra.mxu0 0.0
    %1770 = vmatprep.subr.mxu0 0.0
    %1771 = vmatpush2.msra.mxu0 0.0
    %1772 = vmatprep.subr.mxu0 0.0
    %1773 = vmatpush2.msra.mxu0 0.0
    %1774 = vmatprep.subr.mxu0 0.0
    %1775 = vmatpush2.msra.mxu0 0.0
    %1776 = vmatprep.subr.mxu0 0.0
    %1777 = vmatpush2.msra.mxu0 0.0
    %1778 = vmatprep.subr.mxu0 0.0
    %1779 = vmatpush2.msra.mxu0 0.0
    %1780 = vmatprep.subr.mxu0 0.0
    %1781 = vmatpush2.msra.mxu0 0.0
    %1782 = vmatprep.subr.mxu0 0.0
    %1783 = vmatpush2.msra.mxu0 0.0
    %1784 = vmatprep.subr.mxu0 0.0
    %1785 = vmatpush2.msra.mxu0 0.0
    %1786 = vmatprep.subr.mxu0 0.0
    %1787 = vmatpush2.msra.mxu0 0.0
    %1788 = vmatprep.subr.mxu0 0.0
    %1789 = vmatpush2.msra.mxu0 0.0
    %1790 = vmatprep.subr.mxu0 0.0
    %1791 = vmatpush2.msra.mxu0 0.0
    %1792 = vmatprep.mubr.f32.mxu0 0.0
    %1793 = vmatmul.mubr.f32.gmra.mxu0 %v1726
    %v1794 = vpop.f32.mrf.mxu0
    %v1795 = vadd.f32 0.0, %v1794
    %v1796 = vpop.f32.mrf.mxu0
    %1797 = vdwg.mxu0
    %v1799 = vsel %vm193, %v1795, 0
    %1801 = vmatprep.subr.mxu0 0.0
    %1802 = vmatpush1.msra.mxu0 0.0
    %1803 = vmatprep.subr.mxu0 0.0
    %1804 = vmatpush1.msra.mxu0 0.0
    %1805 = vmatprep.subr.mxu0 0.0
    %1806 = vmatpush1.msra.mxu0 0.0
    %1807 = vmatprep.subr.mxu0 0.0
    %1808 = vmatpush1.msra.mxu0 0.0
    %1809 = vmatprep.subr.mxu0 0.0
    %1810 = vmatpush1.msra.mxu0 0.0
    %1811 = vmatprep.subr.mxu0 0.0
    %1812 = vmatpush1.msra.mxu0 0.0
    %1813 = vmatprep.subr.mxu0 0.0
    %1814 = vmatpush1.msra.mxu0 0.0
    %1815 = vmatprep.subr.mxu0 0.0
    %1816 = vmatpush1.msra.mxu0 0.0
    %1817 = vmatprep.subr.mxu0 0.0
    %1818 = vmatpush1.msra.mxu0 0.0
    %1819 = vmatprep.subr.mxu0 0.0
    %1820 = vmatpush1.msra.mxu0 0.0
    %1821 = vmatprep.subr.mxu0 0.0
    %1822 = vmatpush1.msra.mxu0 0.0
    %1823 = vmatprep.subr.mxu0 0.0
    %1824 = vmatpush1.msra.mxu0 0.0
    %1825 = vmatprep.subr.mxu0 0.0
    %1826 = vmatpush1.msra.mxu0 0.0
    %1827 = vmatprep.subr.mxu0 0.0
    %1828 = vmatpush1.msra.mxu0 0.0
    %1829 = vmatprep.subr.mxu0 0.0
    %1830 = vmatpush1.msra.mxu0 0.0
    %1831 = vmatprep.subr.mxu0 0.0
    %1832 = vmatpush1.msra.mxu0 %v67
    %1833 = vmatprep.subr.mxu0 0.0
    %1834 = vmatpush2.msra.mxu0 0.0
    %1835 = vmatprep.subr.mxu0 0.0
    %1836 = vmatpush2.msra.mxu0 0.0
    %1837 = vmatprep.subr.mxu0 0.0
    %1838 = vmatpush2.msra.mxu0 0.0
    %1839 = vmatprep.subr.mxu0 0.0
    %1840 = vmatpush2.msra.mxu0 0.0
    %1841 = vmatprep.subr.mxu0 0.0
    %1842 = vmatpush2.msra.mxu0 0.0
    %1843 = vmatprep.subr.mxu0 0.0
    %1844 = vmatpush2.msra.mxu0 0.0
    %1845 = vmatprep.subr.mxu0 0.0
    %1846 = vmatpush2.msra.mxu0 0.0
    %1847 = vmatprep.subr.mxu0 0.0
    %1848 = vmatpush2.msra.mxu0 0.0
    %1849 = vmatprep.subr.mxu0 0.0
    %1850 = vmatpush2.msra.mxu0 0.0
    %1851 = vmatprep.subr.mxu0 0.0
    %1852 = vmatpush2.msra.mxu0 0.0
    %1853 = vmatprep.subr.mxu0 0.0
    %1854 = vmatpush2.msra.mxu0 0.0
    %1855 = vmatprep.subr.mxu0 0.0
    %1856 = vmatpush2.msra.mxu0 0.0
    %1857 = vmatprep.subr.mxu0 0.0
    %1858 = vmatpush2.msra.mxu0 0.0
    %1859 = vmatprep.subr.mxu0 0.0
    %1860 = vmatpush2.msra.mxu0 0.0
    %1861 = vmatprep.subr.mxu0 0.0
    %1862 = vmatpush2.msra.mxu0 0.0
    %1863 = vmatprep.subr.mxu0 0.0
    %1864 = vmatpush2.msra.mxu0 0.0
    %1865 = vmatprep.mubr.f32.mxu0 0.0
    %1866 = vmatmul.mubr.f32.gmra.mxu0 %v1799
    %v1867 = vpop.f32.mrf.mxu0
    %v1868 = vadd.f32 0.0, %v1867
    %v1869 = vpop.f32.mrf.mxu0
    %1870 = vdwg.mxu0
    %v1871 = vadd.f32 %v1628, %v1868
    %1872 = vrot.lane.b32.xlu0 %v187, 104
    %v1873 = vpop.permute.xlu0 %1872
    %1874 = vrot.lane.b32.xlu0 %v187, 72
    %v1875 = vpop.permute.xlu0 %1874
    %v1876 = vsel %vm193, %v1873, 0
    %v1878 = vsel %vm193, %v1875, 0
    %1880 = vmatprep.subr.mxu0 0.0
    %1881 = vmatpush1.xpose.msra.mxu0 0.0
    %1882 = vmatprep.subr.mxu0 0.0
    %1883 = vmatpush1.xpose.msra.mxu0 0.0
    %1884 = vmatprep.subr.mxu0 0.0
    %1885 = vmatpush1.xpose.msra.mxu0 0.0
    %1886 = vmatprep.subr.mxu0 0.0
    %1887 = vmatpush1.xpose.msra.mxu0 0.0
    %1888 = vmatprep.subr.mxu0 0.0
    %1889 = vmatpush1.xpose.msra.mxu0 0.0
    %1890 = vmatprep.subr.mxu0 0.0
    %1891 = vmatpush1.xpose.msra.mxu0 0.0
    %1892 = vmatprep.subr.mxu0 0.0
    %1893 = vmatpush1.xpose.msra.mxu0 0.0
    %1894 = vmatprep.subr.mxu0 0.0
    %1895 = vmatpush1.xpose.msra.mxu0 0.0
    %1896 = vmatprep.subr.mxu0 0.0
    %1897 = vmatpush1.xpose.msra.mxu0 0.0
    %1898 = vmatprep.subr.mxu0 0.0
    %1899 = vmatpush1.xpose.msra.mxu0 0.0
    %1900 = vmatprep.subr.mxu0 0.0
    %1901 = vmatpush1.xpose.msra.mxu0 0.0
    %1902 = vmatprep.subr.mxu0 0.0
    %1903 = vmatpush1.xpose.msra.mxu0 0.0
    %1904 = vmatprep.subr.mxu0 0.0
    %1905 = vmatpush1.xpose.msra.mxu0 0.0
    %1906 = vmatprep.subr.mxu0 0.0
    %1907 = vmatpush1.xpose.msra.mxu0 0.0
    %1908 = vmatprep.subr.mxu0 0.0
    %1909 = vmatpush1.xpose.msra.mxu0 0.0
    %1910 = vmatprep.subr.mxu0 0.0
    %1911 = vmatpush1.xpose.msra.mxu0 %v1878
    %1912 = vmatprep.subr.mxu0 0.0
    %1913 = vmatpush2.xpose.msra.mxu0 0.0
    %1914 = vmatprep.subr.mxu0 0.0
    %1915 = vmatpush2.xpose.msra.mxu0 0.0
    %1916 = vmatprep.subr.mxu0 0.0
    %1917 = vmatpush2.xpose.msra.mxu0 0.0
    %1918 = vmatprep.subr.mxu0 0.0
    %1919 = vmatpush2.xpose.msra.mxu0 0.0
    %1920 = vmatprep.subr.mxu0 0.0
    %1921 = vmatpush2.xpose.msra.mxu0 0.0
    %1922 = vmatprep.subr.mxu0 0.0
    %1923 = vmatpush2.xpose.msra.mxu0 0.0
    %1924 = vmatprep.subr.mxu0 0.0
    %1925 = vmatpush2.xpose.msra.mxu0 0.0
    %1926 = vmatprep.subr.mxu0 0.0
    %1927 = vmatpush2.xpose.msra.mxu0 0.0
    %1928 = vmatprep.subr.mxu0 0.0
    %1929 = vmatpush2.xpose.msra.mxu0 0.0
    %1930 = vmatprep.subr.mxu0 0.0
    %1931 = vmatpush2.xpose.msra.mxu0 0.0
    %1932 = vmatprep.subr.mxu0 0.0
    %1933 = vmatpush2.xpose.msra.mxu0 0.0
    %1934 = vmatprep.subr.mxu0 0.0
    %1935 = vmatpush2.xpose.msra.mxu0 0.0
    %1936 = vmatprep.subr.mxu0 0.0
    %1937 = vmatpush2.xpose.msra.mxu0 0.0
    %1938 = vmatprep.subr.mxu0 0.0
    %1939 = vmatpush2.xpose.msra.mxu0 0.0
    %1940 = vmatprep.subr.mxu0 0.0
    %1941 = vmatpush2.xpose.msra.mxu0 0.0
    %1942 = vmatprep.subr.mxu0 0.0
    %1943 = vmatpush2.xpose.msra.mxu0 0.0
    %1944 = vmatprep.mubr.f32.mxu0 0.0
    %1945 = vmatmul.mubr.f32.gmra.mxu0 %v1876
    %v1946 = vpop.f32.mrf.mxu0
    %v1947 = vadd.f32 0.0, %v1946
    %v1948 = vpop.f32.mrf.mxu0
    %1949 = vdwg.mxu0
    %v1950 = vmul.f32 %v1947, 0.35355338
    %v1951 = vadd.f32 %v1950, %v103
    %v1952 = vsel %vm193, %v1951, -inf
    %1953 = vmax.xlane.f32.xlu0 %v1952
    %v1954 = vpop.xlane.xlu0 %1953
    %v1955 = vsub.f32 %v1951, %v1954
    %v1956 = vmul.f32 %v1955, 1.442695
    %v1957 = vpow.pop %v1956
    %v1958 = vsel %vm193, %v1957, 0.0
    %1959 = vadd.xlane.f32.xlu0 %v1958
    %v1960 = vpop.xlane.xlu0 %1959
    %v1961 = vrcp.pop %v1960
    %v1962 = vmul.f32 %v1957, %v1961
    %1963 = vrot.lane.b32.xlu0 %v187, 40
    %v1964 = vpop.permute.xlu0 %1963
    %v1967 = vsel %vm193, %v1962, 0
    %1969 = vmatprep.subr.mxu0 0.0
    %1970 = vmatpush1.msra.mxu0 0.0
    %1971 = vmatprep.subr.mxu0 0.0
    %1972 = vmatpush1.msra.mxu0 0.0
    %1973 = vmatprep.subr.mxu0 0.0
    %1974 = vmatpush1.msra.mxu0 0.0
    %1975 = vmatprep.subr.mxu0 0.0
    %1976 = vmatpush1.msra.mxu0 0.0
    %1977 = vmatprep.subr.mxu0 0.0
    %1978 = vmatpush1.msra.mxu0 0.0
    %1979 = vmatprep.subr.mxu0 0.0
    %1980 = vmatpush1.msra.mxu0 0.0
    %1981 = vmatprep.subr.mxu0 0.0
    %1982 = vmatpush1.msra.mxu0 0.0
    %1983 = vmatprep.subr.mxu0 0.0
    %1984 = vmatpush1.msra.mxu0 0.0
    %1985 = vmatprep.subr.mxu0 0.0
    %1986 = vmatpush1.msra.mxu0 0.0
    %1987 = vmatprep.subr.mxu0 0.0
    %1988 = vmatpush1.msra.mxu0 0.0
    %1989 = vmatprep.subr.mxu0 0.0
    %1990 = vmatpush1.msra.mxu0 0.0
    %1991 = vmatprep.subr.mxu0 0.0
    %1992 = vmatpush1.msra.mxu0 0.0
    %1993 = vmatprep.subr.mxu0 0.0
    %1994 = vmatpush1.msra.mxu0 0.0
    %1995 = vmatprep.subr.mxu0 0.0
    %1996 = vmatpush1.msra.mxu0 0.0
    %1997 = vmatprep.subr.mxu0 0.0
    %1998 = vmatpush1.msra.mxu0 0.0
    %1999 = vmatprep.subr.mxu0 0.0
    %2000 = vmatpush1.msra.mxu0 %v1964
    %2001 = vmatprep.subr.mxu0 0.0
    %2002 = vmatpush2.msra.mxu0 0.0
    %2003 = vmatprep.subr.mxu0 0.0
    %2004 = vmatpush2.msra.mxu0 0.0
    %2005 = vmatprep.subr.mxu0 0.0
    %2006 = vmatpush2.msra.mxu0 0.0
    %2007 = vmatprep.subr.mxu0 0.0
    %2008 = vmatpush2.msra.mxu0 0.0
    %2009 = vmatprep.subr.mxu0 0.0
    %2010 = vmatpush2.msra.mxu0 0.0
    %2011 = vmatprep.subr.mxu0 0.0
    %2012 = vmatpush2.msra.mxu0 0.0
    %2013 = vmatprep.subr.mxu0 0.0
    %2014 = vmatpush2.msra.mxu0 0.0
    %2015 = vmatprep.subr.mxu0 0.0
    %2016 = vmatpush2.msra.mxu0 0.0
    %2017 = vmatprep.subr.mxu0 0.0
    %2018 = vmatpush2.msra.mxu0 0.0
    %2019 = vmatprep.subr.mxu0 0.0
    %2020 = vmatpush2.msra.mxu0 0.0
    %2021 = vmatprep.subr.mxu0 0.0
    %2022 = vmatpush2.msra.mxu0 0.0
    %2023 = vmatprep.subr.mxu0 0.0
    %2024 = vmatpush2.msra.mxu0 0.0
    %2025 = vmatprep.subr.mxu0 0.0
    %2026 = vmatpush2.msra.mxu0 0.0
    %2027 = vmatprep.subr.mxu0 0.0
    %2028 = vmatpush2.msra.mxu0 0.0
    %2029 = vmatprep.subr.mxu0 0.0
    %2030 = vmatpush2.msra.mxu0 0.0
    %2031 = vmatprep.subr.mxu0 0.0
    %2032 = vmatpush2.msra.mxu0 0.0
    %2033 = vmatprep.mubr.f32.mxu0 0.0
    %2034 = vmatmul.mubr.f32.gmra.mxu0 %v1967
    %v2035 = vpop.f32.mrf.mxu0
    %v2036 = vadd.f32 0.0, %v2035
    %v2037 = vpop.f32.mrf.mxu0
    %2038 = vdwg.mxu0
    %v2040 = vsel %vm193, %v2036, 0
    %2042 = vmatprep.subr.mxu0 0.0
    %2043 = vmatpush1.msra.mxu0 0.0
    %2044 = vmatprep.subr.mxu0 0.0
    %2045 = vmatpush1.msra.mxu0 0.0
    %2046 = vmatprep.subr.mxu0 0.0
    %2047 = vmatpush1.msra.mxu0 0.0
    %2048 = vmatprep.subr.mxu0 0.0
    %2049 = vmatpush1.msra.mxu0 0.0
    %2050 = vmatprep.subr.mxu0 0.0
    %2051 = vmatpush1.msra.mxu0 0.0
    %2052 = vmatprep.subr.mxu0 0.0
    %2053 = vmatpush1.msra.mxu0 0.0
    %2054 = vmatprep.subr.mxu0 0.0
    %2055 = vmatpush1.msra.mxu0 0.0
    %2056 = vmatprep.subr.mxu0 0.0
    %2057 = vmatpush1.msra.mxu0 0.0
    %2058 = vmatprep.subr.mxu0 0.0
    %2059 = vmatpush1.msra.mxu0 0.0
    %2060 = vmatprep.subr.mxu0 0.0
    %2061 = vmatpush1.msra.mxu0 0.0
    %2062 = vmatprep.subr.mxu0 0.0
    %2063 = vmatpush1.msra.mxu0 0.0
    %2064 = vmatprep.subr.mxu0 0.0
    %2065 = vmatpush1.msra.mxu0 0.0
    %2066 = vmatprep.subr.mxu0 0.0
    %2067 = vmatpush1.msra.mxu0 0.0
    %2068 = vmatprep.subr.mxu0 0.0
    %2069 = vmatpush1.msra.mxu0 0.0
    %2070 = vmatprep.subr.mxu0 0.0
    %2071 = vmatpush1.msra.mxu0 0.0
    %2072 = vmatprep.subr.mxu0 0.0
    %2073 = vmatpush1.msra.mxu0 %v68
    %2074 = vmatprep.subr.mxu0 0.0
    %2075 = vmatpush2.msra.mxu0 0.0
    %2076 = vmatprep.subr.mxu0 0.0
    %2077 = vmatpush2.msra.mxu0 0.0
    %2078 = vmatprep.subr.mxu0 0.0
    %2079 = vmatpush2.msra.mxu0 0.0
    %2080 = vmatprep.subr.mxu0 0.0
    %2081 = vmatpush2.msra.mxu0 0.0
    %2082 = vmatprep.subr.mxu0 0.0
    %2083 = vmatpush2.msra.mxu0 0.0
    %2084 = vmatprep.subr.mxu0 0.0
    %2085 = vmatpush2.msra.mxu0 0.0
    %2086 = vmatprep.subr.mxu0 0.0
    %2087 = vmatpush2.msra.mxu0 0.0
    %2088 = vmatprep.subr.mxu0 0.0
    %2089 = vmatpush2.msra.mxu0 0.0
    %2090 = vmatprep.subr.mxu0 0.0
    %2091 = vmatpush2.msra.mxu0 0.0
    %2092 = vmatprep.subr.mxu0 0.0
    %2093 = vmatpush2.msra.mxu0 0.0
    %2094 = vmatprep.subr.mxu0 0.0
    %2095 = vmatpush2.msra.mxu0 0.0
    %2096 = vmatprep.subr.mxu0 0.0
    %2097 = vmatpush2.msra.mxu0 0.0
    %2098 = vmatprep.subr.mxu0 0.0
    %2099 = vmatpush2.msra.mxu0 0.0
    %2100 = vmatprep.subr.mxu0 0.0
    %2101 = vmatpush2.msra.mxu0 0.0
    %2102 = vmatprep.subr.mxu0 0.0
    %2103 = vmatpush2.msra.mxu0 0.0
    %2104 = vmatprep.subr.mxu0 0.0
    %2105 = vmatpush2.msra.mxu0 0.0
    %2106 = vmatprep.mubr.f32.mxu0 0.0
    %2107 = vmatmul.mubr.f32.gmra.mxu0 %v2040
    %v2108 = vpop.f32.mrf.mxu0
    %v2109 = vadd.f32 0.0, %v2108
    %v2110 = vpop.f32.mrf.mxu0
    %2111 = vdwg.mxu0
    %v2112 = vadd.f32 %v1871, %v2109
    %v2113 = vadd.f32 %v104, %v1151
    %v2114 = vadd.f32 %v105, %v2112
    %v2115 = vsel %vm108, %v2113, 0.0
    %2116 = vadd.xlane.f32.xlu0 %v2115
    %v2117 = vpop.xlane.xlu0 %2116
    %v2118 = vsel %vm108, %v2114, 0.0
    %2119 = vadd.xlane.f32.xlu0 %v2118
    %v2120 = vpop.xlane.xlu0 %2119
    %v2121 = vrcp.pop 32.0
    %v2122 = vmul.f32 %v2117, %v2121
    %v2123 = vmul.f32 %v2120, %v2121
    %v2124 = vsub.f32 %v2113, %v2122
    %v2125 = vsub.f32 %v2114, %v2123
    %v2126 = vmul.f32 %v2124, %v2124
    %v2127 = vmul.f32 %v2125, %v2125
    %v2128 = vsel %vm108, %v2126, 0.0
    %2129 = vadd.xlane.f32.xlu0 %v2128
    %v2130 = vpop.xlane.xlu0 %2129
    %v2131 = vsel %vm108, %v2127, 0.0
    %2132 = vadd.xlane.f32.xlu0 %v2131
    %v2133 = vpop.xlane.xlu0 %2132
    %v2134 = vmul.f32 %v2130, %v2121
    %v2135 = vmul.f32 %v2133, %v2121
    %v2136 = vadd.f32 %v2134, 1e-05
    %v2137 = vadd.f32 %v2135, 1e-05
    %v2138 = vrsqrt.pop %v2136
    %v2139 = vrsqrt.pop %v2137
    %v2140 = vmul.f32 %v2124, %v2138
    %v2141 = vmul.f32 %v2125, %v2139
    %v2142 = vlaneseq
    %v2143 = vshrl.u32 %v2142, 7
    %v2144 = vsub.s32 0, %v2143
    %v2145 = vrot.slane %v93, %v2144
    %v2146 = vmul.f32 %v2140, %v2145
    %v2147 = vmul.f32 %v2141, %v2145
    %v2148 = vlaneseq
    %v2149 = vshrl.u32 %v2148, 7
    %v2150 = vsub.s32 1, %v2149
    %v2151 = vrot.slane %v93, %v2150
    %v2152 = vadd.f32 %v2146, %v2151
    %v2153 = vadd.f32 %v2147, %v2151
    %v2155 = vsel %vm108, %v2152, 0
    %v2158 = vsel %vm108, %v2153, 0
    %2160 = vmatprep.subr.mxu0 0.0
    %2161 = vmatpush1.msra.mxu0 0.0
    %2162 = vmatprep.subr.mxu0 0.0
    %2163 = vmatpush1.msra.mxu0 0.0
    %2164 = vmatprep.subr.mxu0 0.0
    %2165 = vmatpush1.msra.mxu0 0.0
    %2166 = vmatprep.subr.mxu0 0.0
    %2167 = vmatpush1.msra.mxu0 0.0
    %2168 = vmatprep.subr.mxu0 0.0
    %2169 = vmatpush1.msra.mxu0 0.0
    %2170 = vmatprep.subr.mxu0 0.0
    %2171 = vmatpush1.msra.mxu0 0.0
    %2172 = vmatprep.subr.mxu0 0.0
    %2173 = vmatpush1.msra.mxu0 0.0
    %2174 = vmatprep.subr.mxu0 0.0
    %2175 = vmatpush1.msra.mxu0 0.0
    %2176 = vmatprep.subr.mxu0 0.0
    %2177 = vmatpush1.msra.mxu0 0.0
    %2178 = vmatprep.subr.mxu0 0.0
    %2179 = vmatpush1.msra.mxu0 0.0
    %2180 = vmatprep.subr.mxu0 0.0
    %2181 = vmatpush1.msra.mxu0 0.0
    %2182 = vmatprep.subr.mxu0 0.0
    %2183 = vmatpush1.msra.mxu0 0.0
    %2184 = vmatprep.subr.mxu0 0.0
    %2185 = vmatpush1.msra.mxu0 %v72
    %2186 = vmatprep.subr.mxu0 0.0
    %2187 = vmatpush1.msra.mxu0 %v71
    %2188 = vmatprep.subr.mxu0 0.0
    %2189 = vmatpush1.msra.mxu0 %v70
    %2190 = vmatprep.subr.mxu0 0.0
    %2191 = vmatpush1.msra.mxu0 %v69
    %2192 = vmatprep.subr.mxu0 0.0
    %2193 = vmatpush2.msra.mxu0 0.0
    %2194 = vmatprep.subr.mxu0 0.0
    %2195 = vmatpush2.msra.mxu0 0.0
    %2196 = vmatprep.subr.mxu0 0.0
    %2197 = vmatpush2.msra.mxu0 0.0
    %2198 = vmatprep.subr.mxu0 0.0
    %2199 = vmatpush2.msra.mxu0 0.0
    %2200 = vmatprep.subr.mxu0 0.0
    %2201 = vmatpush2.msra.mxu0 0.0
    %2202 = vmatprep.subr.mxu0 0.0
    %2203 = vmatpush2.msra.mxu0 0.0
    %2204 = vmatprep.subr.mxu0 0.0
    %2205 = vmatpush2.msra.mxu0 0.0
    %2206 = vmatprep.subr.mxu0 0.0
    %2207 = vmatpush2.msra.mxu0 0.0
    %2208 = vmatprep.subr.mxu0 0.0
    %2209 = vmatpush2.msra.mxu0 0.0
    %2210 = vmatprep.subr.mxu0 0.0
    %2211 = vmatpush2.msra.mxu0 0.0
    %2212 = vmatprep.subr.mxu0 0.0
    %2213 = vmatpush2.msra.mxu0 0.0
    %2214 = vmatprep.subr.mxu0 0.0
    %2215 = vmatpush2.msra.mxu0 0.0
    %2216 = vmatprep.subr.mxu0 0.0
    %2217 = vmatpush2.msra.mxu0 0.0
    %2218 = vmatprep.subr.mxu0 0.0
    %2219 = vmatpush2.msra.mxu0 0.0
    %2220 = vmatprep.subr.mxu0 0.0
    %2221 = vmatpush2.msra.mxu0 0.0
    %2222 = vmatprep.subr.mxu0 0.0
    %2223 = vmatpush2.msra.mxu0 0.0
    %2224 = vmatprep.mubr.f32.mxu0 0.0
    %2225 = vmatmul.mubr.f32.gmra.mxu0 %v2155
    %v2226 = vpop.f32.mrf.mxu0
    %v2227 = vadd.f32 0.0, %v2226
    %v2228 = vpop.f32.mrf.mxu0
    %2229 = vmatprep.mubr.f32.mxu0 0.0
    %2230 = vmatmul.mubr.f32.gmra.mxu0 %v2158
    %v2231 = vpop.f32.mrf.mxu0
    %v2232 = vadd.f32 0.0, %v2231
    %v2233 = vpop.f32.mrf.mxu0
    %2234 = vdwg.mxu0
    %v2236 = vsel %vm108, %v106, 0
    %v2239 = vsel %vm108, %v107, 0
    %2241 = vmatprep.subr.mxu0 0.0
    %2242 = vmatpush1.msra.mxu0 0.0
    %2243 = vmatprep.subr.mxu0 0.0
    %2244 = vmatpush1.msra.mxu0 0.0
    %2245 = vmatprep.subr.mxu0 0.0
    %2246 = vmatpush1.msra.mxu0 0.0
    %2247 = vmatprep.subr.mxu0 0.0
    %2248 = vmatpush1.msra.mxu0 0.0
    %2249 = vmatprep.subr.mxu0 0.0
    %2250 = vmatpush1.msra.mxu0 0.0
    %2251 = vmatprep.subr.mxu0 0.0
    %2252 = vmatpush1.msra.mxu0 0.0
    %2253 = vmatprep.subr.mxu0 0.0
    %2254 = vmatpush1.msra.mxu0 0.0
    %2255 = vmatprep.subr.mxu0 0.0
    %2256 = vmatpush1.msra.mxu0 0.0
    %2257 = vmatprep.subr.mxu0 0.0
    %2258 = vmatpush1.msra.mxu0 0.0
    %2259 = vmatprep.subr.mxu0 0.0
    %2260 = vmatpush1.msra.mxu0 0.0
    %2261 = vmatprep.subr.mxu0 0.0
    %2262 = vmatpush1.msra.mxu0 0.0
    %2263 = vmatprep.subr.mxu0 0.0
    %2264 = vmatpush1.msra.mxu0 0.0
    %2265 = vmatprep.subr.mxu0 0.0
    %2266 = vmatpush1.msra.mxu0 %v76
    %2267 = vmatprep.subr.mxu0 0.0
    %2268 = vmatpush1.msra.mxu0 %v75
    %2269 = vmatprep.subr.mxu0 0.0
    %2270 = vmatpush1.msra.mxu0 %v74
    %2271 = vmatprep.subr.mxu0 0.0
    %2272 = vmatpush1.msra.mxu0 %v73
    %2273 = vmatprep.subr.mxu0 0.0
    %2274 = vmatpush2.msra.mxu0 0.0
    %2275 = vmatprep.subr.mxu0 0.0
    %2276 = vmatpush2.msra.mxu0 0.0
    %2277 = vmatprep.subr.mxu0 0.0
    %2278 = vmatpush2.msra.mxu0 0.0
    %2279 = vmatprep.subr.mxu0 0.0
    %2280 = vmatpush2.msra.mxu0 0.0
    %2281 = vmatprep.subr.mxu0 0.0
    %2282 = vmatpush2.msra.mxu0 0.0
    %2283 = vmatprep.subr.mxu0 0.0
    %2284 = vmatpush2.msra.mxu0 0.0
    %2285 = vmatprep.subr.mxu0 0.0
    %2286 = vmatpush2.msra.mxu0 0.0
    %2287 = vmatprep.subr.mxu0 0.0
    %2288 = vmatpush2.msra.mxu0 0.0
    %2289 = vmatprep.subr.mxu0 0.0
    %2290 = vmatpush2.msra.mxu0 0.0
    %2291 = vmatprep.subr.mxu0 0.0
    %2292 = vmatpush2.msra.mxu0 0.0
    %2293 = vmatprep.subr.mxu0 0.0
    %2294 = vmatpush2.msra.mxu0 0.0
    %2295 = vmatprep.subr.mxu0 0.0
    %2296 = vmatpush2.msra.mxu0 0.0
    %2297 = vmatprep.subr.mxu0 0.0
    %2298 = vmatpush2.msra.mxu0 0.0
    %2299 = vmatprep.subr.mxu0 0.0
    %2300 = vmatpush2.msra.mxu0 0.0
    %2301 = vmatprep.subr.mxu0 0.0
    %2302 = vmatpush2.msra.mxu0 0.0
    %2303 = vmatprep.subr.mxu0 0.0
    %2304 = vmatpush2.msra.mxu0 0.0
    %2305 = vmatprep.mubr.f32.mxu0 0.0
    %2306 = vmatmul.mubr.f32.gmra.mxu0 %v2236
    %v2307 = vpop.f32.mrf.mxu0
    %v2308 = vadd.f32 0.0, %v2307
    %v2309 = vpop.f32.mrf.mxu0
    %2310 = vmatprep.mubr.f32.mxu0 0.0
    %2311 = vmatmul.mubr.f32.gmra.mxu0 %v2239
    %v2312 = vpop.f32.mrf.mxu0
    %v2313 = vadd.f32 0.0, %v2312
    %v2314 = vpop.f32.mrf.mxu0
    %2315 = vdwg.mxu0
    %s2316 = smul.u32 0, 2
    %s2317 = sld [smem:[#allocation3 + %s2316]]
    %v2318 = vstv %s2317
    %vm2319 = vcmp.lt.s32.totalorder %v101, %v2318
    %v2320 = vsel %vm2319, 0.0, -1000000.0
    %v2322 = vsel %vm193, %v2227, 0
    %v2325 = vsel %vm193, %v2308, 0
    %2327 = vmatprep.subr.mxu0 0.0
    %2328 = vmatpush1.xpose.msra.mxu0 0.0
    %2329 = vmatprep.subr.mxu0 0.0
    %2330 = vmatpush1.xpose.msra.mxu0 0.0
    %2331 = vmatprep.subr.mxu0 0.0
    %2332 = vmatpush1.xpose.msra.mxu0 0.0
    %2333 = vmatprep.subr.mxu0 0.0
    %2334 = vmatpush1.xpose.msra.mxu0 0.0
    %2335 = vmatprep.subr.mxu0 0.0
    %2336 = vmatpush1.xpose.msra.mxu0 0.0
    %2337 = vmatprep.subr.mxu0 0.0
    %2338 = vmatpush1.xpose.msra.mxu0 0.0
    %2339 = vmatprep.subr.mxu0 0.0
    %2340 = vmatpush1.xpose.msra.mxu0 0.0
    %2341 = vmatprep.subr.mxu0 0.0
    %2342 = vmatpush1.xpose.msra.mxu0 0.0
    %2343 = vmatprep.subr.mxu0 0.0
    %2344 = vmatpush1.xpose.msra.mxu0 0.0
    %2345 = vmatprep.subr.mxu0 0.0
    %2346 = vmatpush1.xpose.msra.mxu0 0.0
    %2347 = vmatprep.subr.mxu0 0.0
    %2348 = vmatpush1.xpose.msra.mxu0 0.0
    %2349 = vmatprep.subr.mxu0 0.0
    %2350 = vmatpush1.xpose.msra.mxu0 0.0
    %2351 = vmatprep.subr.mxu0 0.0
    %2352 = vmatpush1.xpose.msra.mxu0 0.0
    %2353 = vmatprep.subr.mxu0 0.0
    %2354 = vmatpush1.xpose.msra.mxu0 0.0
    %2355 = vmatprep.subr.mxu0 0.0
    %2356 = vmatpush1.xpose.msra.mxu0 0.0
    %2357 = vmatprep.subr.mxu0 0.0
    %2358 = vmatpush1.xpose.msra.mxu0 %v2325
    %2359 = vmatprep.subr.mxu0 0.0
    %2360 = vmatpush2.xpose.msra.mxu0 0.0
    %2361 = vmatprep.subr.mxu0 0.0
    %2362 = vmatpush2.xpose.msra.mxu0 0.0
    %2363 = vmatprep.subr.mxu0 0.0
    %2364 = vmatpush2.xpose.msra.mxu0 0.0
    %2365 = vmatprep.subr.mxu0 0.0
    %2366 = vmatpush2.xpose.msra.mxu0 0.0
    %2367 = vmatprep.subr.mxu0 0.0
    %2368 = vmatpush2.xpose.msra.mxu0 0.0
    %2369 = vmatprep.subr.mxu0 0.0
    %2370 = vmatpush2.xpose.msra.mxu0 0.0
    %2371 = vmatprep.subr.mxu0 0.0
    %2372 = vmatpush2.xpose.msra.mxu0 0.0
    %2373 = vmatprep.subr.mxu0 0.0
    %2374 = vmatpush2.xpose.msra.mxu0 0.0
    %2375 = vmatprep.subr.mxu0 0.0
    %2376 = vmatpush2.xpose.msra.mxu0 0.0
    %2377 = vmatprep.subr.mxu0 0.0
    %2378 = vmatpush2.xpose.msra.mxu0 0.0
    %2379 = vmatprep.subr.mxu0 0.0
    %2380 = vmatpush2.xpose.msra.mxu0 0.0
    %2381 = vmatprep.subr.mxu0 0.0
    %2382 = vmatpush2.xpose.msra.mxu0 0.0
    %2383 = vmatprep.subr.mxu0 0.0
    %2384 = vmatpush2.xpose.msra.mxu0 0.0
    %2385 = vmatprep.subr.mxu0 0.0
    %2386 = vmatpush2.xpose.msra.mxu0 0.0
    %2387 = vmatprep.subr.mxu0 0.0
    %2388 = vmatpush2.xpose.msra.mxu0 0.0
    %2389 = vmatprep.subr.mxu0 0.0
    %2390 = vmatpush2.xpose.msra.mxu0 0.0
    %2391 = vmatprep.mubr.f32.mxu0 0.0
    %2392 = vmatmul.mubr.f32.gmra.mxu0 %v2322
    %v2393 = vpop.f32.mrf.mxu0
    %v2394 = vadd.f32 0.0, %v2393
    %v2395 = vpop.f32.mrf.mxu0
    %2396 = vdwg.mxu0
    %v2397 = vmul.f32 %v2394, 0.35355338
    %v2398 = vadd.f32 %v2397, %v2320
    %v2399 = vsel %vm193, %v2398, -inf
    %2400 = vmax.xlane.f32.xlu0 %v2399
    %v2401 = vpop.xlane.xlu0 %2400
    %v2402 = vsub.f32 %v2398, %v2401
    %v2403 = vmul.f32 %v2402, 1.442695
    %v2404 = vpow.pop %v2403
    %v2405 = vsel %vm193, %v2404, 0.0
    %2406 = vadd.xlane.f32.xlu0 %v2405
    %v2407 = vpop.xlane.xlu0 %2406
    %v2408 = vrcp.pop %v2407
    %v2409 = vmul.f32 %v2404, %v2408
    %2410 = vrot.lane.b32.xlu0 %v2308, 96
    %v2411 = vpop.permute.xlu0 %2410
    %v2414 = vsel %vm193, %v2409, 0
    %2416 = vmatprep.subr.mxu0 0.0
    %2417 = vmatpush1.msra.mxu0 0.0
    %2418 = vmatprep.subr.mxu0 0.0
    %2419 = vmatpush1.msra.mxu0 0.0
    %2420 = vmatprep.subr.mxu0 0.0
    %2421 = vmatpush1.msra.mxu0 0.0
    %2422 = vmatprep.subr.mxu0 0.0
    %2423 = vmatpush1.msra.mxu0 0.0
    %2424 = vmatprep.subr.mxu0 0.0
    %2425 = vmatpush1.msra.mxu0 0.0
    %2426 = vmatprep.subr.mxu0 0.0
    %2427 = vmatpush1.msra.mxu0 0.0
    %2428 = vmatprep.subr.mxu0 0.0
    %2429 = vmatpush1.msra.mxu0 0.0
    %2430 = vmatprep.subr.mxu0 0.0
    %2431 = vmatpush1.msra.mxu0 0.0
    %2432 = vmatprep.subr.mxu0 0.0
    %2433 = vmatpush1.msra.mxu0 0.0
    %2434 = vmatprep.subr.mxu0 0.0
    %2435 = vmatpush1.msra.mxu0 0.0
    %2436 = vmatprep.subr.mxu0 0.0
    %2437 = vmatpush1.msra.mxu0 0.0
    %2438 = vmatprep.subr.mxu0 0.0
    %2439 = vmatpush1.msra.mxu0 0.0
    %2440 = vmatprep.subr.mxu0 0.0
    %2441 = vmatpush1.msra.mxu0 0.0
    %2442 = vmatprep.subr.mxu0 0.0
    %2443 = vmatpush1.msra.mxu0 0.0
    %2444 = vmatprep.subr.mxu0 0.0
    %2445 = vmatpush1.msra.mxu0 0.0
    %2446 = vmatprep.subr.mxu0 0.0
    %2447 = vmatpush1.msra.mxu0 %v2411
    %2448 = vmatprep.subr.mxu0 0.0
    %2449 = vmatpush2.msra.mxu0 0.0
    %2450 = vmatprep.subr.mxu0 0.0
    %2451 = vmatpush2.msra.mxu0 0.0
    %2452 = vmatprep.subr.mxu0 0.0
    %2453 = vmatpush2.msra.mxu0 0.0
    %2454 = vmatprep.subr.mxu0 0.0
    %2455 = vmatpush2.msra.mxu0 0.0
    %2456 = vmatprep.subr.mxu0 0.0
    %2457 = vmatpush2.msra.mxu0 0.0
    %2458 = vmatprep.subr.mxu0 0.0
    %2459 = vmatpush2.msra.mxu0 0.0
    %2460 = vmatprep.subr.mxu0 0.0
    %2461 = vmatpush2.msra.mxu0 0.0
    %2462 = vmatprep.subr.mxu0 0.0
    %2463 = vmatpush2.msra.mxu0 0.0
    %2464 = vmatprep.subr.mxu0 0.0
    %2465 = vmatpush2.msra.mxu0 0.0
    %2466 = vmatprep.subr.mxu0 0.0
    %2467 = vmatpush2.msra.mxu0 0.0
    %2468 = vmatprep.subr.mxu0 0.0
    %2469 = vmatpush2.msra.mxu0 0.0
    %2470 = vmatprep.subr.mxu0 0.0
    %2471 = vmatpush2.msra.mxu0 0.0
    %2472 = vmatprep.subr.mxu0 0.0
    %2473 = vmatpush2.msra.mxu0 0.0
    %2474 = vmatprep.subr.mxu0 0.0
    %2475 = vmatpush2.msra.mxu0 0.0
    %2476 = vmatprep.subr.mxu0 0.0
    %2477 = vmatpush2.msra.mxu0 0.0
    %2478 = vmatprep.subr.mxu0 0.0
    %2479 = vmatpush2.msra.mxu0 0.0
    %2480 = vmatprep.mubr.f32.mxu0 0.0
    %2481 = vmatmul.mubr.f32.gmra.mxu0 %v2414
    %v2482 = vpop.f32.mrf.mxu0
    %v2483 = vadd.f32 0.0, %v2482
    %v2484 = vpop.f32.mrf.mxu0
    %2485 = vdwg.mxu0
    %2486 = vrot.lane.b32.xlu0 %v2227, 120
    %v2487 = vpop.permute.xlu0 %2486
    %2488 = vrot.lane.b32.xlu0 %v2308, 120
    %v2489 = vpop.permute.xlu0 %2488
    %v2490 = vsel %vm193, %v2487, 0
    %v2492 = vsel %vm193, %v2489, 0
    %2494 = vmatprep.subr.mxu0 0.0
    %2495 = vmatpush1.xpose.msra.mxu0 0.0
    %2496 = vmatprep.subr.mxu0 0.0
    %2497 = vmatpush1.xpose.msra.mxu0 0.0
    %2498 = vmatprep.subr.mxu0 0.0
    %2499 = vmatpush1.xpose.msra.mxu0 0.0
    %2500 = vmatprep.subr.mxu0 0.0
    %2501 = vmatpush1.xpose.msra.mxu0 0.0
    %2502 = vmatprep.subr.mxu0 0.0
    %2503 = vmatpush1.xpose.msra.mxu0 0.0
    %2504 = vmatprep.subr.mxu0 0.0
    %2505 = vmatpush1.xpose.msra.mxu0 0.0
    %2506 = vmatprep.subr.mxu0 0.0
    %2507 = vmatpush1.xpose.msra.mxu0 0.0
    %2508 = vmatprep.subr.mxu0 0.0
    %2509 = vmatpush1.xpose.msra.mxu0 0.0
    %2510 = vmatprep.subr.mxu0 0.0
    %2511 = vmatpush1.xpose.msra.mxu0 0.0
    %2512 = vmatprep.subr.mxu0 0.0
    %2513 = vmatpush1.xpose.msra.mxu0 0.0
    %2514 = vmatprep.subr.mxu0 0.0
    %2515 = vmatpush1.xpose.msra.mxu0 0.0
    %2516 = vmatprep.subr.mxu0 0.0
    %2517 = vmatpush1.xpose.msra.mxu0 0.0
    %2518 = vmatprep.subr.mxu0 0.0
    %2519 = vmatpush1.xpose.msra.mxu0 0.0
    %2520 = vmatprep.subr.mxu0 0.0
    %2521 = vmatpush1.xpose.msra.mxu0 0.0
    %2522 = vmatprep.subr.mxu0 0.0
    %2523 = vmatpush1.xpose.msra.mxu0 0.0
    %2524 = vmatprep.subr.mxu0 0.0
    %2525 = vmatpush1.xpose.msra.mxu0 %v2492
    %2526 = vmatprep.subr.mxu0 0.0
    %2527 = vmatpush2.xpose.msra.mxu0 0.0
    %2528 = vmatprep.subr.mxu0 0.0
    %2529 = vmatpush2.xpose.msra.mxu0 0.0
    %2530 = vmatprep.subr.mxu0 0.0
    %2531 = vmatpush2.xpose.msra.mxu0 0.0
    %2532 = vmatprep.subr.mxu0 0.0
    %2533 = vmatpush2.xpose.msra.mxu0 0.0
    %2534 = vmatprep.subr.mxu0 0.0
    %2535 = vmatpush2.xpose.msra.mxu0 0.0
    %2536 = vmatprep.subr.mxu0 0.0
    %2537 = vmatpush2.xpose.msra.mxu0 0.0
    %2538 = vmatprep.subr.mxu0 0.0
    %2539 = vmatpush2.xpose.msra.mxu0 0.0
    %2540 = vmatprep.subr.mxu0 0.0
    %2541 = vmatpush2.xpose.msra.mxu0 0.0
    %2542 = vmatprep.subr.mxu0 0.0
    %2543 = vmatpush2.xpose.msra.mxu0 0.0
    %2544 = vmatprep.subr.mxu0 0.0
    %2545 = vmatpush2.xpose.msra.mxu0 0.0
    %2546 = vmatprep.subr.mxu0 0.0
    %2547 = vmatpush2.xpose.msra.mxu0 0.0
    %2548 = vmatprep.subr.mxu0 0.0
    %2549 = vmatpush2.xpose.msra.mxu0 0.0
    %2550 = vmatprep.subr.mxu0 0.0
    %2551 = vmatpush2.xpose.msra.mxu0 0.0
    %2552 = vmatprep.subr.mxu0 0.0
    %2553 = vmatpush2.xpose.msra.mxu0 0.0
    %2554 = vmatprep.subr.mxu0 0.0
    %2555 = vmatpush2.xpose.msra.mxu0 0.0
    %2556 = vmatprep.subr.mxu0 0.0
    %2557 = vmatpush2.xpose.msra.mxu0 0.0
    %2558 = vmatprep.mubr.f32.mxu0 0.0
    %2559 = vmatmul.mubr.f32.gmra.mxu0 %v2490
    %v2560 = vpop.f32.mrf.mxu0
    %v2561 = vadd.f32 0.0, %v2560
    %v2562 = vpop.f32.mrf.mxu0
    %2563 = vdwg.mxu0
    %v2564 = vmul.f32 %v2561, 0.35355338
    %v2565 = vadd.f32 %v2564, %v2320
    %v2566 = vsel %vm193, %v2565, -inf
    %2567 = vmax.xlane.f32.xlu0 %v2566
    %v2568 = vpop.xlane.xlu0 %2567
    %v2569 = vsub.f32 %v2565, %v2568
    %v2570 = vmul.f32 %v2569, 1.442695
    %v2571 = vpow.pop %v2570
    %v2572 = vsel %vm193, %v2571, 0.0
    %2573 = vadd.xlane.f32.xlu0 %v2572
    %v2574 = vpop.xlane.xlu0 %2573
    %v2575 = vrcp.pop %v2574
    %v2576 = vmul.f32 %v2571, %v2575
    %2577 = vrot.lane.b32.xlu0 %v2308, 88
    %v2578 = vpop.permute.xlu0 %2577
    %v2581 = vsel %vm193, %v2576, 0
    %2583 = vmatprep.subr.mxu0 0.0
    %2584 = vmatpush1.msra.mxu0 0.0
    %2585 = vmatprep.subr.mxu0 0.0
    %2586 = vmatpush1.msra.mxu0 0.0
    %2587 = vmatprep.subr.mxu0 0.0
    %2588 = vmatpush1.msra.mxu0 0.0
    %2589 = vmatprep.subr.mxu0 0.0
    %2590 = vmatpush1.msra.mxu0 0.0
    %2591 = vmatprep.subr.mxu0 0.0
    %2592 = vmatpush1.msra.mxu0 0.0
    %2593 = vmatprep.subr.mxu0 0.0
    %2594 = vmatpush1.msra.mxu0 0.0
    %2595 = vmatprep.subr.mxu0 0.0
    %2596 = vmatpush1.msra.mxu0 0.0
    %2597 = vmatprep.subr.mxu0 0.0
    %2598 = vmatpush1.msra.mxu0 0.0
    %2599 = vmatprep.subr.mxu0 0.0
    %2600 = vmatpush1.msra.mxu0 0.0
    %2601 = vmatprep.subr.mxu0 0.0
    %2602 = vmatpush1.msra.mxu0 0.0
    %2603 = vmatprep.subr.mxu0 0.0
    %2604 = vmatpush1.msra.mxu0 0.0
    %2605 = vmatprep.subr.mxu0 0.0
    %2606 = vmatpush1.msra.mxu0 0.0
    %2607 = vmatprep.subr.mxu0 0.0
    %2608 = vmatpush1.msra.mxu0 0.0
    %2609 = vmatprep.subr.mxu0 0.0
    %2610 = vmatpush1.msra.mxu0 0.0
    %2611 = vmatprep.subr.mxu0 0.0
    %2612 = vmatpush1.msra.mxu0 0.0
    %2613 = vmatprep.subr.mxu0 0.0
    %2614 = vmatpush1.msra.mxu0 %v2578
    %2615 = vmatprep.subr.mxu0 0.0
    %2616 = vmatpush2.msra.mxu0 0.0
    %2617 = vmatprep.subr.mxu0 0.0
    %2618 = vmatpush2.msra.mxu0 0.0
    %2619 = vmatprep.subr.mxu0 0.0
    %2620 = vmatpush2.msra.mxu0 0.0
    %2621 = vmatprep.subr.mxu0 0.0
    %2622 = vmatpush2.msra.mxu0 0.0
    %2623 = vmatprep.subr.mxu0 0.0
    %2624 = vmatpush2.msra.mxu0 0.0
    %2625 = vmatprep.subr.mxu0 0.0
    %2626 = vmatpush2.msra.mxu0 0.0
    %2627 = vmatprep.subr.mxu0 0.0
    %2628 = vmatpush2.msra.mxu0 0.0
    %2629 = vmatprep.subr.mxu0 0.0
    %2630 = vmatpush2.msra.mxu0 0.0
    %2631 = vmatprep.subr.mxu0 0.0
    %2632 = vmatpush2.msra.mxu0 0.0
    %2633 = vmatprep.subr.mxu0 0.0
    %2634 = vmatpush2.msra.mxu0 0.0
    %2635 = vmatprep.subr.mxu0 0.0
    %2636 = vmatpush2.msra.mxu0 0.0
    %2637 = vmatprep.subr.mxu0 0.0
    %2638 = vmatpush2.msra.mxu0 0.0
    %2639 = vmatprep.subr.mxu0 0.0
    %2640 = vmatpush2.msra.mxu0 0.0
    %2641 = vmatprep.subr.mxu0 0.0
    %2642 = vmatpush2.msra.mxu0 0.0
    %2643 = vmatprep.subr.mxu0 0.0
    %2644 = vmatpush2.msra.mxu0 0.0
    %2645 = vmatprep.subr.mxu0 0.0
    %2646 = vmatpush2.msra.mxu0 0.0
    %2647 = vmatprep.mubr.f32.mxu0 0.0
    %2648 = vmatmul.mubr.f32.gmra.mxu0 %v2581
    %v2649 = vpop.f32.mrf.mxu0
    %v2650 = vadd.f32 0.0, %v2649
    %v2651 = vpop.f32.mrf.mxu0
    %2652 = vdwg.mxu0
    %v2654 = vsel %vm193, %v2650, 0
    %2656 = vmatprep.subr.mxu0 0.0
    %2657 = vmatpush1.msra.mxu0 0.0
    %2658 = vmatprep.subr.mxu0 0.0
    %2659 = vmatpush1.msra.mxu0 0.0
    %2660 = vmatprep.subr.mxu0 0.0
    %2661 = vmatpush1.msra.mxu0 0.0
    %2662 = vmatprep.subr.mxu0 0.0
    %2663 = vmatpush1.msra.mxu0 0.0
    %2664 = vmatprep.subr.mxu0 0.0
    %2665 = vmatpush1.msra.mxu0 0.0
    %2666 = vmatprep.subr.mxu0 0.0
    %2667 = vmatpush1.msra.mxu0 0.0
    %2668 = vmatprep.subr.mxu0 0.0
    %2669 = vmatpush1.msra.mxu0 0.0
    %2670 = vmatprep.subr.mxu0 0.0
    %2671 = vmatpush1.msra.mxu0 0.0
    %2672 = vmatprep.subr.mxu0 0.0
    %2673 = vmatpush1.msra.mxu0 0.0
    %2674 = vmatprep.subr.mxu0 0.0
    %2675 = vmatpush1.msra.mxu0 0.0
    %2676 = vmatprep.subr.mxu0 0.0
    %2677 = vmatpush1.msra.mxu0 0.0
    %2678 = vmatprep.subr.mxu0 0.0
    %2679 = vmatpush1.msra.mxu0 0.0
    %2680 = vmatprep.subr.mxu0 0.0
    %2681 = vmatpush1.msra.mxu0 0.0
    %2682 = vmatprep.subr.mxu0 0.0
    %2683 = vmatpush1.msra.mxu0 0.0
    %2684 = vmatprep.subr.mxu0 0.0
    %2685 = vmatpush1.msra.mxu0 0.0
    %2686 = vmatprep.subr.mxu0 0.0
    %2687 = vmatpush1.msra.mxu0 %v78
    %2688 = vmatprep.subr.mxu0 0.0
    %2689 = vmatpush2.msra.mxu0 0.0
    %2690 = vmatprep.subr.mxu0 0.0
    %2691 = vmatpush2.msra.mxu0 0.0
    %2692 = vmatprep.subr.mxu0 0.0
    %2693 = vmatpush2.msra.mxu0 0.0
    %2694 = vmatprep.subr.mxu0 0.0
    %2695 = vmatpush2.msra.mxu0 0.0
    %2696 = vmatprep.subr.mxu0 0.0
    %2697 = vmatpush2.msra.mxu0 0.0
    %2698 = vmatprep.subr.mxu0 0.0
    %2699 = vmatpush2.msra.mxu0 0.0
    %2700 = vmatprep.subr.mxu0 0.0
    %2701 = vmatpush2.msra.mxu0 0.0
    %2702 = vmatprep.subr.mxu0 0.0
    %2703 = vmatpush2.msra.mxu0 0.0
    %2704 = vmatprep.subr.mxu0 0.0
    %2705 = vmatpush2.msra.mxu0 0.0
    %2706 = vmatprep.subr.mxu0 0.0
    %2707 = vmatpush2.msra.mxu0 0.0
    %2708 = vmatprep.subr.mxu0 0.0
    %2709 = vmatpush2.msra.mxu0 0.0
    %2710 = vmatprep.subr.mxu0 0.0
    %2711 = vmatpush2.msra.mxu0 0.0
    %2712 = vmatprep.subr.mxu0 0.0
    %2713 = vmatpush2.msra.mxu0 0.0
    %2714 = vmatprep.subr.mxu0 0.0
    %2715 = vmatpush2.msra.mxu0 0.0
    %2716 = vmatprep.subr.mxu0 0.0
    %2717 = vmatpush2.msra.mxu0 0.0
    %2718 = vmatprep.subr.mxu0 0.0
    %2719 = vmatpush2.msra.mxu0 0.0
    %2720 = vmatprep.mubr.f32.mxu0 0.0
    %2721 = vmatmul.mubr.f32.gmra.mxu0 %v2654
    %v2722 = vpop.f32.mrf.mxu0
    %v2723 = vadd.f32 0.0, %v2722
    %v2724 = vpop.f32.mrf.mxu0
    %2725 = vdwg.mxu0
    %v2727 = vsel %vm193, %v2483, 0
    %2729 = vmatprep.subr.mxu0 0.0
    %2730 = vmatpush1.msra.mxu0 0.0
    %2731 = vmatprep.subr.mxu0 0.0
    %2732 = vmatpush1.msra.mxu0 0.0
    %2733 = vmatprep.subr.mxu0 0.0
    %2734 = vmatpush1.msra.mxu0 0.0
    %2735 = vmatprep.subr.mxu0 0.0
    %2736 = vmatpush1.msra.mxu0 0.0
    %2737 = vmatprep.subr.mxu0 0.0
    %2738 = vmatpush1.msra.mxu0 0.0
    %2739 = vmatprep.subr.mxu0 0.0
    %2740 = vmatpush1.msra.mxu0 0.0
    %2741 = vmatprep.subr.mxu0 0.0
    %2742 = vmatpush1.msra.mxu0 0.0
    %2743 = vmatprep.subr.mxu0 0.0
    %2744 = vmatpush1.msra.mxu0 0.0
    %2745 = vmatprep.subr.mxu0 0.0
    %2746 = vmatpush1.msra.mxu0 0.0
    %2747 = vmatprep.subr.mxu0 0.0
    %2748 = vmatpush1.msra.mxu0 0.0
    %2749 = vmatprep.subr.mxu0 0.0
    %2750 = vmatpush1.msra.mxu0 0.0
    %2751 = vmatprep.subr.mxu0 0.0
    %2752 = vmatpush1.msra.mxu0 0.0
    %2753 = vmatprep.subr.mxu0 0.0
    %2754 = vmatpush1.msra.mxu0 0.0
    %2755 = vmatprep.subr.mxu0 0.0
    %2756 = vmatpush1.msra.mxu0 0.0
    %2757 = vmatprep.subr.mxu0 0.0
    %2758 = vmatpush1.msra.mxu0 0.0
    %2759 = vmatprep.subr.mxu0 0.0
    %2760 = vmatpush1.msra.mxu0 %v77
    %2761 = vmatprep.subr.mxu0 0.0
    %2762 = vmatpush2.msra.mxu0 0.0
    %2763 = vmatprep.subr.mxu0 0.0
    %2764 = vmatpush2.msra.mxu0 0.0
    %2765 = vmatprep.subr.mxu0 0.0
    %2766 = vmatpush2.msra.mxu0 0.0
    %2767 = vmatprep.subr.mxu0 0.0
    %2768 = vmatpush2.msra.mxu0 0.0
    %2769 = vmatprep.subr.mxu0 0.0
    %2770 = vmatpush2.msra.mxu0 0.0
    %2771 = vmatprep.subr.mxu0 0.0
    %2772 = vmatpush2.msra.mxu0 0.0
    %2773 = vmatprep.subr.mxu0 0.0
    %2774 = vmatpush2.msra.mxu0 0.0
    %2775 = vmatprep.subr.mxu0 0.0
    %2776 = vmatpush2.msra.mxu0 0.0
    %2777 = vmatprep.subr.mxu0 0.0
    %2778 = vmatpush2.msra.mxu0 0.0
    %2779 = vmatprep.subr.mxu0 0.0
    %2780 = vmatpush2.msra.mxu0 0.0
    %2781 = vmatprep.subr.mxu0 0.0
    %2782 = vmatpush2.msra.mxu0 0.0
    %2783 = vmatprep.subr.mxu0 0.0
    %2784 = vmatpush2.msra.mxu0 0.0
    %2785 = vmatprep.subr.mxu0 0.0
    %2786 = vmatpush2.msra.mxu0 0.0
    %2787 = vmatprep.subr.mxu0 0.0
    %2788 = vmatpush2.msra.mxu0 0.0
    %2789 = vmatprep.subr.mxu0 0.0
    %2790 = vmatpush2.msra.mxu0 0.0
    %2791 = vmatprep.subr.mxu0 0.0
    %2792 = vmatpush2.msra.mxu0 0.0
    %2793 = vmatprep.mubr.f32.mxu0 0.0
    %2794 = vmatmul.mubr.f32.gmra.mxu0 %v2727
    %v2795 = vpop.f32.mrf.mxu0
    %v2796 = vadd.f32 %v2723, %v2795
    %v2797 = vpop.f32.mrf.mxu0
    %2798 = vdwg.mxu0
    %2799 = vrot.lane.b32.xlu0 %v2227, 112
    %v2800 = vpop.permute.xlu0 %2799
    %2801 = vrot.lane.b32.xlu0 %v2308, 112
    %v2802 = vpop.permute.xlu0 %2801
    %v2803 = vsel %vm193, %v2800, 0
    %v2805 = vsel %vm193, %v2802, 0
    %2807 = vmatprep.subr.mxu0 0.0
    %2808 = vmatpush1.xpose.msra.mxu0 0.0
    %2809 = vmatprep.subr.mxu0 0.0
    %2810 = vmatpush1.xpose.msra.mxu0 0.0
    %2811 = vmatprep.subr.mxu0 0.0
    %2812 = vmatpush1.xpose.msra.mxu0 0.0
    %2813 = vmatprep.subr.mxu0 0.0
    %2814 = vmatpush1.xpose.msra.mxu0 0.0
    %2815 = vmatprep.subr.mxu0 0.0
    %2816 = vmatpush1.xpose.msra.mxu0 0.0
    %2817 = vmatprep.subr.mxu0 0.0
    %2818 = vmatpush1.xpose.msra.mxu0 0.0
    %2819 = vmatprep.subr.mxu0 0.0
    %2820 = vmatpush1.xpose.msra.mxu0 0.0
    %2821 = vmatprep.subr.mxu0 0.0
    %2822 = vmatpush1.xpose.msra.mxu0 0.0
    %2823 = vmatprep.subr.mxu0 0.0
    %2824 = vmatpush1.xpose.msra.mxu0 0.0
    %2825 = vmatprep.subr.mxu0 0.0
    %2826 = vmatpush1.xpose.msra.mxu0 0.0
    %2827 = vmatprep.subr.mxu0 0.0
    %2828 = vmatpush1.xpose.msra.mxu0 0.0
    %2829 = vmatprep.subr.mxu0 0.0
    %2830 = vmatpush1.xpose.msra.mxu0 0.0
    %2831 = vmatprep.subr.mxu0 0.0
    %2832 = vmatpush1.xpose.msra.mxu0 0.0
    %2833 = vmatprep.subr.mxu0 0.0
    %2834 = vmatpush1.xpose.msra.mxu0 0.0
    %2835 = vmatprep.subr.mxu0 0.0
    %2836 = vmatpush1.xpose.msra.mxu0 0.0
    %2837 = vmatprep.subr.mxu0 0.0
    %2838 = vmatpush1.xpose.msra.mxu0 %v2805
    %2839 = vmatprep.subr.mxu0 0.0
    %2840 = vmatpush2.xpose.msra.mxu0 0.0
    %2841 = vmatprep.subr.mxu0 0.0
    %2842 = vmatpush2.xpose.msra.mxu0 0.0
    %2843 = vmatprep.subr.mxu0 0.0
    %2844 = vmatpush2.xpose.msra.mxu0 0.0
    %2845 = vmatprep.subr.mxu0 0.0
    %2846 = vmatpush2.xpose.msra.mxu0 0.0
    %2847 = vmatprep.subr.mxu0 0.0
    %2848 = vmatpush2.xpose.msra.mxu0 0.0
    %2849 = vmatprep.subr.mxu0 0.0
    %2850 = vmatpush2.xpose.msra.mxu0 0.0
    %2851 = vmatprep.subr.mxu0 0.0
    %2852 = vmatpush2.xpose.msra.mxu0 0.0
    %2853 = vmatprep.subr.mxu0 0.0
    %2854 = vmatpush2.xpose.msra.mxu0 0.0
    %2855 = vmatprep.subr.mxu0 0.0
    %2856 = vmatpush2.xpose.msra.mxu0 0.0
    %2857 = vmatprep.subr.mxu0 0.0
    %2858 = vmatpush2.xpose.msra.mxu0 0.0
    %2859 = vmatprep.subr.mxu0 0.0
    %2860 = vmatpush2.xpose.msra.mxu0 0.0
    %2861 = vmatprep.subr.mxu0 0.0
    %2862 = vmatpush2.xpose.msra.mxu0 0.0
    %2863 = vmatprep.subr.mxu0 0.0
    %2864 = vmatpush2.xpose.msra.mxu0 0.0
    %2865 = vmatprep.subr.mxu0 0.0
    %2866 = vmatpush2.xpose.msra.mxu0 0.0
    %2867 = vmatprep.subr.mxu0 0.0
    %2868 = vmatpush2.xpose.msra.mxu0 0.0
    %2869 = vmatprep.subr.mxu0 0.0
    %2870 = vmatpush2.xpose.msra.mxu0 0.0
    %2871 = vmatprep.mubr.f32.mxu0 0.0
    %2872 = vmatmul.mubr.f32.gmra.mxu0 %v2803
    %v2873 = vpop.f32.mrf.mxu0
    %v2874 = vadd.f32 0.0, %v2873
    %v2875 = vpop.f32.mrf.mxu0
    %2876 = vdwg.mxu0
    %v2877 = vmul.f32 %v2874, 0.35355338
    %v2878 = vadd.f32 %v2877, %v2320
    %v2879 = vsel %vm193, %v2878, -inf
    %2880 = vmax.xlane.f32.xlu0 %v2879
    %v2881 = vpop.xlane.xlu0 %2880
    %v2882 = vsub.f32 %v2878, %v2881
    %v2883 = vmul.f32 %v2882, 1.442695
    %v2884 = vpow.pop %v2883
    %v2885 = vsel %vm193, %v2884, 0.0
    %2886 = vadd.xlane.f32.xlu0 %v2885
    %v2887 = vpop.xlane.xlu0 %2886
    %v2888 = vrcp.pop %v2887
    %v2889 = vmul.f32 %v2884, %v2888
    %2890 = vrot.lane.b32.xlu0 %v2308, 80
    %v2891 = vpop.permute.xlu0 %2890
    %v2894 = vsel %vm193, %v2889, 0
    %2896 = vmatprep.subr.mxu0 0.0
    %2897 = vmatpush1.msra.mxu0 0.0
    %2898 = vmatprep.subr.mxu0 0.0
    %2899 = vmatpush1.msra.mxu0 0.0
    %2900 = vmatprep.subr.mxu0 0.0
    %2901 = vmatpush1.msra.mxu0 0.0
    %2902 = vmatprep.subr.mxu0 0.0
    %2903 = vmatpush1.msra.mxu0 0.0
    %2904 = vmatprep.subr.mxu0 0.0
    %2905 = vmatpush1.msra.mxu0 0.0
    %2906 = vmatprep.subr.mxu0 0.0
    %2907 = vmatpush1.msra.mxu0 0.0
    %2908 = vmatprep.subr.mxu0 0.0
    %2909 = vmatpush1.msra.mxu0 0.0
    %2910 = vmatprep.subr.mxu0 0.0
    %2911 = vmatpush1.msra.mxu0 0.0
    %2912 = vmatprep.subr.mxu0 0.0
    %2913 = vmatpush1.msra.mxu0 0.0
    %2914 = vmatprep.subr.mxu0 0.0
    %2915 = vmatpush1.msra.mxu0 0.0
    %2916 = vmatprep.subr.mxu0 0.0
    %2917 = vmatpush1.msra.mxu0 0.0
    %2918 = vmatprep.subr.mxu0 0.0
    %2919 = vmatpush1.msra.mxu0 0.0
    %2920 = vmatprep.subr.mxu0 0.0
    %2921 = vmatpush1.msra.mxu0 0.0
    %2922 = vmatprep.subr.mxu0 0.0
    %2923 = vmatpush1.msra.mxu0 0.0
    %2924 = vmatprep.subr.mxu0 0.0
    %2925 = vmatpush1.msra.mxu0 0.0
    %2926 = vmatprep.subr.mxu0 0.0
    %2927 = vmatpush1.msra.mxu0 %v2891
    %2928 = vmatprep.subr.mxu0 0.0
    %2929 = vmatpush2.msra.mxu0 0.0
    %2930 = vmatprep.subr.mxu0 0.0
    %2931 = vmatpush2.msra.mxu0 0.0
    %2932 = vmatprep.subr.mxu0 0.0
    %2933 = vmatpush2.msra.mxu0 0.0
    %2934 = vmatprep.subr.mxu0 0.0
    %2935 = vmatpush2.msra.mxu0 0.0
    %2936 = vmatprep.subr.mxu0 0.0
    %2937 = vmatpush2.msra.mxu0 0.0
    %2938 = vmatprep.subr.mxu0 0.0
    %2939 = vmatpush2.msra.mxu0 0.0
    %2940 = vmatprep.subr.mxu0 0.0
    %2941 = vmatpush2.msra.mxu0 0.0
    %2942 = vmatprep.subr.mxu0 0.0
    %2943 = vmatpush2.msra.mxu0 0.0
    %2944 = vmatprep.subr.mxu0 0.0
    %2945 = vmatpush2.msra.mxu0 0.0
    %2946 = vmatprep.subr.mxu0 0.0
    %2947 = vmatpush2.msra.mxu0 0.0
    %2948 = vmatprep.subr.mxu0 0.0
    %2949 = vmatpush2.msra.mxu0 0.0
    %2950 = vmatprep.subr.mxu0 0.0
    %2951 = vmatpush2.msra.mxu0 0.0
    %2952 = vmatprep.subr.mxu0 0.0
    %2953 = vmatpush2.msra.mxu0 0.0
    %2954 = vmatprep.subr.mxu0 0.0
    %2955 = vmatpush2.msra.mxu0 0.0
    %2956 = vmatprep.subr.mxu0 0.0
    %2957 = vmatpush2.msra.mxu0 0.0
    %2958 = vmatprep.subr.mxu0 0.0
    %2959 = vmatpush2.msra.mxu0 0.0
    %2960 = vmatprep.mubr.f32.mxu0 0.0
    %2961 = vmatmul.mubr.f32.gmra.mxu0 %v2894
    %v2962 = vpop.f32.mrf.mxu0
    %v2963 = vadd.f32 0.0, %v2962
    %v2964 = vpop.f32.mrf.mxu0
    %2965 = vdwg.mxu0
    %v2967 = vsel %vm193, %v2963, 0
    %2969 = vmatprep.subr.mxu0 0.0
    %2970 = vmatpush1.msra.mxu0 0.0
    %2971 = vmatprep.subr.mxu0 0.0
    %2972 = vmatpush1.msra.mxu0 0.0
    %2973 = vmatprep.subr.mxu0 0.0
    %2974 = vmatpush1.msra.mxu0 0.0
    %2975 = vmatprep.subr.mxu0 0.0
    %2976 = vmatpush1.msra.mxu0 0.0
    %2977 = vmatprep.subr.mxu0 0.0
    %2978 = vmatpush1.msra.mxu0 0.0
    %2979 = vmatprep.subr.mxu0 0.0
    %2980 = vmatpush1.msra.mxu0 0.0
    %2981 = vmatprep.subr.mxu0 0.0
    %2982 = vmatpush1.msra.mxu0 0.0
    %2983 = vmatprep.subr.mxu0 0.0
    %2984 = vmatpush1.msra.mxu0 0.0
    %2985 = vmatprep.subr.mxu0 0.0
    %2986 = vmatpush1.msra.mxu0 0.0
    %2987 = vmatprep.subr.mxu0 0.0
    %2988 = vmatpush1.msra.mxu0 0.0
    %2989 = vmatprep.subr.mxu0 0.0
    %2990 = vmatpush1.msra.mxu0 0.0
    %2991 = vmatprep.subr.mxu0 0.0
    %2992 = vmatpush1.msra.mxu0 0.0
    %2993 = vmatprep.subr.mxu0 0.0
    %2994 = vmatpush1.msra.mxu0 0.0
    %2995 = vmatprep.subr.mxu0 0.0
    %2996 = vmatpush1.msra.mxu0 0.0
    %2997 = vmatprep.subr.mxu0 0.0
    %2998 = vmatpush1.msra.mxu0 0.0
    %2999 = vmatprep.subr.mxu0 0.0
    %3000 = vmatpush1.msra.mxu0 %v79
    %3001 = vmatprep.subr.mxu0 0.0
    %3002 = vmatpush2.msra.mxu0 0.0
    %3003 = vmatprep.subr.mxu0 0.0
    %3004 = vmatpush2.msra.mxu0 0.0
    %3005 = vmatprep.subr.mxu0 0.0
    %3006 = vmatpush2.msra.mxu0 0.0
    %3007 = vmatprep.subr.mxu0 0.0
    %3008 = vmatpush2.msra.mxu0 0.0
    %3009 = vmatprep.subr.mxu0 0.0
    %3010 = vmatpush2.msra.mxu0 0.0
    %3011 = vmatprep.subr.mxu0 0.0
    %3012 = vmatpush2.msra.mxu0 0.0
    %3013 = vmatprep.subr.mxu0 0.0
    %3014 = vmatpush2.msra.mxu0 0.0
    %3015 = vmatprep.subr.mxu0 0.0
    %3016 = vmatpush2.msra.mxu0 0.0
    %3017 = vmatprep.subr.mxu0 0.0
    %3018 = vmatpush2.msra.mxu0 0.0
    %3019 = vmatprep.subr.mxu0 0.0
    %3020 = vmatpush2.msra.mxu0 0.0
    %3021 = vmatprep.subr.mxu0 0.0
    %3022 = vmatpush2.msra.mxu0 0.0
    %3023 = vmatprep.subr.mxu0 0.0
    %3024 = vmatpush2.msra.mxu0 0.0
    %3025 = vmatprep.subr.mxu0 0.0
    %3026 = vmatpush2.msra.mxu0 0.0
    %3027 = vmatprep.subr.mxu0 0.0
    %3028 = vmatpush2.msra.mxu0 0.0
    %3029 = vmatprep.subr.mxu0 0.0
    %3030 = vmatpush2.msra.mxu0 0.0
    %3031 = vmatprep.subr.mxu0 0.0
    %3032 = vmatpush2.msra.mxu0 0.0
    %3033 = vmatprep.mubr.f32.mxu0 0.0
    %3034 = vmatmul.mubr.f32.gmra.mxu0 %v2967
    %v3035 = vpop.f32.mrf.mxu0
    %v3036 = vadd.f32 0.0, %v3035
    %v3037 = vpop.f32.mrf.mxu0
    %3038 = vdwg.mxu0
    %v3039 = vadd.f32 %v2796, %v3036
    %3040 = vrot.lane.b32.xlu0 %v2227, 104
    %v3041 = vpop.permute.xlu0 %3040
    %3042 = vrot.lane.b32.xlu0 %v2308, 104
    %v3043 = vpop.permute.xlu0 %3042
    %v3044 = vsel %vm193, %v3041, 0
    %v3046 = vsel %vm193, %v3043, 0
    %3048 = vmatprep.subr.mxu0 0.0
    %3049 = vmatpush1.xpose.msra.mxu0 0.0
    %3050 = vmatprep.subr.mxu0 0.0
    %3051 = vmatpush1.xpose.msra.mxu0 0.0
    %3052 = vmatprep.subr.mxu0 0.0
    %3053 = vmatpush1.xpose.msra.mxu0 0.0
    %3054 = vmatprep.subr.mxu0 0.0
    %3055 = vmatpush1.xpose.msra.mxu0 0.0
    %3056 = vmatprep.subr.mxu0 0.0
    %3057 = vmatpush1.xpose.msra.mxu0 0.0
    %3058 = vmatprep.subr.mxu0 0.0
    %3059 = vmatpush1.xpose.msra.mxu0 0.0
    %3060 = vmatprep.subr.mxu0 0.0
    %3061 = vmatpush1.xpose.msra.mxu0 0.0
    %3062 = vmatprep.subr.mxu0 0.0
    %3063 = vmatpush1.xpose.msra.mxu0 0.0
    %3064 = vmatprep.subr.mxu0 0.0
    %3065 = vmatpush1.xpose.msra.mxu0 0.0
    %3066 = vmatprep.subr.mxu0 0.0
    %3067 = vmatpush1.xpose.msra.mxu0 0.0
    %3068 = vmatprep.subr.mxu0 0.0
    %3069 = vmatpush1.xpose.msra.mxu0 0.0
    %3070 = vmatprep.subr.mxu0 0.0
    %3071 = vmatpush1.xpose.msra.mxu0 0.0
    %3072 = vmatprep.subr.mxu0 0.0
    %3073 = vmatpush1.xpose.msra.mxu0 0.0
    %3074 = vmatprep.subr.mxu0 0.0
    %3075 = vmatpush1.xpose.msra.mxu0 0.0
    %3076 = vmatprep.subr.mxu0 0.0
    %3077 = vmatpush1.xpose.msra.mxu0 0.0
    %3078 = vmatprep.subr.mxu0 0.0
    %3079 = vmatpush1.xpose.msra.mxu0 %v3046
    %3080 = vmatprep.subr.mxu0 0.0
    %3081 = vmatpush2.xpose.msra.mxu0 0.0
    %3082 = vmatprep.subr.mxu0 0.0
    %3083 = vmatpush2.xpose.msra.mxu0 0.0
    %3084 = vmatprep.subr.mxu0 0.0
    %3085 = vmatpush2.xpose.msra.mxu0 0.0
    %3086 = vmatprep.subr.mxu0 0.0
    %3087 = vmatpush2.xpose.msra.mxu0 0.0
    %3088 = vmatprep.subr.mxu0 0.0
    %3089 = vmatpush2.xpose.msra.mxu0 0.0
    %3090 = vmatprep.subr.mxu0 0.0
    %3091 = vmatpush2.xpose.msra.mxu0 0.0
    %3092 = vmatprep.subr.mxu0 0.0
    %3093 = vmatpush2.xpose.msra.mxu0 0.0
    %3094 = vmatprep.subr.mxu0 0.0
    %3095 = vmatpush2.xpose.msra.mxu0 0.0
    %3096 = vmatprep.subr.mxu0 0.0
    %3097 = vmatpush2.xpose.msra.mxu0 0.0
    %3098 = vmatprep.subr.mxu0 0.0
    %3099 = vmatpush2.xpose.msra.mxu0 0.0
    %3100 = vmatprep.subr.mxu0 0.0
    %3101 = vmatpush2.xpose.msra.mxu0 0.0
    %3102 = vmatprep.subr.mxu0 0.0
    %3103 = vmatpush2.xpose.msra.mxu0 0.0
    %3104 = vmatprep.subr.mxu0 0.0
    %3105 = vmatpush2.xpose.msra.mxu0 0.0
    %3106 = vmatprep.subr.mxu0 0.0
    %3107 = vmatpush2.xpose.msra.mxu0 0.0
    %3108 = vmatprep.subr.mxu0 0.0
    %3109 = vmatpush2.xpose.msra.mxu0 0.0
    %3110 = vmatprep.subr.mxu0 0.0
    %3111 = vmatpush2.xpose.msra.mxu0 0.0
    %3112 = vmatprep.mubr.f32.mxu0 0.0
    %3113 = vmatmul.mubr.f32.gmra.mxu0 %v3044
    %v3114 = vpop.f32.mrf.mxu0
    %v3115 = vadd.f32 0.0, %v3114
    %v3116 = vpop.f32.mrf.mxu0
    %3117 = vdwg.mxu0
    %v3118 = vmul.f32 %v3115, 0.35355338
    %v3119 = vadd.f32 %v3118, %v2320
    %v3120 = vsel %vm193, %v3119, -inf
    %3121 = vmax.xlane.f32.xlu0 %v3120
    %v3122 = vpop.xlane.xlu0 %3121
    %v3123 = vsub.f32 %v3119, %v3122
    %v3124 = vmul.f32 %v3123, 1.442695
    %v3125 = vpow.pop %v3124
    %v3126 = vsel %vm193, %v3125, 0.0
    %3127 = vadd.xlane.f32.xlu0 %v3126
    %v3128 = vpop.xlane.xlu0 %3127
    %v3129 = vrcp.pop %v3128
    %v3130 = vmul.f32 %v3125, %v3129
    %3131 = vrot.lane.b32.xlu0 %v2308, 72
    %v3132 = vpop.permute.xlu0 %3131
    %v3135 = vsel %vm193, %v3130, 0
    %3137 = vmatprep.subr.mxu0 0.0
    %3138 = vmatpush1.msra.mxu0 0.0
    %3139 = vmatprep.subr.mxu0 0.0
    %3140 = vmatpush1.msra.mxu0 0.0
    %3141 = vmatprep.subr.mxu0 0.0
    %3142 = vmatpush1.msra.mxu0 0.0
    %3143 = vmatprep.subr.mxu0 0.0
    %3144 = vmatpush1.msra.mxu0 0.0
    %3145 = vmatprep.subr.mxu0 0.0
    %3146 = vmatpush1.msra.mxu0 0.0
    %3147 = vmatprep.subr.mxu0 0.0
    %3148 = vmatpush1.msra.mxu0 0.0
    %3149 = vmatprep.subr.mxu0 0.0
    %3150 = vmatpush1.msra.mxu0 0.0
    %3151 = vmatprep.subr.mxu0 0.0
    %3152 = vmatpush1.msra.mxu0 0.0
    %3153 = vmatprep.subr.mxu0 0.0
    %3154 = vmatpush1.msra.mxu0 0.0
    %3155 = vmatprep.subr.mxu0 0.0
    %3156 = vmatpush1.msra.mxu0 0.0
    %3157 = vmatprep.subr.mxu0 0.0
    %3158 = vmatpush1.msra.mxu0 0.0
    %3159 = vmatprep.subr.mxu0 0.0
    %3160 = vmatpush1.msra.mxu0 0.0
    %3161 = vmatprep.subr.mxu0 0.0
    %3162 = vmatpush1.msra.mxu0 0.0
    %3163 = vmatprep.subr.mxu0 0.0
    %3164 = vmatpush1.msra.mxu0 0.0
    %3165 = vmatprep.subr.mxu0 0.0
    %3166 = vmatpush1.msra.mxu0 0.0
    %3167 = vmatprep.subr.mxu0 0.0
    %3168 = vmatpush1.msra.mxu0 %v3132
    %3169 = vmatprep.subr.mxu0 0.0
    %3170 = vmatpush2.msra.mxu0 0.0
    %3171 = vmatprep.subr.mxu0 0.0
    %3172 = vmatpush2.msra.mxu0 0.0
    %3173 = vmatprep.subr.mxu0 0.0
    %3174 = vmatpush2.msra.mxu0 0.0
    %3175 = vmatprep.subr.mxu0 0.0
    %3176 = vmatpush2.msra.mxu0 0.0
    %3177 = vmatprep.subr.mxu0 0.0
    %3178 = vmatpush2.msra.mxu0 0.0
    %3179 = vmatprep.subr.mxu0 0.0
    %3180 = vmatpush2.msra.mxu0 0.0
    %3181 = vmatprep.subr.mxu0 0.0
    %3182 = vmatpush2.msra.mxu0 0.0
    %3183 = vmatprep.subr.mxu0 0.0
    %3184 = vmatpush2.msra.mxu0 0.0
    %3185 = vmatprep.subr.mxu0 0.0
    %3186 = vmatpush2.msra.mxu0 0.0
    %3187 = vmatprep.subr.mxu0 0.0
    %3188 = vmatpush2.msra.mxu0 0.0
    %3189 = vmatprep.subr.mxu0 0.0
    %3190 = vmatpush2.msra.mxu0 0.0
    %3191 = vmatprep.subr.mxu0 0.0
    %3192 = vmatpush2.msra.mxu0 0.0
    %3193 = vmatprep.subr.mxu0 0.0
    %3194 = vmatpush2.msra.mxu0 0.0
    %3195 = vmatprep.subr.mxu0 0.0
    %3196 = vmatpush2.msra.mxu0 0.0
    %3197 = vmatprep.subr.mxu0 0.0
    %3198 = vmatpush2.msra.mxu0 0.0
    %3199 = vmatprep.subr.mxu0 0.0
    %3200 = vmatpush2.msra.mxu0 0.0
    %3201 = vmatprep.mubr.f32.mxu0 0.0
    %3202 = vmatmul.mubr.f32.gmra.mxu0 %v3135
    %v3203 = vpop.f32.mrf.mxu0
    %v3204 = vadd.f32 0.0, %v3203
    %v3205 = vpop.f32.mrf.mxu0
    %3206 = vdwg.mxu0
    %v3208 = vsel %vm193, %v3204, 0
    %3210 = vmatprep.subr.mxu0 0.0
    %3211 = vmatpush1.msra.mxu0 0.0
    %3212 = vmatprep.subr.mxu0 0.0
    %3213 = vmatpush1.msra.mxu0 0.0
    %3214 = vmatprep.subr.mxu0 0.0
    %3215 = vmatpush1.msra.mxu0 0.0
    %3216 = vmatprep.subr.mxu0 0.0
    %3217 = vmatpush1.msra.mxu0 0.0
    %3218 = vmatprep.subr.mxu0 0.0
    %3219 = vmatpush1.msra.mxu0 0.0
    %3220 = vmatprep.subr.mxu0 0.0
    %3221 = vmatpush1.msra.mxu0 0.0
    %3222 = vmatprep.subr.mxu0 0.0
    %3223 = vmatpush1.msra.mxu0 0.0
    %3224 = vmatprep.subr.mxu0 0.0
    %3225 = vmatpush1.msra.mxu0 0.0
    %3226 = vmatprep.subr.mxu0 0.0
    %3227 = vmatpush1.msra.mxu0 0.0
    %3228 = vmatprep.subr.mxu0 0.0
    %3229 = vmatpush1.msra.mxu0 0.0
    %3230 = vmatprep.subr.mxu0 0.0
    %3231 = vmatpush1.msra.mxu0 0.0
    %3232 = vmatprep.subr.mxu0 0.0
    %3233 = vmatpush1.msra.mxu0 0.0
    %3234 = vmatprep.subr.mxu0 0.0
    %3235 = vmatpush1.msra.mxu0 0.0
    %3236 = vmatprep.subr.mxu0 0.0
    %3237 = vmatpush1.msra.mxu0 0.0
    %3238 = vmatprep.subr.mxu0 0.0
    %3239 = vmatpush1.msra.mxu0 0.0
    %3240 = vmatprep.subr.mxu0 0.0
    %3241 = vmatpush1.msra.mxu0 %v80
    %3242 = vmatprep.subr.mxu0 0.0
    %3243 = vmatpush2.msra.mxu0 0.0
    %3244 = vmatprep.subr.mxu0 0.0
    %3245 = vmatpush2.msra.mxu0 0.0
    %3246 = vmatprep.subr.mxu0 0.0
    %3247 = vmatpush2.msra.mxu0 0.0
    %3248 = vmatprep.subr.mxu0 0.0
    %3249 = vmatpush2.msra.mxu0 0.0
    %3250 = vmatprep.subr.mxu0 0.0
    %3251 = vmatpush2.msra.mxu0 0.0
    %3252 = vmatprep.subr.mxu0 0.0
    %3253 = vmatpush2.msra.mxu0 0.0
    %3254 = vmatprep.subr.mxu0 0.0
    %3255 = vmatpush2.msra.mxu0 0.0
    %3256 = vmatprep.subr.mxu0 0.0
    %3257 = vmatpush2.msra.mxu0 0.0
    %3258 = vmatprep.subr.mxu0 0.0
    %3259 = vmatpush2.msra.mxu0 0.0
    %3260 = vmatprep.subr.mxu0 0.0
    %3261 = vmatpush2.msra.mxu0 0.0
    %3262 = vmatprep.subr.mxu0 0.0
    %3263 = vmatpush2.msra.mxu0 0.0
    %3264 = vmatprep.subr.mxu0 0.0
    %3265 = vmatpush2.msra.mxu0 0.0
    %3266 = vmatprep.subr.mxu0 0.0
    %3267 = vmatpush2.msra.mxu0 0.0
    %3268 = vmatprep.subr.mxu0 0.0
    %3269 = vmatpush2.msra.mxu0 0.0
    %3270 = vmatprep.subr.mxu0 0.0
    %3271 = vmatpush2.msra.mxu0 0.0
    %3272 = vmatprep.subr.mxu0 0.0
    %3273 = vmatpush2.msra.mxu0 0.0
    %3274 = vmatprep.mubr.f32.mxu0 0.0
    %3275 = vmatmul.mubr.f32.gmra.mxu0 %v3208
    %v3276 = vpop.f32.mrf.mxu0
    %v3277 = vadd.f32 0.0, %v3276
    %v3278 = vpop.f32.mrf.mxu0
    %3279 = vdwg.mxu0
    %v3280 = vadd.f32 %v3039, %v3277
    %s3281 = sadd.s32 %s2316, 1
    %s3282 = sld [smem:[#allocation3 + %s3281]]
    %v3283 = vstv %s3282
    %vm3284 = vcmp.lt.s32.totalorder %v101, %v3283
    %v3285 = vsel %vm3284, 0.0, -1000000.0
    %v3287 = vsel %vm193, %v2232, 0
    %v3290 = vsel %vm193, %v2313, 0
    %3292 = vmatprep.subr.mxu0 0.0
    %3293 = vmatpush1.xpose.msra.mxu0 0.0
    %3294 = vmatprep.subr.mxu0 0.0
    %3295 = vmatpush1.xpose.msra.mxu0 0.0
    %3296 = vmatprep.subr.mxu0 0.0
    %3297 = vmatpush1.xpose.msra.mxu0 0.0
    %3298 = vmatprep.subr.mxu0 0.0
    %3299 = vmatpush1.xpose.msra.mxu0 0.0
    %3300 = vmatprep.subr.mxu0 0.0
    %3301 = vmatpush1.xpose.msra.mxu0 0.0
    %3302 = vmatprep.subr.mxu0 0.0
    %3303 = vmatpush1.xpose.msra.mxu0 0.0
    %3304 = vmatprep.subr.mxu0 0.0
    %3305 = vmatpush1.xpose.msra.mxu0 0.0
    %3306 = vmatprep.subr.mxu0 0.0
    %3307 = vmatpush1.xpose.msra.mxu0 0.0
    %3308 = vmatprep.subr.mxu0 0.0
    %3309 = vmatpush1.xpose.msra.mxu0 0.0
    %3310 = vmatprep.subr.mxu0 0.0
    %3311 = vmatpush1.xpose.msra.mxu0 0.0
    %3312 = vmatprep.subr.mxu0 0.0
    %3313 = vmatpush1.xpose.msra.mxu0 0.0
    %3314 = vmatprep.subr.mxu0 0.0
    %3315 = vmatpush1.xpose.msra.mxu0 0.0
    %3316 = vmatprep.subr.mxu0 0.0
    %3317 = vmatpush1.xpose.msra.mxu0 0.0
    %3318 = vmatprep.subr.mxu0 0.0
    %3319 = vmatpush1.xpose.msra.mxu0 0.0
    %3320 = vmatprep.subr.mxu0 0.0
    %3321 = vmatpush1.xpose.msra.mxu0 0.0
    %3322 = vmatprep.subr.mxu0 0.0
    %3323 = vmatpush1.xpose.msra.mxu0 %v3290
    %3324 = vmatprep.subr.mxu0 0.0
    %3325 = vmatpush2.xpose.msra.mxu0 0.0
    %3326 = vmatprep.subr.mxu0 0.0
    %3327 = vmatpush2.xpose.msra.mxu0 0.0
    %3328 = vmatprep.subr.mxu0 0.0
    %3329 = vmatpush2.xpose.msra.mxu0 0.0
    %3330 = vmatprep.subr.mxu0 0.0
    %3331 = vmatpush2.xpose.msra.mxu0 0.0
    %3332 = vmatprep.subr.mxu0 0.0
    %3333 = vmatpush2.xpose.msra.mxu0 0.0
    %3334 = vmatprep.subr.mxu0 0.0
    %3335 = vmatpush2.xpose.msra.mxu0 0.0
    %3336 = vmatprep.subr.mxu0 0.0
    %3337 = vmatpush2.xpose.msra.mxu0 0.0
    %3338 = vmatprep.subr.mxu0 0.0
    %3339 = vmatpush2.xpose.msra.mxu0 0.0
    %3340 = vmatprep.subr.mxu0 0.0
    %3341 = vmatpush2.xpose.msra.mxu0 0.0
    %3342 = vmatprep.subr.mxu0 0.0
    %3343 = vmatpush2.xpose.msra.mxu0 0.0
    %3344 = vmatprep.subr.mxu0 0.0
    %3345 = vmatpush2.xpose.msra.mxu0 0.0
    %3346 = vmatprep.subr.mxu0 0.0
    %3347 = vmatpush2.xpose.msra.mxu0 0.0
    %3348 = vmatprep.subr.mxu0 0.0
    %3349 = vmatpush2.xpose.msra.mxu0 0.0
    %3350 = vmatprep.subr.mxu0 0.0
    %3351 = vmatpush2.xpose.msra.mxu0 0.0
    %3352 = vmatprep.subr.mxu0 0.0
    %3353 = vmatpush2.xpose.msra.mxu0 0.0
    %3354 = vmatprep.subr.mxu0 0.0
    %3355 = vmatpush2.xpose.msra.mxu0 0.0
    %3356 = vmatprep.mubr.f32.mxu0 0.0
    %3357 = vmatmul.mubr.f32.gmra.mxu0 %v3287
    %v3358 = vpop.f32.mrf.mxu0
    %v3359 = vadd.f32 0.0, %v3358
    %v3360 = vpop.f32.mrf.mxu0
    %3361 = vdwg.mxu0
    %v3362 = vmul.f32 %v3359, 0.35355338
    %v3363 = vadd.f32 %v3362, %v3285
    %v3364 = vsel %vm193, %v3363, -inf
    %3365 = vmax.xlane.f32.xlu0 %v3364
    %v3366 = vpop.xlane.xlu0 %3365
    %v3367 = vsub.f32 %v3363, %v3366
    %v3368 = vmul.f32 %v3367, 1.442695
    %v3369 = vpow.pop %v3368
    %v3370 = vsel %vm193, %v3369, 0.0
    %3371 = vadd.xlane.f32.xlu0 %v3370
    %v3372 = vpop.xlane.xlu0 %3371
    %v3373 = vrcp.pop %v3372
    %v3374 = vmul.f32 %v3369, %v3373
    %3375 = vrot.lane.b32.xlu0 %v2313, 96
    %v3376 = vpop.permute.xlu0 %3375
    %v3379 = vsel %vm193, %v3374, 0
    %3381 = vmatprep.subr.mxu0 0.0
    %3382 = vmatpush1.msra.mxu0 0.0
    %3383 = vmatprep.subr.mxu0 0.0
    %3384 = vmatpush1.msra.mxu0 0.0
    %3385 = vmatprep.subr.mxu0 0.0
    %3386 = vmatpush1.msra.mxu0 0.0
    %3387 = vmatprep.subr.mxu0 0.0
    %3388 = vmatpush1.msra.mxu0 0.0
    %3389 = vmatprep.subr.mxu0 0.0
    %3390 = vmatpush1.msra.mxu0 0.0
    %3391 = vmatprep.subr.mxu0 0.0
    %3392 = vmatpush1.msra.mxu0 0.0
    %3393 = vmatprep.subr.mxu0 0.0
    %3394 = vmatpush1.msra.mxu0 0.0
    %3395 = vmatprep.subr.mxu0 0.0
    %3396 = vmatpush1.msra.mxu0 0.0
    %3397 = vmatprep.subr.mxu0 0.0
    %3398 = vmatpush1.msra.mxu0 0.0
    %3399 = vmatprep.subr.mxu0 0.0
    %3400 = vmatpush1.msra.mxu0 0.0
    %3401 = vmatprep.subr.mxu0 0.0
    %3402 = vmatpush1.msra.mxu0 0.0
    %3403 = vmatprep.subr.mxu0 0.0
    %3404 = vmatpush1.msra.mxu0 0.0
    %3405 = vmatprep.subr.mxu0 0.0
    %3406 = vmatpush1.msra.mxu0 0.0
    %3407 = vmatprep.subr.mxu0 0.0
    %3408 = vmatpush1.msra.mxu0 0.0
    %3409 = vmatprep.subr.mxu0 0.0
    %3410 = vmatpush1.msra.mxu0 0.0
    %3411 = vmatprep.subr.mxu0 0.0
    %3412 = vmatpush1.msra.mxu0 %v3376
    %3413 = vmatprep.subr.mxu0 0.0
    %3414 = vmatpush2.msra.mxu0 0.0
    %3415 = vmatprep.subr.mxu0 0.0
    %3416 = vmatpush2.msra.mxu0 0.0
    %3417 = vmatprep.subr.mxu0 0.0
    %3418 = vmatpush2.msra.mxu0 0.0
    %3419 = vmatprep.subr.mxu0 0.0
    %3420 = vmatpush2.msra.mxu0 0.0
    %3421 = vmatprep.subr.mxu0 0.0
    %3422 = vmatpush2.msra.mxu0 0.0
    %3423 = vmatprep.subr.mxu0 0.0
    %3424 = vmatpush2.msra.mxu0 0.0
    %3425 = vmatprep.subr.mxu0 0.0
    %3426 = vmatpush2.msra.mxu0 0.0
    %3427 = vmatprep.subr.mxu0 0.0
    %3428 = vmatpush2.msra.mxu0 0.0
    %3429 = vmatprep.subr.mxu0 0.0
    %3430 = vmatpush2.msra.mxu0 0.0
    %3431 = vmatprep.subr.mxu0 0.0
    %3432 = vmatpush2.msra.mxu0 0.0
    %3433 = vmatprep.subr.mxu0 0.0
    %3434 = vmatpush2.msra.mxu0 0.0
    %3435 = vmatprep.subr.mxu0 0.0
    %3436 = vmatpush2.msra.mxu0 0.0
    %3437 = vmatprep.subr.mxu0 0.0
    %3438 = vmatpush2.msra.mxu0 0.0
    %3439 = vmatprep.subr.mxu0 0.0
    %3440 = vmatpush2.msra.mxu0 0.0
    %3441 = vmatprep.subr.mxu0 0.0
    %3442 = vmatpush2.msra.mxu0 0.0
    %3443 = vmatprep.subr.mxu0 0.0
    %3444 = vmatpush2.msra.mxu0 0.0
    %3445 = vmatprep.mubr.f32.mxu0 0.0
    %3446 = vmatmul.mubr.f32.gmra.mxu0 %v3379
    %v3447 = vpop.f32.mrf.mxu0
    %v3448 = vadd.f32 0.0, %v3447
    %v3449 = vpop.f32.mrf.mxu0
    %3450 = vdwg.mxu0
    %3451 = vrot.lane.b32.xlu0 %v2232, 120
    %v3452 = vpop.permute.xlu0 %3451
    %3453 = vrot.lane.b32.xlu0 %v2313, 120
    %v3454 = vpop.permute.xlu0 %3453
    %v3455 = vsel %vm193, %v3452, 0
    %v3457 = vsel %vm193, %v3454, 0
    %3459 = vmatprep.subr.mxu0 0.0
    %3460 = vmatpush1.xpose.msra.mxu0 0.0
    %3461 = vmatprep.subr.mxu0 0.0
    %3462 = vmatpush1.xpose.msra.mxu0 0.0
    %3463 = vmatprep.subr.mxu0 0.0
    %3464 = vmatpush1.xpose.msra.mxu0 0.0
    %3465 = vmatprep.subr.mxu0 0.0
    %3466 = vmatpush1.xpose.msra.mxu0 0.0
    %3467 = vmatprep.subr.mxu0 0.0
    %3468 = vmatpush1.xpose.msra.mxu0 0.0
    %3469 = vmatprep.subr.mxu0 0.0
    %3470 = vmatpush1.xpose.msra.mxu0 0.0
    %3471 = vmatprep.subr.mxu0 0.0
    %3472 = vmatpush1.xpose.msra.mxu0 0.0
    %3473 = vmatprep.subr.mxu0 0.0
    %3474 = vmatpush1.xpose.msra.mxu0 0.0
    %3475 = vmatprep.subr.mxu0 0.0
    %3476 = vmatpush1.xpose.msra.mxu0 0.0
    %3477 = vmatprep.subr.mxu0 0.0
    %3478 = vmatpush1.xpose.msra.mxu0 0.0
    %3479 = vmatprep.subr.mxu0 0.0
    %3480 = vmatpush1.xpose.msra.mxu0 0.0
    %3481 = vmatprep.subr.mxu0 0.0
    %3482 = vmatpush1.xpose.msra.mxu0 0.0
    %3483 = vmatprep.subr.mxu0 0.0
    %3484 = vmatpush1.xpose.msra.mxu0 0.0
    %3485 = vmatprep.subr.mxu0 0.0
    %3486 = vmatpush1.xpose.msra.mxu0 0.0
    %3487 = vmatprep.subr.mxu0 0.0
    %3488 = vmatpush1.xpose.msra.mxu0 0.0
    %3489 = vmatprep.subr.mxu0 0.0
    %3490 = vmatpush1.xpose.msra.mxu0 %v3457
    %3491 = vmatprep.subr.mxu0 0.0
    %3492 = vmatpush2.xpose.msra.mxu0 0.0
    %3493 = vmatprep.subr.mxu0 0.0
    %3494 = vmatpush2.xpose.msra.mxu0 0.0
    %3495 = vmatprep.subr.mxu0 0.0
    %3496 = vmatpush2.xpose.msra.mxu0 0.0
    %3497 = vmatprep.subr.mxu0 0.0
    %3498 = vmatpush2.xpose.msra.mxu0 0.0
    %3499 = vmatprep.subr.mxu0 0.0
    %3500 = vmatpush2.xpose.msra.mxu0 0.0
    %3501 = vmatprep.subr.mxu0 0.0
    %3502 = vmatpush2.xpose.msra.mxu0 0.0
    %3503 = vmatprep.subr.mxu0 0.0
    %3504 = vmatpush2.xpose.msra.mxu0 0.0
    %3505 = vmatprep.subr.mxu0 0.0
    %3506 = vmatpush2.xpose.msra.mxu0 0.0
    %3507 = vmatprep.subr.mxu0 0.0
    %3508 = vmatpush2.xpose.msra.mxu0 0.0
    %3509 = vmatprep.subr.mxu0 0.0
    %3510 = vmatpush2.xpose.msra.mxu0 0.0
    %3511 = vmatprep.subr.mxu0 0.0
    %3512 = vmatpush2.xpose.msra.mxu0 0.0
    %3513 = vmatprep.subr.mxu0 0.0
    %3514 = vmatpush2.xpose.msra.mxu0 0.0
    %3515 = vmatprep.subr.mxu0 0.0
    %3516 = vmatpush2.xpose.msra.mxu0 0.0
    %3517 = vmatprep.subr.mxu0 0.0
    %3518 = vmatpush2.xpose.msra.mxu0 0.0
    %3519 = vmatprep.subr.mxu0 0.0
    %3520 = vmatpush2.xpose.msra.mxu0 0.0
    %3521 = vmatprep.subr.mxu0 0.0
    %3522 = vmatpush2.xpose.msra.mxu0 0.0
    %3523 = vmatprep.mubr.f32.mxu0 0.0
    %3524 = vmatmul.mubr.f32.gmra.mxu0 %v3455
    %v3525 = vpop.f32.mrf.mxu0
    %v3526 = vadd.f32 0.0, %v3525
    %v3527 = vpop.f32.mrf.mxu0
    %3528 = vdwg.mxu0
    %v3529 = vmul.f32 %v3526, 0.35355338
    %v3530 = vadd.f32 %v3529, %v3285
    %v3531 = vsel %vm193, %v3530, -inf
    %3532 = vmax.xlane.f32.xlu0 %v3531
    %v3533 = vpop.xlane.xlu0 %3532
    %v3534 = vsub.f32 %v3530, %v3533
    %v3535 = vmul.f32 %v3534, 1.442695
    %v3536 = vpow.pop %v3535
    %v3537 = vsel %vm193, %v3536, 0.0
    %3538 = vadd.xlane.f32.xlu0 %v3537
    %v3539 = vpop.xlane.xlu0 %3538
    %v3540 = vrcp.pop %v3539
    %v3541 = vmul.f32 %v3536, %v3540
    %3542 = vrot.lane.b32.xlu0 %v2313, 88
    %v3543 = vpop.permute.xlu0 %3542
    %v3546 = vsel %vm193, %v3541, 0
    %3548 = vmatprep.subr.mxu0 0.0
    %3549 = vmatpush1.msra.mxu0 0.0
    %3550 = vmatprep.subr.mxu0 0.0
    %3551 = vmatpush1.msra.mxu0 0.0
    %3552 = vmatprep.subr.mxu0 0.0
    %3553 = vmatpush1.msra.mxu0 0.0
    %3554 = vmatprep.subr.mxu0 0.0
    %3555 = vmatpush1.msra.mxu0 0.0
    %3556 = vmatprep.subr.mxu0 0.0
    %3557 = vmatpush1.msra.mxu0 0.0
    %3558 = vmatprep.subr.mxu0 0.0
    %3559 = vmatpush1.msra.mxu0 0.0
    %3560 = vmatprep.subr.mxu0 0.0
    %3561 = vmatpush1.msra.mxu0 0.0
    %3562 = vmatprep.subr.mxu0 0.0
    %3563 = vmatpush1.msra.mxu0 0.0
    %3564 = vmatprep.subr.mxu0 0.0
    %3565 = vmatpush1.msra.mxu0 0.0
    %3566 = vmatprep.subr.mxu0 0.0
    %3567 = vmatpush1.msra.mxu0 0.0
    %3568 = vmatprep.subr.mxu0 0.0
    %3569 = vmatpush1.msra.mxu0 0.0
    %3570 = vmatprep.subr.mxu0 0.0
    %3571 = vmatpush1.msra.mxu0 0.0
    %3572 = vmatprep.subr.mxu0 0.0
    %3573 = vmatpush1.msra.mxu0 0.0
    %3574 = vmatprep.subr.mxu0 0.0
    %3575 = vmatpush1.msra.mxu0 0.0
    %3576 = vmatprep.subr.mxu0 0.0
    %3577 = vmatpush1.msra.mxu0 0.0
    %3578 = vmatprep.subr.mxu0 0.0
    %3579 = vmatpush1.msra.mxu0 %v3543
    %3580 = vmatprep.subr.mxu0 0.0
    %3581 = vmatpush2.msra.mxu0 0.0
    %3582 = vmatprep.subr.mxu0 0.0
    %3583 = vmatpush2.msra.mxu0 0.0
    %3584 = vmatprep.subr.mxu0 0.0
    %3585 = vmatpush2.msra.mxu0 0.0
    %3586 = vmatprep.subr.mxu0 0.0
    %3587 = vmatpush2.msra.mxu0 0.0
    %3588 = vmatprep.subr.mxu0 0.0
    %3589 = vmatpush2.msra.mxu0 0.0
    %3590 = vmatprep.subr.mxu0 0.0
    %3591 = vmatpush2.msra.mxu0 0.0
    %3592 = vmatprep.subr.mxu0 0.0
    %3593 = vmatpush2.msra.mxu0 0.0
    %3594 = vmatprep.subr.mxu0 0.0
    %3595 = vmatpush2.msra.mxu0 0.0
    %3596 = vmatprep.subr.mxu0 0.0
    %3597 = vmatpush2.msra.mxu0 0.0
    %3598 = vmatprep.subr.mxu0 0.0
    %3599 = vmatpush2.msra.mxu0 0.0
    %3600 = vmatprep.subr.mxu0 0.0
    %3601 = vmatpush2.msra.mxu0 0.0
    %3602 = vmatprep.subr.mxu0 0.0
    %3603 = vmatpush2.msra.mxu0 0.0
    %3604 = vmatprep.subr.mxu0 0.0
    %3605 = vmatpush2.msra.mxu0 0.0
    %3606 = vmatprep.subr.mxu0 0.0
    %3607 = vmatpush2.msra.mxu0 0.0
    %3608 = vmatprep.subr.mxu0 0.0
    %3609 = vmatpush2.msra.mxu0 0.0
    %3610 = vmatprep.subr.mxu0 0.0
    %3611 = vmatpush2.msra.mxu0 0.0
    %3612 = vmatprep.mubr.f32.mxu0 0.0
    %3613 = vmatmul.mubr.f32.gmra.mxu0 %v3546
    %v3614 = vpop.f32.mrf.mxu0
    %v3615 = vadd.f32 0.0, %v3614
    %v3616 = vpop.f32.mrf.mxu0
    %3617 = vdwg.mxu0
    %v3619 = vsel %vm193, %v3615, 0
    %3621 = vmatprep.subr.mxu0 0.0
    %3622 = vmatpush1.msra.mxu0 0.0
    %3623 = vmatprep.subr.mxu0 0.0
    %3624 = vmatpush1.msra.mxu0 0.0
    %3625 = vmatprep.subr.mxu0 0.0
    %3626 = vmatpush1.msra.mxu0 0.0
    %3627 = vmatprep.subr.mxu0 0.0
    %3628 = vmatpush1.msra.mxu0 0.0
    %3629 = vmatprep.subr.mxu0 0.0
    %3630 = vmatpush1.msra.mxu0 0.0
    %3631 = vmatprep.subr.mxu0 0.0
    %3632 = vmatpush1.msra.mxu0 0.0
    %3633 = vmatprep.subr.mxu0 0.0
    %3634 = vmatpush1.msra.mxu0 0.0
    %3635 = vmatprep.subr.mxu0 0.0
    %3636 = vmatpush1.msra.mxu0 0.0
    %3637 = vmatprep.subr.mxu0 0.0
    %3638 = vmatpush1.msra.mxu0 0.0
    %3639 = vmatprep.subr.mxu0 0.0
    %3640 = vmatpush1.msra.mxu0 0.0
    %3641 = vmatprep.subr.mxu0 0.0
    %3642 = vmatpush1.msra.mxu0 0.0
    %3643 = vmatprep.subr.mxu0 0.0
    %3644 = vmatpush1.msra.mxu0 0.0
    %3645 = vmatprep.subr.mxu0 0.0
    %3646 = vmatpush1.msra.mxu0 0.0
    %3647 = vmatprep.subr.mxu0 0.0
    %3648 = vmatpush1.msra.mxu0 0.0
    %3649 = vmatprep.subr.mxu0 0.0
    %3650 = vmatpush1.msra.mxu0 0.0
    %3651 = vmatprep.subr.mxu0 0.0
    %3652 = vmatpush1.msra.mxu0 %v78
    %3653 = vmatprep.subr.mxu0 0.0
    %3654 = vmatpush2.msra.mxu0 0.0
    %3655 = vmatprep.subr.mxu0 0.0
    %3656 = vmatpush2.msra.mxu0 0.0
    %3657 = vmatprep.subr.mxu0 0.0
    %3658 = vmatpush2.msra.mxu0 0.0
    %3659 = vmatprep.subr.mxu0 0.0
    %3660 = vmatpush2.msra.mxu0 0.0
    %3661 = vmatprep.subr.mxu0 0.0
    %3662 = vmatpush2.msra.mxu0 0.0
    %3663 = vmatprep.subr.mxu0 0.0
    %3664 = vmatpush2.msra.mxu0 0.0
    %3665 = vmatprep.subr.mxu0 0.0
    %3666 = vmatpush2.msra.mxu0 0.0
    %3667 = vmatprep.subr.mxu0 0.0
    %3668 = vmatpush2.msra.mxu0 0.0
    %3669 = vmatprep.subr.mxu0 0.0
    %3670 = vmatpush2.msra.mxu0 0.0
    %3671 = vmatprep.subr.mxu0 0.0
    %3672 = vmatpush2.msra.mxu0 0.0
    %3673 = vmatprep.subr.mxu0 0.0
    %3674 = vmatpush2.msra.mxu0 0.0
    %3675 = vmatprep.subr.mxu0 0.0
    %3676 = vmatpush2.msra.mxu0 0.0
    %3677 = vmatprep.subr.mxu0 0.0
    %3678 = vmatpush2.msra.mxu0 0.0
    %3679 = vmatprep.subr.mxu0 0.0
    %3680 = vmatpush2.msra.mxu0 0.0
    %3681 = vmatprep.subr.mxu0 0.0
    %3682 = vmatpush2.msra.mxu0 0.0
    %3683 = vmatprep.subr.mxu0 0.0
    %3684 = vmatpush2.msra.mxu0 0.0
    %3685 = vmatprep.mubr.f32.mxu0 0.0
    %3686 = vmatmul.mubr.f32.gmra.mxu0 %v3619
    %v3687 = vpop.f32.mrf.mxu0
    %v3688 = vadd.f32 0.0, %v3687
    %v3689 = vpop.f32.mrf.mxu0
    %3690 = vdwg.mxu0
    %v3692 = vsel %vm193, %v3448, 0
    %3694 = vmatprep.subr.mxu0 0.0
    %3695 = vmatpush1.msra.mxu0 0.0
    %3696 = vmatprep.subr.mxu0 0.0
    %3697 = vmatpush1.msra.mxu0 0.0
    %3698 = vmatprep.subr.mxu0 0.0
    %3699 = vmatpush1.msra.mxu0 0.0
    %3700 = vmatprep.subr.mxu0 0.0
    %3701 = vmatpush1.msra.mxu0 0.0
    %3702 = vmatprep.subr.mxu0 0.0
    %3703 = vmatpush1.msra.mxu0 0.0
    %3704 = vmatprep.subr.mxu0 0.0
    %3705 = vmatpush1.msra.mxu0 0.0
    %3706 = vmatprep.subr.mxu0 0.0
    %3707 = vmatpush1.msra.mxu0 0.0
    %3708 = vmatprep.subr.mxu0 0.0
    %3709 = vmatpush1.msra.mxu0 0.0
    %3710 = vmatprep.subr.mxu0 0.0
    %3711 = vmatpush1.msra.mxu0 0.0
    %3712 = vmatprep.subr.mxu0 0.0
    %3713 = vmatpush1.msra.mxu0 0.0
    %3714 = vmatprep.subr.mxu0 0.0
    %3715 = vmatpush1.msra.mxu0 0.0
    %3716 = vmatprep.subr.mxu0 0.0
    %3717 = vmatpush1.msra.mxu0 0.0
    %3718 = vmatprep.subr.mxu0 0.0
    %3719 = vmatpush1.msra.mxu0 0.0
    %3720 = vmatprep.subr.mxu0 0.0
    %3721 = vmatpush1.msra.mxu0 0.0
    %3722 = vmatprep.subr.mxu0 0.0
    %3723 = vmatpush1.msra.mxu0 0.0
    %3724 = vmatprep.subr.mxu0 0.0
    %3725 = vmatpush1.msra.mxu0 %v77
    %3726 = vmatprep.subr.mxu0 0.0
    %3727 = vmatpush2.msra.mxu0 0.0
    %3728 = vmatprep.subr.mxu0 0.0
    %3729 = vmatpush2.msra.mxu0 0.0
    %3730 = vmatprep.subr.mxu0 0.0
    %3731 = vmatpush2.msra.mxu0 0.0
    %3732 = vmatprep.subr.mxu0 0.0
    %3733 = vmatpush2.msra.mxu0 0.0
    %3734 = vmatprep.subr.mxu0 0.0
    %3735 = vmatpush2.msra.mxu0 0.0
    %3736 = vmatprep.subr.mxu0 0.0
    %3737 = vmatpush2.msra.mxu0 0.0
    %3738 = vmatprep.subr.mxu0 0.0
    %3739 = vmatpush2.msra.mxu0 0.0
    %3740 = vmatprep.subr.mxu0 0.0
    %3741 = vmatpush2.msra.mxu0 0.0
    %3742 = vmatprep.subr.mxu0 0.0
    %3743 = vmatpush2.msra.mxu0 0.0
    %3744 = vmatprep.subr.mxu0 0.0
    %3745 = vmatpush2.msra.mxu0 0.0
    %3746 = vmatprep.subr.mxu0 0.0
    %3747 = vmatpush2.msra.mxu0 0.0
    %3748 = vmatprep.subr.mxu0 0.0
    %3749 = vmatpush2.msra.mxu0 0.0
    %3750 = vmatprep.subr.mxu0 0.0
    %3751 = vmatpush2.msra.mxu0 0.0
    %3752 = vmatprep.subr.mxu0 0.0
    %3753 = vmatpush2.msra.mxu0 0.0
    %3754 = vmatprep.subr.mxu0 0.0
    %3755 = vmatpush2.msra.mxu0 0.0
    %3756 = vmatprep.subr.mxu0 0.0
    %3757 = vmatpush2.msra.mxu0 0.0
    %3758 = vmatprep.mubr.f32.mxu0 0.0
    %3759 = vmatmul.mubr.f32.gmra.mxu0 %v3692
    %v3760 = vpop.f32.mrf.mxu0
    %v3761 = vadd.f32 %v3688, %v3760
    %v3762 = vpop.f32.mrf.mxu0
    %3763 = vdwg.mxu0
    %3764 = vrot.lane.b32.xlu0 %v2232, 112
    %v3765 = vpop.permute.xlu0 %3764
    %3766 = vrot.lane.b32.xlu0 %v2313, 112
    %v3767 = vpop.permute.xlu0 %3766
    %v3768 = vsel %vm193, %v3765, 0
    %v3770 = vsel %vm193, %v3767, 0
    %3772 = vmatprep.subr.mxu0 0.0
    %3773 = vmatpush1.xpose.msra.mxu0 0.0
    %3774 = vmatprep.subr.mxu0 0.0
    %3775 = vmatpush1.xpose.msra.mxu0 0.0
    %3776 = vmatprep.subr.mxu0 0.0
    %3777 = vmatpush1.xpose.msra.mxu0 0.0
    %3778 = vmatprep.subr.mxu0 0.0
    %3779 = vmatpush1.xpose.msra.mxu0 0.0
    %3780 = vmatprep.subr.mxu0 0.0
    %3781 = vmatpush1.xpose.msra.mxu0 0.0
    %3782 = vmatprep.subr.mxu0 0.0
    %3783 = vmatpush1.xpose.msra.mxu0 0.0
    %3784 = vmatprep.subr.mxu0 0.0
    %3785 = vmatpush1.xpose.msra.mxu0 0.0
    %3786 = vmatprep.subr.mxu0 0.0
    %3787 = vmatpush1.xpose.msra.mxu0 0.0
    %3788 = vmatprep.subr.mxu0 0.0
    %3789 = vmatpush1.xpose.msra.mxu0 0.0
    %3790 = vmatprep.subr.mxu0 0.0
    %3791 = vmatpush1.xpose.msra.mxu0 0.0
    %3792 = vmatprep.subr.mxu0 0.0
    %3793 = vmatpush1.xpose.msra.mxu0 0.0
    %3794 = vmatprep.subr.mxu0 0.0
    %3795 = vmatpush1.xpose.msra.mxu0 0.0
    %3796 = vmatprep.subr.mxu0 0.0
    %3797 = vmatpush1.xpose.msra.mxu0 0.0
    %3798 = vmatprep.subr.mxu0 0.0
    %3799 = vmatpush1.xpose.msra.mxu0 0.0
    %3800 = vmatprep.subr.mxu0 0.0
    %3801 = vmatpush1.xpose.msra.mxu0 0.0
    %3802 = vmatprep.subr.mxu0 0.0
    %3803 = vmatpush1.xpose.msra.mxu0 %v3770
    %3804 = vmatprep.subr.mxu0 0.0
    %3805 = vmatpush2.xpose.msra.mxu0 0.0
    %3806 = vmatprep.subr.mxu0 0.0
    %3807 = vmatpush2.xpose.msra.mxu0 0.0
    %3808 = vmatprep.subr.mxu0 0.0
    %3809 = vmatpush2.xpose.msra.mxu0 0.0
    %3810 = vmatprep.subr.mxu0 0.0
    %3811 = vmatpush2.xpose.msra.mxu0 0.0
    %3812 = vmatprep.subr.mxu0 0.0
    %3813 = vmatpush2.xpose.msra.mxu0 0.0
    %3814 = vmatprep.subr.mxu0 0.0
    %3815 = vmatpush2.xpose.msra.mxu0 0.0
    %3816 = vmatprep.subr.mxu0 0.0
    %3817 = vmatpush2.xpose.msra.mxu0 0.0
    %3818 = vmatprep.subr.mxu0 0.0
    %3819 = vmatpush2.xpose.msra.mxu0 0.0
    %3820 = vmatprep.subr.mxu0 0.0
    %3821 = vmatpush2.xpose.msra.mxu0 0.0
    %3822 = vmatprep.subr.mxu0 0.0
    %3823 = vmatpush2.xpose.msra.mxu0 0.0
    %3824 = vmatprep.subr.mxu0 0.0
    %3825 = vmatpush2.xpose.msra.mxu0 0.0
    %3826 = vmatprep.subr.mxu0 0.0
    %3827 = vmatpush2.xpose.msra.mxu0 0.0
    %3828 = vmatprep.subr.mxu0 0.0
    %3829 = vmatpush2.xpose.msra.mxu0 0.0
    %3830 = vmatprep.subr.mxu0 0.0
    %3831 = vmatpush2.xpose.msra.mxu0 0.0
    %3832 = vmatprep.subr.mxu0 0.0
    %3833 = vmatpush2.xpose.msra.mxu0 0.0
    %3834 = vmatprep.subr.mxu0 0.0
    %3835 = vmatpush2.xpose.msra.mxu0 0.0
    %3836 = vmatprep.mubr.f32.mxu0 0.0
    %3837 = vmatmul.mubr.f32.gmra.mxu0 %v3768
    %v3838 = vpop.f32.mrf.mxu0
    %v3839 = vadd.f32 0.0, %v3838
    %v3840 = vpop.f32.mrf.mxu0
    %3841 = vdwg.mxu0
    %v3842 = vmul.f32 %v3839, 0.35355338
    %v3843 = vadd.f32 %v3842, %v3285
    %v3844 = vsel %vm193, %v3843, -inf
    %3845 = vmax.xlane.f32.xlu0 %v3844
    %v3846 = vpop.xlane.xlu0 %3845
    %v3847 = vsub.f32 %v3843, %v3846
    %v3848 = vmul.f32 %v3847, 1.442695
    %v3849 = vpow.pop %v3848
    %v3850 = vsel %vm193, %v3849, 0.0
    %3851 = vadd.xlane.f32.xlu0 %v3850
    %v3852 = vpop.xlane.xlu0 %3851
    %v3853 = vrcp.pop %v3852
    %v3854 = vmul.f32 %v3849, %v3853
    %3855 = vrot.lane.b32.xlu0 %v2313, 80
    %v3856 = vpop.permute.xlu0 %3855
    %v3859 = vsel %vm193, %v3854, 0
    %3861 = vmatprep.subr.mxu0 0.0
    %3862 = vmatpush1.msra.mxu0 0.0
    %3863 = vmatprep.subr.mxu0 0.0
    %3864 = vmatpush1.msra.mxu0 0.0
    %3865 = vmatprep.subr.mxu0 0.0
    %3866 = vmatpush1.msra.mxu0 0.0
    %3867 = vmatprep.subr.mxu0 0.0
    %3868 = vmatpush1.msra.mxu0 0.0
    %3869 = vmatprep.subr.mxu0 0.0
    %3870 = vmatpush1.msra.mxu0 0.0
    %3871 = vmatprep.subr.mxu0 0.0
    %3872 = vmatpush1.msra.mxu0 0.0
    %3873 = vmatprep.subr.mxu0 0.0
    %3874 = vmatpush1.msra.mxu0 0.0
    %3875 = vmatprep.subr.mxu0 0.0
    %3876 = vmatpush1.msra.mxu0 0.0
    %3877 = vmatprep.subr.mxu0 0.0
    %3878 = vmatpush1.msra.mxu0 0.0
    %3879 = vmatprep.subr.mxu0 0.0
    %3880 = vmatpush1.msra.mxu0 0.0
    %3881 = vmatprep.subr.mxu0 0.0
    %3882 = vmatpush1.msra.mxu0 0.0
    %3883 = vmatprep.subr.mxu0 0.0
    %3884 = vmatpush1.msra.mxu0 0.0
    %3885 = vmatprep.subr.mxu0 0.0
    %3886 = vmatpush1.msra.mxu0 0.0
    %3887 = vmatprep.subr.mxu0 0.0
    %3888 = vmatpush1.msra.mxu0 0.0
    %3889 = vmatprep.subr.mxu0 0.0
    %3890 = vmatpush1.msra.mxu0 0.0
    %3891 = vmatprep.subr.mxu0 0.0
    %3892 = vmatpush1.msra.mxu0 %v3856
    %3893 = vmatprep.subr.mxu0 0.0
    %3894 = vmatpush2.msra.mxu0 0.0
    %3895 = vmatprep.subr.mxu0 0.0
    %3896 = vmatpush2.msra.mxu0 0.0
    %3897 = vmatprep.subr.mxu0 0.0
    %3898 = vmatpush2.msra.mxu0 0.0
    %3899 = vmatprep.subr.mxu0 0.0
    %3900 = vmatpush2.msra.mxu0 0.0
    %3901 = vmatprep.subr.mxu0 0.0
    %3902 = vmatpush2.msra.mxu0 0.0
    %3903 = vmatprep.subr.mxu0 0.0
    %3904 = vmatpush2.msra.mxu0 0.0
    %3905 = vmatprep.subr.mxu0 0.0
    %3906 = vmatpush2.msra.mxu0 0.0
    %3907 = vmatprep.subr.mxu0 0.0
    %3908 = vmatpush2.msra.mxu0 0.0
    %3909 = vmatprep.subr.mxu0 0.0
    %3910 = vmatpush2.msra.mxu0 0.0
    %3911 = vmatprep.subr.mxu0 0.0
    %3912 = vmatpush2.msra.mxu0 0.0
    %3913 = vmatprep.subr.mxu0 0.0
    %3914 = vmatpush2.msra.mxu0 0.0
    %3915 = vmatprep.subr.mxu0 0.0
    %3916 = vmatpush2.msra.mxu0 0.0
    %3917 = vmatprep.subr.mxu0 0.0
    %3918 = vmatpush2.msra.mxu0 0.0
    %3919 = vmatprep.subr.mxu0 0.0
    %3920 = vmatpush2.msra.mxu0 0.0
    %3921 = vmatprep.subr.mxu0 0.0
    %3922 = vmatpush2.msra.mxu0 0.0
    %3923 = vmatprep.subr.mxu0 0.0
    %3924 = vmatpush2.msra.mxu0 0.0
    %3925 = vmatprep.mubr.f32.mxu0 0.0
    %3926 = vmatmul.mubr.f32.gmra.mxu0 %v3859
    %v3927 = vpop.f32.mrf.mxu0
    %v3928 = vadd.f32 0.0, %v3927
    %v3929 = vpop.f32.mrf.mxu0
    %3930 = vdwg.mxu0
    %v3932 = vsel %vm193, %v3928, 0
    %3934 = vmatprep.subr.mxu0 0.0
    %3935 = vmatpush1.msra.mxu0 0.0
    %3936 = vmatprep.subr.mxu0 0.0
    %3937 = vmatpush1.msra.mxu0 0.0
    %3938 = vmatprep.subr.mxu0 0.0
    %3939 = vmatpush1.msra.mxu0 0.0
    %3940 = vmatprep.subr.mxu0 0.0
    %3941 = vmatpush1.msra.mxu0 0.0
    %3942 = vmatprep.subr.mxu0 0.0
    %3943 = vmatpush1.msra.mxu0 0.0
    %3944 = vmatprep.subr.mxu0 0.0
    %3945 = vmatpush1.msra.mxu0 0.0
    %3946 = vmatprep.subr.mxu0 0.0
    %3947 = vmatpush1.msra.mxu0 0.0
    %3948 = vmatprep.subr.mxu0 0.0
    %3949 = vmatpush1.msra.mxu0 0.0
    %3950 = vmatprep.subr.mxu0 0.0
    %3951 = vmatpush1.msra.mxu0 0.0
    %3952 = vmatprep.subr.mxu0 0.0
    %3953 = vmatpush1.msra.mxu0 0.0
    %3954 = vmatprep.subr.mxu0 0.0
    %3955 = vmatpush1.msra.mxu0 0.0
    %3956 = vmatprep.subr.mxu0 0.0
    %3957 = vmatpush1.msra.mxu0 0.0
    %3958 = vmatprep.subr.mxu0 0.0
    %3959 = vmatpush1.msra.mxu0 0.0
    %3960 = vmatprep.subr.mxu0 0.0
    %3961 = vmatpush1.msra.mxu0 0.0
    %3962 = vmatprep.subr.mxu0 0.0
    %3963 = vmatpush1.msra.mxu0 0.0
    %3964 = vmatprep.subr.mxu0 0.0
    %3965 = vmatpush1.msra.mxu0 %v79
    %3966 = vmatprep.subr.mxu0 0.0
    %3967 = vmatpush2.msra.mxu0 0.0
    %3968 = vmatprep.subr.mxu0 0.0
    %3969 = vmatpush2.msra.mxu0 0.0
    %3970 = vmatprep.subr.mxu0 0.0
    %3971 = vmatpush2.msra.mxu0 0.0
    %3972 = vmatprep.subr.mxu0 0.0
    %3973 = vmatpush2.msra.mxu0 0.0
    %3974 = vmatprep.subr.mxu0 0.0
    %3975 = vmatpush2.msra.mxu0 0.0
    %3976 = vmatprep.subr.mxu0 0.0
    %3977 = vmatpush2.msra.mxu0 0.0
    %3978 = vmatprep.subr.mxu0 0.0
    %3979 = vmatpush2.msra.mxu0 0.0
    %3980 = vmatprep.subr.mxu0 0.0
    %3981 = vmatpush2.msra.mxu0 0.0
    %3982 = vmatprep.subr.mxu0 0.0
    %3983 = vmatpush2.msra.mxu0 0.0
    %3984 = vmatprep.subr.mxu0 0.0
    %3985 = vmatpush2.msra.mxu0 0.0
    %3986 = vmatprep.subr.mxu0 0.0
    %3987 = vmatpush2.msra.mxu0 0.0
    %3988 = vmatprep.subr.mxu0 0.0
    %3989 = vmatpush2.msra.mxu0 0.0
    %3990 = vmatprep.subr.mxu0 0.0
    %3991 = vmatpush2.msra.mxu0 0.0
    %3992 = vmatprep.subr.mxu0 0.0
    %3993 = vmatpush2.msra.mxu0 0.0
    %3994 = vmatprep.subr.mxu0 0.0
    %3995 = vmatpush2.msra.mxu0 0.0
    %3996 = vmatprep.subr.mxu0 0.0
    %3997 = vmatpush2.msra.mxu0 0.0
    %3998 = vmatprep.mubr.f32.mxu0 0.0
    %3999 = vmatmul.mubr.f32.gmra.mxu0 %v3932
    %v4000 = vpop.f32.mrf.mxu0
    %v4001 = vadd.f32 0.0, %v4000
    %v4002 = vpop.f32.mrf.mxu0
    %4003 = vdwg.mxu0
    %v4004 = vadd.f32 %v3761, %v4001
    %4005 = vrot.lane.b32.xlu0 %v2232, 104
    %v4006 = vpop.permute.xlu0 %4005
    %4007 = vrot.lane.b32.xlu0 %v2313, 104
    %v4008 = vpop.permute.xlu0 %4007
    %v4009 = vsel %vm193, %v4006, 0
    %v4011 = vsel %vm193, %v4008, 0
    %4013 = vmatprep.subr.mxu0 0.0
    %4014 = vmatpush1.xpose.msra.mxu0 0.0
    %4015 = vmatprep.subr.mxu0 0.0
    %4016 = vmatpush1.xpose.msra.mxu0 0.0
    %4017 = vmatprep.subr.mxu0 0.0
    %4018 = vmatpush1.xpose.msra.mxu0 0.0
    %4019 = vmatprep.subr.mxu0 0.0
    %4020 = vmatpush1.xpose.msra.mxu0 0.0
    %4021 = vmatprep.subr.mxu0 0.0
    %4022 = vmatpush1.xpose.msra.mxu0 0.0
    %4023 = vmatprep.subr.mxu0 0.0
    %4024 = vmatpush1.xpose.msra.mxu0 0.0
    %4025 = vmatprep.subr.mxu0 0.0
    %4026 = vmatpush1.xpose.msra.mxu0 0.0
    %4027 = vmatprep.subr.mxu0 0.0
    %4028 = vmatpush1.xpose.msra.mxu0 0.0
    %4029 = vmatprep.subr.mxu0 0.0
    %4030 = vmatpush1.xpose.msra.mxu0 0.0
    %4031 = vmatprep.subr.mxu0 0.0
    %4032 = vmatpush1.xpose.msra.mxu0 0.0
    %4033 = vmatprep.subr.mxu0 0.0
    %4034 = vmatpush1.xpose.msra.mxu0 0.0
    %4035 = vmatprep.subr.mxu0 0.0
    %4036 = vmatpush1.xpose.msra.mxu0 0.0
    %4037 = vmatprep.subr.mxu0 0.0
    %4038 = vmatpush1.xpose.msra.mxu0 0.0
    %4039 = vmatprep.subr.mxu0 0.0
    %4040 = vmatpush1.xpose.msra.mxu0 0.0
    %4041 = vmatprep.subr.mxu0 0.0
    %4042 = vmatpush1.xpose.msra.mxu0 0.0
    %4043 = vmatprep.subr.mxu0 0.0
    %4044 = vmatpush1.xpose.msra.mxu0 %v4011
    %4045 = vmatprep.subr.mxu0 0.0
    %4046 = vmatpush2.xpose.msra.mxu0 0.0
    %4047 = vmatprep.subr.mxu0 0.0
    %4048 = vmatpush2.xpose.msra.mxu0 0.0
    %4049 = vmatprep.subr.mxu0 0.0
    %4050 = vmatpush2.xpose.msra.mxu0 0.0
    %4051 = vmatprep.subr.mxu0 0.0
    %4052 = vmatpush2.xpose.msra.mxu0 0.0
    %4053 = vmatprep.subr.mxu0 0.0
    %4054 = vmatpush2.xpose.msra.mxu0 0.0
    %4055 = vmatprep.subr.mxu0 0.0
    %4056 = vmatpush2.xpose.msra.mxu0 0.0
    %4057 = vmatprep.subr.mxu0 0.0
    %4058 = vmatpush2.xpose.msra.mxu0 0.0
    %4059 = vmatprep.subr.mxu0 0.0
    %4060 = vmatpush2.xpose.msra.mxu0 0.0
    %4061 = vmatprep.subr.mxu0 0.0
    %4062 = vmatpush2.xpose.msra.mxu0 0.0
    %4063 = vmatprep.subr.mxu0 0.0
    %4064 = vmatpush2.xpose.msra.mxu0 0.0
    %4065 = vmatprep.subr.mxu0 0.0
    %4066 = vmatpush2.xpose.msra.mxu0 0.0
    %4067 = vmatprep.subr.mxu0 0.0
    %4068 = vmatpush2.xpose.msra.mxu0 0.0
    %4069 = vmatprep.subr.mxu0 0.0
    %4070 = vmatpush2.xpose.msra.mxu0 0.0
    %4071 = vmatprep.subr.mxu0 0.0
    %4072 = vmatpush2.xpose.msra.mxu0 0.0
    %4073 = vmatprep.subr.mxu0 0.0
    %4074 = vmatpush2.xpose.msra.mxu0 0.0
    %4075 = vmatprep.subr.mxu0 0.0
    %4076 = vmatpush2.xpose.msra.mxu0 0.0
    %4077 = vmatprep.mubr.f32.mxu0 0.0
    %4078 = vmatmul.mubr.f32.gmra.mxu0 %v4009
    %v4079 = vpop.f32.mrf.mxu0
    %v4080 = vadd.f32 0.0, %v4079
    %v4081 = vpop.f32.mrf.mxu0
    %4082 = vdwg.mxu0
    %v4083 = vmul.f32 %v4080, 0.35355338
    %v4084 = vadd.f32 %v4083, %v3285
    %v4085 = vsel %vm193, %v4084, -inf
    %4086 = vmax.xlane.f32.xlu0 %v4085
    %v4087 = vpop.xlane.xlu0 %4086
    %v4088 = vsub.f32 %v4084, %v4087
    %v4089 = vmul.f32 %v4088, 1.442695
    %v4090 = vpow.pop %v4089
    %v4091 = vsel %vm193, %v4090, 0.0
    %4092 = vadd.xlane.f32.xlu0 %v4091
    %v4093 = vpop.xlane.xlu0 %4092
    %v4094 = vrcp.pop %v4093
    %v4095 = vmul.f32 %v4090, %v4094
    %4096 = vrot.lane.b32.xlu0 %v2313, 72
    %v4097 = vpop.permute.xlu0 %4096
    %v4100 = vsel %vm193, %v4095, 0
    %4102 = vmatprep.subr.mxu0 0.0
    %4103 = vmatpush1.msra.mxu0 0.0
    %4104 = vmatprep.subr.mxu0 0.0
    %4105 = vmatpush1.msra.mxu0 0.0
    %4106 = vmatprep.subr.mxu0 0.0
    %4107 = vmatpush1.msra.mxu0 0.0
    %4108 = vmatprep.subr.mxu0 0.0
    %4109 = vmatpush1.msra.mxu0 0.0
    %4110 = vmatprep.subr.mxu0 0.0
    %4111 = vmatpush1.msra.mxu0 0.0
    %4112 = vmatprep.subr.mxu0 0.0
    %4113 = vmatpush1.msra.mxu0 0.0
    %4114 = vmatprep.subr.mxu0 0.0
    %4115 = vmatpush1.msra.mxu0 0.0
    %4116 = vmatprep.subr.mxu0 0.0
    %4117 = vmatpush1.msra.mxu0 0.0
    %4118 = vmatprep.subr.mxu0 0.0
    %4119 = vmatpush1.msra.mxu0 0.0
    %4120 = vmatprep.subr.mxu0 0.0
    %4121 = vmatpush1.msra.mxu0 0.0
    %4122 = vmatprep.subr.mxu0 0.0
    %4123 = vmatpush1.msra.mxu0 0.0
    %4124 = vmatprep.subr.mxu0 0.0
    %4125 = vmatpush1.msra.mxu0 0.0
    %4126 = vmatprep.subr.mxu0 0.0
    %4127 = vmatpush1.msra.mxu0 0.0
    %4128 = vmatprep.subr.mxu0 0.0
    %4129 = vmatpush1.msra.mxu0 0.0
    %4130 = vmatprep.subr.mxu0 0.0
    %4131 = vmatpush1.msra.mxu0 0.0
    %4132 = vmatprep.subr.mxu0 0.0
    %4133 = vmatpush1.msra.mxu0 %v4097
    %4134 = vmatprep.subr.mxu0 0.0
    %4135 = vmatpush2.msra.mxu0 0.0
    %4136 = vmatprep.subr.mxu0 0.0
    %4137 = vmatpush2.msra.mxu0 0.0
    %4138 = vmatprep.subr.mxu0 0.0
    %4139 = vmatpush2.msra.mxu0 0.0
    %4140 = vmatprep.subr.mxu0 0.0
    %4141 = vmatpush2.msra.mxu0 0.0
    %4142 = vmatprep.subr.mxu0 0.0
    %4143 = vmatpush2.msra.mxu0 0.0
    %4144 = vmatprep.subr.mxu0 0.0
    %4145 = vmatpush2.msra.mxu0 0.0
    %4146 = vmatprep.subr.mxu0 0.0
    %4147 = vmatpush2.msra.mxu0 0.0
    %4148 = vmatprep.subr.mxu0 0.0
    %4149 = vmatpush2.msra.mxu0 0.0
    %4150 = vmatprep.subr.mxu0 0.0
    %4151 = vmatpush2.msra.mxu0 0.0
    %4152 = vmatprep.subr.mxu0 0.0
    %4153 = vmatpush2.msra.mxu0 0.0
    %4154 = vmatprep.subr.mxu0 0.0
    %4155 = vmatpush2.msra.mxu0 0.0
    %4156 = vmatprep.subr.mxu0 0.0
    %4157 = vmatpush2.msra.mxu0 0.0
    %4158 = vmatprep.subr.mxu0 0.0
    %4159 = vmatpush2.msra.mxu0 0.0
    %4160 = vmatprep.subr.mxu0 0.0
    %4161 = vmatpush2.msra.mxu0 0.0
    %4162 = vmatprep.subr.mxu0 0.0
    %4163 = vmatpush2.msra.mxu0 0.0
    %4164 = vmatprep.subr.mxu0 0.0
    %4165 = vmatpush2.msra.mxu0 0.0
    %4166 = vmatprep.mubr.f32.mxu0 0.0
    %4167 = vmatmul.mubr.f32.gmra.mxu0 %v4100
    %v4168 = vpop.f32.mrf.mxu0
    %v4169 = vadd.f32 0.0, %v4168
    %v4170 = vpop.f32.mrf.mxu0
    %4171 = vdwg.mxu0
    %v4173 = vsel %vm193, %v4169, 0
    %4175 = vmatprep.subr.mxu0 0.0
    %4176 = vmatpush1.msra.mxu0 0.0
    %4177 = vmatprep.subr.mxu0 0.0
    %4178 = vmatpush1.msra.mxu0 0.0
    %4179 = vmatprep.subr.mxu0 0.0
    %4180 = vmatpush1.msra.mxu0 0.0
    %4181 = vmatprep.subr.mxu0 0.0
    %4182 = vmatpush1.msra.mxu0 0.0
    %4183 = vmatprep.subr.mxu0 0.0
    %4184 = vmatpush1.msra.mxu0 0.0
    %4185 = vmatprep.subr.mxu0 0.0
    %4186 = vmatpush1.msra.mxu0 0.0
    %4187 = vmatprep.subr.mxu0 0.0
    %4188 = vmatpush1.msra.mxu0 0.0
    %4189 = vmatprep.subr.mxu0 0.0
    %4190 = vmatpush1.msra.mxu0 0.0
    %4191 = vmatprep.subr.mxu0 0.0
    %4192 = vmatpush1.msra.mxu0 0.0
    %4193 = vmatprep.subr.mxu0 0.0
    %4194 = vmatpush1.msra.mxu0 0.0
    %4195 = vmatprep.subr.mxu0 0.0
    %4196 = vmatpush1.msra.mxu0 0.0
    %4197 = vmatprep.subr.mxu0 0.0
    %4198 = vmatpush1.msra.mxu0 0.0
    %4199 = vmatprep.subr.mxu0 0.0
    %4200 = vmatpush1.msra.mxu0 0.0
    %4201 = vmatprep.subr.mxu0 0.0
    %4202 = vmatpush1.msra.mxu0 0.0
    %4203 = vmatprep.subr.mxu0 0.0
    %4204 = vmatpush1.msra.mxu0 0.0
    %4205 = vmatprep.subr.mxu0 0.0
    %4206 = vmatpush1.msra.mxu0 %v80
    %4207 = vmatprep.subr.mxu0 0.0
    %4208 = vmatpush2.msra.mxu0 0.0
    %4209 = vmatprep.subr.mxu0 0.0
    %4210 = vmatpush2.msra.mxu0 0.0
    %4211 = vmatprep.subr.mxu0 0.0
    %4212 = vmatpush2.msra.mxu0 0.0
    %4213 = vmatprep.subr.mxu0 0.0
    %4214 = vmatpush2.msra.mxu0 0.0
    %4215 = vmatprep.subr.mxu0 0.0
    %4216 = vmatpush2.msra.mxu0 0.0
    %4217 = vmatprep.subr.mxu0 0.0
    %4218 = vmatpush2.msra.mxu0 0.0
    %4219 = vmatprep.subr.mxu0 0.0
    %4220 = vmatpush2.msra.mxu0 0.0
    %4221 = vmatprep.subr.mxu0 0.0
    %4222 = vmatpush2.msra.mxu0 0.0
    %4223 = vmatprep.subr.mxu0 0.0
    %4224 = vmatpush2.msra.mxu0 0.0
    %4225 = vmatprep.subr.mxu0 0.0
    %4226 = vmatpush2.msra.mxu0 0.0
    %4227 = vmatprep.subr.mxu0 0.0
    %4228 = vmatpush2.msra.mxu0 0.0
    %4229 = vmatprep.subr.mxu0 0.0
    %4230 = vmatpush2.msra.mxu0 0.0
    %4231 = vmatprep.subr.mxu0 0.0
    %4232 = vmatpush2.msra.mxu0 0.0
    %4233 = vmatprep.subr.mxu0 0.0
    %4234 = vmatpush2.msra.mxu0 0.0
    %4235 = vmatprep.subr.mxu0 0.0
    %4236 = vmatpush2.msra.mxu0 0.0
    %4237 = vmatprep.subr.mxu0 0.0
    %4238 = vmatpush2.msra.mxu0 0.0
    %4239 = vmatprep.mubr.f32.mxu0 0.0
    %4240 = vmatmul.mubr.f32.gmra.mxu0 %v4173
    %v4241 = vpop.f32.mrf.mxu0
    %v4242 = vadd.f32 0.0, %v4241
    %v4243 = vpop.f32.mrf.mxu0
    %4244 = vdwg.mxu0
    %v4245 = vadd.f32 %v4004, %v4242
    %v4246 = vadd.f32 %v2152, %v3280
    %v4247 = vadd.f32 %v2153, %v4245
    %v4248 = vsel %vm108, %v4246, 0.0
    %4249 = vadd.xlane.f32.xlu0 %v4248
    %v4250 = vpop.xlane.xlu0 %4249
    %v4251 = vsel %vm108, %v4247, 0.0
    %4252 = vadd.xlane.f32.xlu0 %v4251
    %v4253 = vpop.xlane.xlu0 %4252
    %v4254 = vmul.f32 %v4250, %v2121
    %v4255 = vmul.f32 %v4253, %v2121
    %v4256 = vsub.f32 %v4246, %v4254
    %v4257 = vsub.f32 %v4247, %v4255
    %v4258 = vmul.f32 %v4256, %v4256
    %v4259 = vmul.f32 %v4257, %v4257
    %v4260 = vsel %vm108, %v4258, 0.0
    %4261 = vadd.xlane.f32.xlu0 %v4260
    %v4262 = vpop.xlane.xlu0 %4261
    %v4263 = vsel %vm108, %v4259, 0.0
    %4264 = vadd.xlane.f32.xlu0 %v4263
    %v4265 = vpop.xlane.xlu0 %4264
    %v4266 = vmul.f32 %v4262, %v2121
    %v4267 = vmul.f32 %v4265, %v2121
    %v4268 = vadd.f32 %v4266, 1e-05
    %v4269 = vadd.f32 %v4267, 1e-05
    %v4270 = vrsqrt.pop %v4268
    %v4271 = vrsqrt.pop %v4269
    %v4272 = vmul.f32 %v4256, %v4270
    %v4273 = vmul.f32 %v4257, %v4271
    %v4274 = vlaneseq
    %v4275 = vshrl.u32 %v4274, 7
    %v4276 = vsub.s32 2, %v4275
    %v4277 = vrot.slane %v93, %v4276
    %v4278 = vmul.f32 %v4272, %v4277
    %v4279 = vmul.f32 %v4273, %v4277
    %v4280 = vlaneseq
    %v4281 = vshrl.u32 %v4280, 7
    %v4282 = vsub.s32 3, %v4281
    %v4283 = vrot.slane %v93, %v4282
    %v4284 = vadd.f32 %v4278, %v4283
    %v4285 = vadd.f32 %v4279, %v4283
    %v4286 = vlaneseq
    %v4287 = vshrl.u32 %v4286, 7
    %v4288 = vsub.s32 4, %v4287
    %v4289 = vrot.slane %v93, %v4288
    %v4291 = vsel %vm108, %v4284, 0
    %v4294 = vsel %vm108, %v4285, 0
    %4296 = vmatprep.subr.mxu0 0.0
    %4297 = vmatpush1.msra.mxu0 0.0
    %4298 = vmatprep.subr.mxu0 0.0
    %4299 = vmatpush1.msra.mxu0 0.0
    %4300 = vmatprep.subr.mxu0 0.0
    %4301 = vmatpush1.msra.mxu0 0.0
    %4302 = vmatprep.subr.mxu0 0.0
    %4303 = vmatpush1.msra.mxu0 0.0
    %4304 = vmatprep.subr.mxu0 0.0
    %4305 = vmatpush1.msra.mxu0 0.0
    %4306 = vmatprep.subr.mxu0 0.0
    %4307 = vmatpush1.msra.mxu0 0.0
    %4308 = vmatprep.subr.mxu0 0.0
    %4309 = vmatpush1.msra.mxu0 0.0
    %4310 = vmatprep.subr.mxu0 0.0
    %4311 = vmatpush1.msra.mxu0 0.0
    %4312 = vmatprep.subr.mxu0 0.0
    %4313 = vmatpush1.msra.mxu0 0.0
    %4314 = vmatprep.subr.mxu0 0.0
    %4315 = vmatpush1.msra.mxu0 0.0
    %4316 = vmatprep.subr.mxu0 0.0
    %4317 = vmatpush1.msra.mxu0 0.0
    %4318 = vmatprep.subr.mxu0 0.0
    %4319 = vmatpush1.msra.mxu0 0.0
    %4320 = vmatprep.subr.mxu0 0.0
    %4321 = vmatpush1.msra.mxu0 %v84
    %4322 = vmatprep.subr.mxu0 0.0
    %4323 = vmatpush1.msra.mxu0 %v83
    %4324 = vmatprep.subr.mxu0 0.0
    %4325 = vmatpush1.msra.mxu0 %v82
    %4326 = vmatprep.subr.mxu0 0.0
    %4327 = vmatpush1.msra.mxu0 %v81
    %4328 = vmatprep.subr.mxu0 0.0
    %4329 = vmatpush2.msra.mxu0 0.0
    %4330 = vmatprep.subr.mxu0 0.0
    %4331 = vmatpush2.msra.mxu0 0.0
    %4332 = vmatprep.subr.mxu0 0.0
    %4333 = vmatpush2.msra.mxu0 0.0
    %4334 = vmatprep.subr.mxu0 0.0
    %4335 = vmatpush2.msra.mxu0 0.0
    %4336 = vmatprep.subr.mxu0 0.0
    %4337 = vmatpush2.msra.mxu0 0.0
    %4338 = vmatprep.subr.mxu0 0.0
    %4339 = vmatpush2.msra.mxu0 0.0
    %4340 = vmatprep.subr.mxu0 0.0
    %4341 = vmatpush2.msra.mxu0 0.0
    %4342 = vmatprep.subr.mxu0 0.0
    %4343 = vmatpush2.msra.mxu0 0.0
    %4344 = vmatprep.subr.mxu0 0.0
    %4345 = vmatpush2.msra.mxu0 0.0
    %4346 = vmatprep.subr.mxu0 0.0
    %4347 = vmatpush2.msra.mxu0 0.0
    %4348 = vmatprep.subr.mxu0 0.0
    %4349 = vmatpush2.msra.mxu0 0.0
    %4350 = vmatprep.subr.mxu0 0.0
    %4351 = vmatpush2.msra.mxu0 0.0
    %4352 = vmatprep.subr.mxu0 0.0
    %4353 = vmatpush2.msra.mxu0 0.0
    %4354 = vmatprep.subr.mxu0 0.0
    %4355 = vmatpush2.msra.mxu0 0.0
    %4356 = vmatprep.subr.mxu0 0.0
    %4357 = vmatpush2.msra.mxu0 0.0
    %4358 = vmatprep.subr.mxu0 0.0
    %4359 = vmatpush2.msra.mxu0 0.0
    %4360 = vmatprep.mubr.f32.mxu0 0.0
    %4361 = vmatmul.mubr.f32.gmra.mxu0 %v4291
    %v4362 = vpop.f32.mrf.mxu0
    %v4363 = vadd.f32 %v4289, %v4362
    %v4364 = vpop.f32.mrf.mxu0
    %4365 = vmatprep.mubr.f32.mxu0 0.0
    %4366 = vmatmul.mubr.f32.gmra.mxu0 %v4294
    %v4367 = vpop.f32.mrf.mxu0
    %v4368 = vadd.f32 %v4289, %v4367
    %v4369 = vpop.f32.mrf.mxu0
    %4370 = vdwg.mxu0
    %v4371 = vmax.f32 %v4363, 0.0
    %v4372 = vmax.f32 %v4368, 0.0
    %v4373 = vlaneseq
    %v4374 = vshrl.u32 %v4373, 7
    %v4375 = vsub.s32 5, %v4374
    %v4376 = vrot.slane %v93, %v4375
    %vm4377 = vcmask 523264
    %v4379 = vsel %vm4377, %v4371, 0
    %v4382 = vsel %vm4377, %v4372, 0
    %4384 = vmatprep.subr.mxu0 0.0
    %4385 = vmatpush1.msra.mxu0 0.0
    %4386 = vmatprep.subr.mxu0 0.0
    %4387 = vmatpush1.msra.mxu0 0.0
    %4388 = vmatprep.subr.mxu0 0.0
    %4389 = vmatpush1.msra.mxu0 0.0
    %4390 = vmatprep.subr.mxu0 0.0
    %4391 = vmatpush1.msra.mxu0 0.0
    %4392 = vmatprep.subr.mxu0 0.0
    %4393 = vmatpush1.msra.mxu0 0.0
    %4394 = vmatprep.subr.mxu0 0.0
    %4395 = vmatpush1.msra.mxu0 0.0
    %4396 = vmatprep.subr.mxu0 0.0
    %4397 = vmatpush1.msra.mxu0 0.0
    %4398 = vmatprep.subr.mxu0 0.0
    %4399 = vmatpush1.msra.mxu0 0.0
    %4400 = vmatprep.subr.mxu0 0.0
    %4401 = vmatpush1.msra.mxu0 %v92
    %4402 = vmatprep.subr.mxu0 0.0
    %4403 = vmatpush1.msra.mxu0 %v91
    %4404 = vmatprep.subr.mxu0 0.0
    %4405 = vmatpush1.msra.mxu0 %v90
    %4406 = vmatprep.subr.mxu0 0.0
    %4407 = vmatpush1.msra.mxu0 %v89
    %4408 = vmatprep.subr.mxu0 0.0
    %4409 = vmatpush1.msra.mxu0 %v88
    %4410 = vmatprep.subr.mxu0 0.0
    %4411 = vmatpush1.msra.mxu0 %v87
    %4412 = vmatprep.subr.mxu0 0.0
    %4413 = vmatpush1.msra.mxu0 %v86
    %4414 = vmatprep.subr.mxu0 0.0
    %4415 = vmatpush1.msra.mxu0 %v85
    %4416 = vmatprep.subr.mxu0 0.0
    %4417 = vmatpush2.msra.mxu0 0.0
    %4418 = vmatprep.subr.mxu0 0.0
    %4419 = vmatpush2.msra.mxu0 0.0
    %4420 = vmatprep.subr.mxu0 0.0
    %4421 = vmatpush2.msra.mxu0 0.0
    %4422 = vmatprep.subr.mxu0 0.0
    %4423 = vmatpush2.msra.mxu0 0.0
    %4424 = vmatprep.subr.mxu0 0.0
    %4425 = vmatpush2.msra.mxu0 0.0
    %4426 = vmatprep.subr.mxu0 0.0
    %4427 = vmatpush2.msra.mxu0 0.0
    %4428 = vmatprep.subr.mxu0 0.0
    %4429 = vmatpush2.msra.mxu0 0.0
    %4430 = vmatprep.subr.mxu0 0.0
    %4431 = vmatpush2.msra.mxu0 0.0
    %4432 = vmatprep.subr.mxu0 0.0
    %4433 = vmatpush2.msra.mxu0 0.0
    %4434 = vmatprep.subr.mxu0 0.0
    %4435 = vmatpush2.msra.mxu0 0.0
    %4436 = vmatprep.subr.mxu0 0.0
    %4437 = vmatpush2.msra.mxu0 0.0
    %4438 = vmatprep.subr.mxu0 0.0
    %4439 = vmatpush2.msra.mxu0 0.0
    %4440 = vmatprep.subr.mxu0 0.0
    %4441 = vmatpush2.msra.mxu0 0.0
    %4442 = vmatprep.subr.mxu0 0.0
    %4443 = vmatpush2.msra.mxu0 0.0
    %4444 = vmatprep.subr.mxu0 0.0
    %4445 = vmatpush2.msra.mxu0 0.0
    %4446 = vmatprep.subr.mxu0 0.0
    %4447 = vmatpush2.msra.mxu0 0.0
    %4448 = vmatprep.mubr.f32.mxu0 0.0
    %4449 = vmatmul.mubr.f32.gmra.mxu0 %v4379
    %v4450 = vpop.f32.mrf.mxu0
    %v4451 = vadd.f32 %v4376, %v4450
    %v4452 = vpop.f32.mrf.mxu0
    %4453 = vmatprep.mubr.f32.mxu0 0.0
    %4454 = vmatmul.mubr.f32.gmra.mxu0 %v4382
    %v4455 = vpop.f32.mrf.mxu0
    %v4456 = vadd.f32 %v4376, %v4455
    %v4457 = vpop.f32.mrf.mxu0
    %4458 = vdwg.mxu0
    %v4459 = vadd.f32 %v4284, %v4451
    %v4460 = vadd.f32 %v4285, %v4456
    %v4461 = vsel %vm108, %v4459, 0.0
    %4462 = vadd.xlane.f32.xlu0 %v4461
    %v4463 = vpop.xlane.xlu0 %4462
    %v4464 = vsel %vm108, %v4460, 0.0
    %4465 = vadd.xlane.f32.xlu0 %v4464
    %v4466 = vpop.xlane.xlu0 %4465
    %v4467 = vmul.f32 %v4463, %v2121
    %v4468 = vmul.f32 %v4466, %v2121
    %v4469 = vsub.f32 %v4459, %v4467
    %v4470 = vsub.f32 %v4460, %v4468
    %v4471 = vmul.f32 %v4469, %v4469
    %v4472 = vmul.f32 %v4470, %v4470
    %v4473 = vsel %vm108, %v4471, 0.0
    %4474 = vadd.xlane.f32.xlu0 %v4473
    %v4475 = vpop.xlane.xlu0 %4474
    %v4476 = vsel %vm108, %v4472, 0.0
    %4477 = vadd.xlane.f32.xlu0 %v4476
    %v4478 = vpop.xlane.xlu0 %4477
    %v4479 = vmul.f32 %v4475, %v2121
    %v4480 = vmul.f32 %v4478, %v2121
    %v4481 = vadd.f32 %v4479, 1e-05
    %v4482 = vadd.f32 %v4480, 1e-05
    %v4483 = vrsqrt.pop %v4481
    %v4484 = vrsqrt.pop %v4482
    %v4485 = vmul.f32 %v4469, %v4483
    %v4486 = vmul.f32 %v4470, %v4484
    %v4487 = vlaneseq
    %v4488 = vshrl.u32 %v4487, 7
    %v4489 = vsub.s32 6, %v4488
    %v4490 = vrot.slane %v93, %v4489
    %v4491 = vmul.f32 %v4485, %v4490
    %v4492 = vmul.f32 %v4486, %v4490
    %v4493 = vlaneseq
    %v4494 = vshrl.u32 %v4493, 7
    %v4495 = vsub.s32 7, %v4494
    %v4496 = vrot.slane %v93, %v4495
    %v4497 = vadd.f32 %v4491, %v4496
    %v4498 = vadd.f32 %v4492, %v4496
    %v4500 = vsel %vm108, %v4497, 0
    %v4503 = vsel %vm108, %v4498, 0
    %4505 = vmatprep.subr.mxu0 0.0
    %4506 = vmatpush1.msra.mxu0 0.0
    %4507 = vmatprep.subr.mxu0 0.0
    %4508 = vmatpush1.msra.mxu0 0.0
    %4509 = vmatprep.subr.mxu0 0.0
    %4510 = vmatpush1.msra.mxu0 0.0
    %4511 = vmatprep.subr.mxu0 0.0
    %4512 = vmatpush1.msra.mxu0 0.0
    %4513 = vmatprep.subr.mxu0 0.0
    %4514 = vmatpush1.msra.mxu0 0.0
    %4515 = vmatprep.subr.mxu0 0.0
    %4516 = vmatpush1.msra.mxu0 0.0
    %4517 = vmatprep.subr.mxu0 0.0
    %4518 = vmatpush1.msra.mxu0 0.0
    %4519 = vmatprep.subr.mxu0 0.0
    %4520 = vmatpush1.msra.mxu0 0.0
    %4521 = vmatprep.subr.mxu0 0.0
    %4522 = vmatpush1.msra.mxu0 0.0
    %4523 = vmatprep.subr.mxu0 0.0
    %4524 = vmatpush1.msra.mxu0 0.0
    %4525 = vmatprep.subr.mxu0 0.0
    %4526 = vmatpush1.msra.mxu0 0.0
    %4527 = vmatprep.subr.mxu0 0.0
    %4528 = vmatpush1.msra.mxu0 0.0
    %4529 = vmatprep.subr.mxu0 0.0
    %4530 = vmatpush1.msra.mxu0 %v97
    %4531 = vmatprep.subr.mxu0 0.0
    %4532 = vmatpush1.msra.mxu0 %v96
    %4533 = vmatprep.subr.mxu0 0.0
    %4534 = vmatpush1.msra.mxu0 %v95
    %4535 = vmatprep.subr.mxu0 0.0
    %4536 = vmatpush1.msra.mxu0 %v94
    %4537 = vmatprep.subr.mxu0 0.0
    %4538 = vmatpush2.msra.mxu0 0.0
    %4539 = vmatprep.subr.mxu0 0.0
    %4540 = vmatpush2.msra.mxu0 0.0
    %4541 = vmatprep.subr.mxu0 0.0
    %4542 = vmatpush2.msra.mxu0 0.0
    %4543 = vmatprep.subr.mxu0 0.0
    %4544 = vmatpush2.msra.mxu0 0.0
    %4545 = vmatprep.subr.mxu0 0.0
    %4546 = vmatpush2.msra.mxu0 0.0
    %4547 = vmatprep.subr.mxu0 0.0
    %4548 = vmatpush2.msra.mxu0 0.0
    %4549 = vmatprep.subr.mxu0 0.0
    %4550 = vmatpush2.msra.mxu0 0.0
    %4551 = vmatprep.subr.mxu0 0.0
    %4552 = vmatpush2.msra.mxu0 0.0
    %4553 = vmatprep.subr.mxu0 0.0
    %4554 = vmatpush2.msra.mxu0 0.0
    %4555 = vmatprep.subr.mxu0 0.0
    %4556 = vmatpush2.msra.mxu0 0.0
    %4557 = vmatprep.subr.mxu0 0.0
    %4558 = vmatpush2.msra.mxu0 0.0
    %4559 = vmatprep.subr.mxu0 0.0
    %4560 = vmatpush2.msra.mxu0 0.0
    %4561 = vmatprep.subr.mxu0 0.0
    %4562 = vmatpush2.msra.mxu0 0.0
    %4563 = vmatprep.subr.mxu0 0.0
    %4564 = vmatpush2.msra.mxu0 0.0
    %4565 = vmatprep.subr.mxu0 0.0
    %4566 = vmatpush2.msra.mxu0 0.0
    %4567 = vmatprep.subr.mxu0 0.0
    %4568 = vmatpush2.msra.mxu0 0.0
    %4569 = vmatprep.mubr.f32.mxu0 0.0
    %4570 = vmatmul.mubr.f32.gmra.mxu0 %v4500
    %v4571 = vpop.f32.mrf.mxu0
    %v4572 = vadd.f32 0.0, %v4571
    %v4573 = vpop.f32.mrf.mxu0
    %4574 = vmatprep.mubr.f32.mxu0 0.0
    %4575 = vmatmul.mubr.f32.gmra.mxu0 %v4503
    %v4576 = vpop.f32.mrf.mxu0
    %v4577 = vadd.f32 0.0, %v4576
    %v4578 = vpop.f32.mrf.mxu0
    %4579 = vdwg.mxu0
    %4580 = vst [vmem:[#allocation10] sm:$0xff] %v4572
    %4581 = vst [vmem:[#allocation10 + $0x8] sm:$0xff] %v4577
    // Predicated region
    $region26: #{tpu_custom_call.1} parent=1 // pred_check
      _
    $region27: #{tpu_custom_call.1} parent=1 // pred_check_branch
      %4583 = sbr.rel (0) target = $region29
    $region28: #{tpu_custom_call.1} parent=1 // pred_region
      %s4585 = ssub.s32 256, 256
      %4586 = vsyncadd [#allocation6], %s4585
      %s4587 = sshll.u32 [#allocation10], 4
      %s4588 = int_to_ptr.vmem [resolvable:$true] %s4587
      %4593 = dma.vmem_to_hbm [thread:$0]  %s4588, 256, %s4, [#allocation6], 128, 128, 8
    $region29: #{tpu_custom_call.1} parent=1 // pred_fallthru
      _
    // Predicated region
    $region30: #{tpu_custom_call.1} parent=1 // pred_check
      _
    $region31: #{tpu_custom_call.1} parent=1 // pred_check_branch
      %4595 = sbr.rel (0) target = $region33
    $region32: #{tpu_custom_call.1} parent=1 // pred_region
      %4596 = dma.done [#allocation6], 256
    $region33: #{tpu_custom_call.1} parent=1 // pred_fallthru
      _
    %4597 = vsyncpa [#allocation5], 1
    %4598 = vsyncpa [#allocation8], 1
    %4599 = vsyncpa [#allocation6], 1

</llo_original>
